<compile_context>
chip_gen: v7x
topology: tpu7x:2x2x1
jax: 0.10.0
libtpu: 0.0.40
codegen_flags: <defaults>
</compile_context>

<pallas_src>
import math
import functools

import jax
import jax.numpy as jnp
from jax.experimental import pallas as pl
from jax.experimental.pallas import tpu as pltpu


# ----------------------------------------------------------------------------
# Fully fused decoder kernel (one grid step == one batch element)
# ----------------------------------------------------------------------------
def _decoder_kernel(tok_ref, src_ref, tmask_ref, smask_ref,
                    vemb_ref, pemb_ref,
                    sa_wqkv_ref, sa_bqkv_ref, sa_wo_ref, sa_bo_ref,
                    sa_g_ref, sa_b_ref,
                    ca_wq_ref, ca_bq_ref, ca_wkv_ref, ca_bkv_ref,
                    ca_wo_ref, ca_bo_ref, ca_g_ref, ca_b_ref,
                    ff_w1_ref, ff_b1_ref, ff_w2_ref, ff_b2_ref,
                    ff_g_ref, ff_b_ref,
                    ow_ref, ob_ref,
                    o_ref, *, n_heads, head_dim, inv_scale, emb_scale):
    f32 = jnp.float32
    H, Dh = n_heads, head_dim

    def layer_norm(y, g, b):
        mu = jnp.mean(y, axis=-1, keepdims=True)
        var = jnp.mean((y - mu) ** 2, axis=-1, keepdims=True)
        return (y - mu) * jax.lax.rsqrt(var + 1e-5) * g + b   # PyTorch eps

    def mha_heads(qh, kh, vh, bias, wo_h, bo):
        # qh: [H,Tq,Dh]  kh,vh: [H,Tk,Dh]  bias: [Tm,Tk] (Tm in {1,Tq})
        s = jnp.einsum('hqd,hkd->hqk', qh, kh,
                       preferred_element_type=f32) * inv_scale
        s = s + bias[None, :, :]                     # masked_fill(mask==0,-1e10)
        s = s - jnp.max(s, axis=-1, keepdims=True)
        p = jnp.exp(s)
        p = p / jnp.sum(p, axis=-1, keepdims=True)   # exact softmax
        ctx = jnp.einsum('hqk,hkd->hqd', p, vh, preferred_element_type=f32)
        # head-wise out-proj summed over heads == concat(heads) @ Wo
        out = jnp.einsum('hqc,hcd->hqd', ctx, wo_h, preferred_element_type=f32)
        return jnp.sum(out, axis=0) + bo

    # ---- embedding combine (gather fused as one-hot matmul) ----------------
    tok_ids = tok_ref[...]                                   # [Tt, 1] int32
    Tt = tok_ids.shape[0]
    V = vemb_ref.shape[0]
    onehot = (tok_ids ==
              jax.lax.broadcasted_iota(jnp.int32, (Tt, V), 1)).astype(f32)
    tok_emb = jnp.dot(onehot, vemb_ref[...], preferred_element_type=f32)
    x = tok_emb * emb_scale + pemb_ref[...]                  # [Tt, D]

    # ---- masks -> additive bias (computed once, hoisted) -------------------
    tbias = jnp.where(tmask_ref[...] == 0.0, -1e10, 0.0).astype(f32)  # [Tm,Tt]
    sbias = jnp.where(smask_ref[...] == 0.0, -1e10, 0.0).astype(f32)  # [Tm,Ts]

    # ---- sublayer 1: self-attention (fused head-batched QKV projection) ----
    xb = jnp.broadcast_to(x, (H,) + x.shape)                 # [H, Tt, D]
    qkv = jnp.einsum('htd,hdk->htk', xb, sa_wqkv_ref[...],
                     preferred_element_type=f32) + sa_bqkv_ref[...]
    q = qkv[:, :, :Dh]
    k = qkv[:, :, Dh:2 * Dh]
    v = qkv[:, :, 2 * Dh:]
    attn = mha_heads(q, k, v, tbias, sa_wo_ref[...], sa_bo_ref[...])
    x = layer_norm(x + attn, sa_g_ref[...], sa_b_ref[...])

    # ---- sublayer 2: cross-attention (Q from trg, K/V from src) ------------
    src_x = src_ref[...]                                     # [Ts, D]
    xb = jnp.broadcast_to(x, (H,) + x.shape)
    sb = jnp.broadcast_to(src_x, (H,) + src_x.shape)
    q = jnp.einsum('htd,hdk->htk', xb, ca_wq_ref[...],
                   preferred_element_type=f32) + ca_bq_ref[...]
    kv = jnp.einsum('htd,hdk->htk', sb, ca_wkv_ref[...],
                    preferred_element_type=f32) + ca_bkv_ref[...]
    k = kv[:, :, :Dh]
    v = kv[:, :, Dh:]
    attn = mha_heads(q, k, v, sbias, ca_wo_ref[...], ca_bo_ref[...])
    x = layer_norm(x + attn, ca_g_ref[...], ca_b_ref[...])

    # ---- sublayer 3: FFN + LN + lane-dense (padded) vocab projection -------
    h = jnp.dot(x, ff_w1_ref[...], preferred_element_type=f32) + ff_b1_ref[...]
    h = jnp.maximum(h, 0.0)
    y = x + jnp.dot(h, ff_w2_ref[...], preferred_element_type=f32) + ff_b2_ref[...]
    z = layer_norm(y, ff_g_ref[...], ff_b_ref[...])
    o_ref[...] = (jnp.dot(z, ow_ref[...], preferred_element_type=f32)
                  + ob_ref[...]).astype(o_ref.dtype)


# ----------------------------------------------------------------------------
# Forward pass wrapper (single pallas_call)
# ----------------------------------------------------------------------------
def decoder_forward(params, trg_tokens, src, trg_mask, src_mask,
                    hid_dim, n_heads, vocab_dim):
    B, Tt = trg_tokens.shape
    Ts = src.shape[1]
    D = hid_dim
    H = n_heads
    Dh = D // H
    pf = params["ff_w1"].shape[1]
    Vtab = params["vocab_emb"].shape[0]
    Vp = params["out_w_pad"].shape[1]                 # lane-padded vocab (128)

    tok3 = trg_tokens.reshape(B, Tt, 1).astype(jnp.int32)
    tmask = trg_mask.reshape(B, trg_mask.shape[-2],
                             trg_mask.shape[-1]).astype(jnp.float32)
    smask = src_mask.reshape(B, src_mask.shape[-2],
                             src_mask.shape[-1]).astype(jnp.float32)
    Tmt, Tms = tmask.shape[1], smask.shape[1]

    kernel = functools.partial(_decoder_kernel, n_heads=H, head_dim=Dh,
                               inv_scale=1.0 / math.sqrt(Dh),
                               emb_scale=math.sqrt(D))

    def full(shape):           # grid-invariant (weight) block, full array
        return pl.BlockSpec(shape, lambda b, _n=len(shape): (0,) * _n)

    def perb(shape):           # per-batch block, leading batch dim squeezed
        return pl.BlockSpec((pl.Squeezed(),) + shape,
                            lambda b, _n=len(shape): (b,) + (0,) * _n)

    sa, ca = params["sa"], params["ca"]

    logits_pad = pl.pallas_call(
        kernel,
        out_shape=jax.ShapeDtypeStruct((B, Tt, Vp), jnp.float32),
        grid=(B,),
        in_specs=[
            perb((Tt, 1)),                       # trg tokens
            perb((Ts, D)),                       # src (encoder output)
            perb((Tmt, Tt)),                     # trg mask
            perb((Tms, Ts)),                     # src mask
            full((Vtab, D)),                     # vocab embedding table
            pl.BlockSpec((Tt, D), lambda b: (0, 0)),   # pos_emb rows 0..Tt-1
            full((H, D, 3 * Dh)), full((H, 1, 3 * Dh)),        # SA fused QKV
            full((H, Dh, D)), full((1, D)), full((1, D)), full((1, D)),
            full((H, D, Dh)), full((H, 1, Dh)),                # CA Q
            full((H, D, 2 * Dh)), full((H, 1, 2 * Dh)),        # CA fused KV
            full((H, Dh, D)), full((1, D)), full((1, D)), full((1, D)),
            full((D, pf)), full((1, pf)),                      # FFN
            full((pf, D)), full((1, D)), full((1, D)), full((1, D)),
            full((D, Vp)), full((1, Vp)),                      # padded out proj
        ],
        out_specs=perb((Tt, Vp)),                # lane-dense (Tt, 128) stores
        compiler_params=pltpu.CompilerParams(
            dimension_semantics=("parallel",)),  # B=2 -> one elem per v7x TC
    )(tok3, src, tmask, smask,
      params["vocab_emb"], params["pos_emb"],
      sa["wqkv"], sa["bqkv"], sa["wo"], sa["bo"], sa["ln_g"], sa["ln_b"],
      ca["wq"], ca["bq"], ca["wkv"], ca["bkv"],
      ca["wo"], ca["bo"], ca["ln_g"], ca["ln_b"],
      params["ff_w1"], params["ff_b1"], params["ff_w2"], params["ff_b2"],
      params["ff_ln_g"], params["ff_ln_b"],
      params["out_w_pad"], params["out_b_pad"])

    return logits_pad[:, :, :vocab_dim]          # slice off lane padding


# ----------------------------------------------------------------------------
# Deterministic parameter init (weights pre-packed into kernel layout)
# ----------------------------------------------------------------------------
def init_params(key, vocab_dim, hid_dim, n_heads, pf_dim):
    D, H, V = hid_dim, n_heads, vocab_dim
    Dh = D // H
    Vp = ((V + 127) // 128) * 128                # lane-pad vocab to 128
    ks = iter(jax.random.split(key, 32))
    n = lambda shape, s=0.02: (s * jax.random.normal(next(ks), shape)
                               ).astype(jnp.float32)
    z = lambda shape: jnp.zeros(shape, jnp.float32)
    ones = lambda shape: jnp.ones(shape, jnp.float32)

    def pack_cols(w):    # nn.Linear weight (D, H*Dh) -> head-major (H, D, Dh)
        return jnp.transpose(w.reshape(D, H, Dh), (1, 0, 2))

    def pack_bias(b):    # (H*Dh,) -> (H, 1, Dh)
        return b.reshape(H, 1, Dh)

    def attn_params(fuse_q):
        wq, wk, wv, wo = n((D, D)), n((D, D)), n((D, D)), n((D, D))
        bq, bk, bv, bo = z((D,)), z((D,)), z((D,)), z((D,))
        p = dict(wo=wo.reshape(H, Dh, D),        # rows h*Dh..(h+1)*Dh per head
                 bo=bo.reshape(1, D),
                 ln_g=ones((1, D)), ln_b=z((1, D)))
        if fuse_q:   # self-attn: single x @ [Wq|Wk|Wv] per head
            p["wqkv"] = jnp.concatenate(
                [pack_cols(wq), pack_cols(wk), pack_cols(wv)], axis=-1)
            p["bqkv"] = jnp.concatenate(
                [pack_bias(bq), pack_bias(bk), pack_bias(bv)], axis=-1)
        else:        # cross-attn: Q from trg, fused KV from src
            p["wq"], p["bq"] = pack_cols(wq), pack_bias(bq)
            p["wkv"] = jnp.concatenate([pack_cols(wk), pack_cols(wv)], axis=-1)
            p["bkv"] = jnp.concatenate([pack_bias(bk), pack_bias(bv)], axis=-1)
        return p

    out_w, out_b = n((D, V)), z((V,))
    out_w_pad = jnp.zeros((D, Vp), jnp.float32).at[:, :V].set(out_w)
    out_b_pad = jnp.zeros((1, Vp), jnp.float32).at[:, :V].set(out_b)

    return dict(
        vocab_emb=n((V, D), 1.0),
        pos_emb=n((1000, D), 1.0),
        sa=attn_params(fuse_q=True),
        ca=attn_params(fuse_q=False),
        ff_w1=n((D, pf_dim)), ff_b1=z((1, pf_dim)),
        ff_w2=n((pf_dim, D)), ff_b2=z((1, D)),
        ff_ln_g=ones((1, D)), ff_ln_b=z((1, D)),
        out_w_pad=out_w_pad, out_b_pad=out_b_pad,
    )


# ----------------------------------------------------------------------------
# Main
# ----------------------------------------------------------------------------
if __name__ == "__main__":
    vocab_dim, hid_dim, n_heads, pf_dim = 16, 32, 4, 64
    B, Tt, Ts = 2, 8, 8

    key = jax.random.PRNGKey(0)
    kp, kt, ks = jax.random.split(key, 3)
    params = init_params(kp, vocab_dim, hid_dim, n_heads, pf_dim)

    trg_tokens = jax.random.randint(kt, (B, Tt), 0, vocab_dim, dtype=jnp.int32)
    src = jax.random.normal(ks, (B, Ts, hid_dim), dtype=jnp.float32)
    # causal mask for self-attn, all-ones padding mask for cross-attn
    trg_mask = jnp.broadcast_to(
        jnp.tril(jnp.ones((Tt, Tt), jnp.float32))[None, None], (B, 1, Tt, Tt))
    src_mask = jnp.ones((B, 1, 1, Ts), jnp.float32)

    logits = decoder_forward(params, trg_tokens, src, trg_mask, src_mask,
                             hid_dim, n_heads, vocab_dim)
    jax.block_until_ready(logits)
    assert logits.shape == (B, Tt, vocab_dim)
    assert bool(jnp.all(jnp.isfinite(logits)))
    print("KERNEL_OK")
</pallas_src>

<mosaic_0001>
module attributes {stable_mosaic.version = 11 : i64} {
  func.func @_decoder_kernel(%arg0: i32, %arg1: memref<1x8x1xi32, #tpu.memory_space<vmem>>, %arg2: memref<1x8x32xf32, #tpu.memory_space<vmem>>, %arg3: memref<1x8x8xf32, #tpu.memory_space<vmem>>, %arg4: memref<1x1x8xf32, #tpu.memory_space<vmem>>, %arg5: memref<16x32xf32, #tpu.memory_space<vmem>>, %arg6: memref<8x32xf32, #tpu.memory_space<vmem>>, %arg7: memref<4x32x24xf32, #tpu.memory_space<vmem>>, %arg8: memref<4x1x24xf32, #tpu.memory_space<vmem>>, %arg9: memref<4x8x32xf32, #tpu.memory_space<vmem>>, %arg10: memref<1x32xf32, #tpu.memory_space<vmem>>, %arg11: memref<1x32xf32, #tpu.memory_space<vmem>>, %arg12: memref<1x32xf32, #tpu.memory_space<vmem>>, %arg13: memref<4x32x8xf32, #tpu.memory_space<vmem>>, %arg14: memref<4x1x8xf32, #tpu.memory_space<vmem>>, %arg15: memref<4x32x16xf32, #tpu.memory_space<vmem>>, %arg16: memref<4x1x16xf32, #tpu.memory_space<vmem>>, %arg17: memref<4x8x32xf32, #tpu.memory_space<vmem>>, %arg18: memref<1x32xf32, #tpu.memory_space<vmem>>, %arg19: memref<1x32xf32, #tpu.memory_space<vmem>>, %arg20: memref<1x32xf32, #tpu.memory_space<vmem>>, %arg21: memref<32x64xf32, #tpu.memory_space<vmem>>, %arg22: memref<1x64xf32, #tpu.memory_space<vmem>>, %arg23: memref<64x32xf32, #tpu.memory_space<vmem>>, %arg24: memref<1x32xf32, #tpu.memory_space<vmem>>, %arg25: memref<1x32xf32, #tpu.memory_space<vmem>>, %arg26: memref<1x32xf32, #tpu.memory_space<vmem>>, %arg27: memref<32x128xf32, #tpu.memory_space<vmem>>, %arg28: memref<1x128xf32, #tpu.memory_space<vmem>>, %arg29: memref<1x8x128xf32, #tpu.memory_space<vmem>>) attributes {dimension_semantics = [#tpu.dimension_semantics<parallel>], iteration_bounds = array<i64: 2>, scalar_prefetch = 0 : i64, scratch_operands = 0 : i64, tpu.core_type = #tpu.core_type<tc>, window_params = [{transform_indices = @transform_0, window_bounds = array<i64: 1, 8, 1>}, {transform_indices = @transform_1, window_bounds = array<i64: 1, 8, 32>}, {transform_indices = @transform_2, window_bounds = array<i64: 1, 8, 8>}, {transform_indices = @transform_3, window_bounds = array<i64: 1, 1, 8>}, {pipeline_mode = #tpu.pipeline_mode<synchronous>, transform_indices = @transform_4, window_bounds = array<i64: 16, 32>}, {transform_indices = @transform_5, window_bounds = array<i64: 8, 32>}, {pipeline_mode = #tpu.pipeline_mode<synchronous>, transform_indices = @transform_6, window_bounds = array<i64: 4, 32, 24>}, {pipeline_mode = #tpu.pipeline_mode<synchronous>, transform_indices = @transform_7, window_bounds = array<i64: 4, 1, 24>}, {pipeline_mode = #tpu.pipeline_mode<synchronous>, transform_indices = @transform_8, window_bounds = array<i64: 4, 8, 32>}, {pipeline_mode = #tpu.pipeline_mode<synchronous>, transform_indices = @transform_9, window_bounds = array<i64: 1, 32>}, {pipeline_mode = #tpu.pipeline_mode<synchronous>, transform_indices = @transform_10, window_bounds = array<i64: 1, 32>}, {pipeline_mode = #tpu.pipeline_mode<synchronous>, transform_indices = @transform_11, window_bounds = array<i64: 1, 32>}, {pipeline_mode = #tpu.pipeline_mode<synchronous>, transform_indices = @transform_12, window_bounds = array<i64: 4, 32, 8>}, {pipeline_mode = #tpu.pipeline_mode<synchronous>, transform_indices = @transform_13, window_bounds = array<i64: 4, 1, 8>}, {pipeline_mode = #tpu.pipeline_mode<synchronous>, transform_indices = @transform_14, window_bounds = array<i64: 4, 32, 16>}, {pipeline_mode = #tpu.pipeline_mode<synchronous>, transform_indices = @transform_15, window_bounds = array<i64: 4, 1, 16>}, {pipeline_mode = #tpu.pipeline_mode<synchronous>, transform_indices = @transform_16, window_bounds = array<i64: 4, 8, 32>}, {pipeline_mode = #tpu.pipeline_mode<synchronous>, transform_indices = @transform_17, window_bounds = array<i64: 1, 32>}, {pipeline_mode = #tpu.pipeline_mode<synchronous>, transform_indices = @transform_18, window_bounds = array<i64: 1, 32>}, {pipeline_mode = #tpu.pipeline_mode<synchronous>, transform_indices = @transform_19, window_bounds = array<i64: 1, 32>}, {pipeline_mode = #tpu.pipeline_mode<synchronous>, transform_indices = @transform_20, window_bounds = array<i64: 32, 64>}, {pipeline_mode = #tpu.pipeline_mode<synchronous>, transform_indices = @transform_21, window_bounds = array<i64: 1, 64>}, {pipeline_mode = #tpu.pipeline_mode<synchronous>, transform_indices = @transform_22, window_bounds = array<i64: 64, 32>}, {pipeline_mode = #tpu.pipeline_mode<synchronous>, transform_indices = @transform_23, window_bounds = array<i64: 1, 32>}, {pipeline_mode = #tpu.pipeline_mode<synchronous>, transform_indices = @transform_24, window_bounds = array<i64: 1, 32>}, {pipeline_mode = #tpu.pipeline_mode<synchronous>, transform_indices = @transform_25, window_bounds = array<i64: 1, 32>}, {pipeline_mode = #tpu.pipeline_mode<synchronous>, transform_indices = @transform_26, window_bounds = array<i64: 32, 128>}, {pipeline_mode = #tpu.pipeline_mode<synchronous>, transform_indices = @transform_27, window_bounds = array<i64: 1, 128>}, {transform_indices = @transform_28, window_bounds = array<i64: 1, 8, 128>}]} {
    %c0 = arith.constant 0 : index
    %c0_0 = arith.constant 0 : index
    %c0_1 = arith.constant 0 : index
    %0 = vector.load %arg1[%c0, %c0_0, %c0_1] : memref<1x8x1xi32, #tpu.memory_space<vmem>>, vector<1x8x1xi32>
    %1 = vector.shape_cast %0 : vector<1x8x1xi32> to vector<8x1xi32>
    %2 = tpu.iota {dimensions = array<i32: 1>} : vector<8x16xi32>
    %3 = vector.broadcast %1 : vector<8x1xi32> to vector<8x16xi32>
    %4 = arith.cmpi eq, %3, %2 : vector<8x16xi32>
    %5 = arith.extui %4 : vector<8x16xi1> to vector<8x16xi32>
    %6 = arith.sitofp %5 : vector<8x16xi32> to vector<8x16xf32>
    %c0_2 = arith.constant 0 : index
    %c0_3 = arith.constant 0 : index
    %7 = vector.load %arg5[%c0_2, %c0_3] : memref<16x32xf32, #tpu.memory_space<vmem>>, vector<16x32xf32>
    %cst = arith.constant dense<0.000000e+00> : vector<8x32xf32>
    %8 = tpu.matmul %6, %7, %cst {dimension_numbers = #tpu.dot_dimension_numbers<[1], [0], [0], [1], [0, 0, 1, 1], [], []>} : vector<8x16xf32>, vector<16x32xf32>, vector<8x32xf32> -> vector<8x32xf32>
    %cst_4 = arith.constant 5.65685415 : f32
    %9 = vector.broadcast %cst_4 : f32 to vector<8x32xf32>
    %10 = arith.mulf %8, %9 : vector<8x32xf32>
    %c0_5 = arith.constant 0 : index
    %c0_6 = arith.constant 0 : index
    %11 = vector.load %arg6[%c0_5, %c0_6] : memref<8x32xf32, #tpu.memory_space<vmem>>, vector<8x32xf32>
    %12 = arith.addf %10, %11 : vector<8x32xf32>
    %c0_7 = arith.constant 0 : index
    %c0_8 = arith.constant 0 : index
    %c0_9 = arith.constant 0 : index
    %13 = vector.load %arg3[%c0_7, %c0_8, %c0_9] : memref<1x8x8xf32, #tpu.memory_space<vmem>>, vector<1x8x8xf32>
    %14 = vector.shape_cast %13 : vector<1x8x8xf32> to vector<8x8xf32>
    %cst_10 = arith.constant 0.000000e+00 : f32
    %15 = vector.broadcast %cst_10 : f32 to vector<8x8xf32>
    %16 = arith.cmpf oeq, %14, %15 : vector<8x8xf32>
    %cst_11 = arith.constant -1.000000e+10 : f32
    %cst_12 = arith.constant 0.000000e+00 : f32
    %17 = vector.broadcast %cst_11 : f32 to vector<8x8xf32>
    %18 = vector.broadcast %cst_12 : f32 to vector<8x8xf32>
    %19 = arith.select %16, %17, %18 : vector<8x8xi1>, vector<8x8xf32>
    %c0_13 = arith.constant 0 : index
    %c0_14 = arith.constant 0 : index
    %c0_15 = arith.constant 0 : index
    %20 = vector.load %arg4[%c0_13, %c0_14, %c0_15] : memref<1x1x8xf32, #tpu.memory_space<vmem>>, vector<1x1x8xf32>
    %21 = vector.shape_cast %20 : vector<1x1x8xf32> to vector<1x8xf32>
    %cst_16 = arith.constant 0.000000e+00 : f32
    %22 = vector.broadcast %cst_16 : f32 to vector<1x8xf32>
    %23 = arith.cmpf oeq, %21, %22 : vector<1x8xf32>
    %cst_17 = arith.constant -1.000000e+10 : f32
    %cst_18 = arith.constant 0.000000e+00 : f32
    %24 = vector.broadcast %cst_17 : f32 to vector<1x8xf32>
    %25 = vector.broadcast %cst_18 : f32 to vector<1x8xf32>
    %26 = arith.select %23, %24, %25 : vector<1x8xi1>, vector<1x8xf32>
    %27 = vector.shape_cast %12 : vector<8x32xf32> to vector<1x8x32xf32>
    %28 = vector.broadcast %27 : vector<1x8x32xf32> to vector<4x8x32xf32>
    %c0_19 = arith.constant 0 : index
    %c0_20 = arith.constant 0 : index
    %c0_21 = arith.constant 0 : index
    %29 = vector.load %arg7[%c0_19, %c0_20, %c0_21] : memref<4x32x24xf32, #tpu.memory_space<vmem>>, vector<4x32x24xf32>
    "tpu.trace_start"() <{level = 10 : i32, message = "htd,hdk->htk"}> : () -> ()
    %cst_22 = arith.constant dense<0.000000e+00> : vector<4x8x24xf32>
    %30 = tpu.matmul %28, %29, %cst_22 {dimension_numbers = #tpu.dot_dimension_numbers<[2], [1], [1], [2], [0, 0, 0, 1, 1, 2], [0], [0]>} : vector<4x8x32xf32>, vector<4x32x24xf32>, vector<4x8x24xf32> -> vector<4x8x24xf32>
    "tpu.trace_stop"() : () -> ()
    %c0_23 = arith.constant 0 : index
    %c0_24 = arith.constant 0 : index
    %c0_25 = arith.constant 0 : index
    %31 = vector.load %arg8[%c0_23, %c0_24, %c0_25] : memref<4x1x24xf32, #tpu.memory_space<vmem>>, vector<4x1x24xf32>
    %32 = vector.broadcast %31 : vector<4x1x24xf32> to vector<4x8x24xf32>
    %33 = arith.addf %30, %32 : vector<4x8x24xf32>
    %34 = vector.extract_strided_slice %33 {offsets = [0, 0, 0], sizes = [4, 8, 8], strides = [1, 1, 1]} : vector<4x8x24xf32> to vector<4x8x8xf32>
    %35 = vector.extract_strided_slice %33 {offsets = [0, 0, 8], sizes = [4, 8, 8], strides = [1, 1, 1]} : vector<4x8x24xf32> to vector<4x8x8xf32>
    %36 = vector.extract_strided_slice %33 {offsets = [0, 0, 16], sizes = [4, 8, 8], strides = [1, 1, 1]} : vector<4x8x24xf32> to vector<4x8x8xf32>
    %c0_26 = arith.constant 0 : index
    %c0_27 = arith.constant 0 : index
    %c0_28 = arith.constant 0 : index
    %37 = vector.load %arg9[%c0_26, %c0_27, %c0_28] : memref<4x8x32xf32, #tpu.memory_space<vmem>>, vector<4x8x32xf32>
    %c0_29 = arith.constant 0 : index
    %c0_30 = arith.constant 0 : index
    %38 = vector.load %arg10[%c0_29, %c0_30] : memref<1x32xf32, #tpu.memory_space<vmem>>, vector<1x32xf32>
    "tpu.trace_start"() <{level = 10 : i32, message = "hqd,hkd->hqk"}> : () -> ()
    %cst_31 = arith.constant dense<0.000000e+00> : vector<4x8x8xf32>
    %39 = tpu.matmul %34, %35, %cst_31 {dimension_numbers = #tpu.dot_dimension_numbers<[2], [2], [1], [1], [0, 0, 0, 1, 1, 1], [0], [0]>} : vector<4x8x8xf32>, vector<4x8x8xf32>, vector<4x8x8xf32> -> vector<4x8x8xf32>
    "tpu.trace_stop"() : () -> ()
    %cst_32 = arith.constant 0.353553385 : f32
    %40 = vector.broadcast %cst_32 : f32 to vector<4x8x8xf32>
    %41 = arith.mulf %39, %40 : vector<4x8x8xf32>
    %42 = vector.shape_cast %19 : vector<8x8xf32> to vector<1x8x8xf32>
    %43 = vector.broadcast %42 : vector<1x8x8xf32> to vector<4x8x8xf32>
    %44 = arith.addf %41, %43 : vector<4x8x8xf32>
    %cst_33 = arith.constant dense<0xFF800000> : vector<4x8xf32>
    %45 = vector.multi_reduction <maximumf>, %44, %cst_33 [2] : vector<4x8x8xf32> to vector<4x8xf32>
    %46 = vector.shape_cast %45 : vector<4x8xf32> to vector<4x8x1xf32>
    %47 = vector.broadcast %46 : vector<4x8x1xf32> to vector<4x8x8xf32>
    %48 = arith.subf %44, %47 : vector<4x8x8xf32>
    %49 = math.exp %48 : vector<4x8x8xf32>
    %cst_34 = arith.constant dense<0.000000e+00> : vector<4x8xf32>
    %50 = vector.multi_reduction <add>, %49, %cst_34 [2] : vector<4x8x8xf32> to vector<4x8xf32>
    %51 = vector.shape_cast %50 : vector<4x8xf32> to vector<4x8x1xf32>
    %52 = vector.broadcast %51 : vector<4x8x1xf32> to vector<4x8x8xf32>
    %53 = arith.divf %49, %52 : vector<4x8x8xf32>
    "tpu.trace_start"() <{level = 10 : i32, message = "hqk,hkd->hqd"}> : () -> ()
    %cst_35 = arith.constant dense<0.000000e+00> : vector<4x8x8xf32>
    %54 = tpu.matmul %53, %36, %cst_35 {dimension_numbers = #tpu.dot_dimension_numbers<[2], [1], [1], [2], [0, 0, 0, 1, 1, 2], [0], [0]>} : vector<4x8x8xf32>, vector<4x8x8xf32>, vector<4x8x8xf32> -> vector<4x8x8xf32>
    "tpu.trace_stop"() : () -> ()
    "tpu.trace_start"() <{level = 10 : i32, message = "hqc,hcd->hqd"}> : () -> ()
    %cst_36 = arith.constant dense<0.000000e+00> : vector<4x8x32xf32>
    %55 = tpu.matmul %54, %37, %cst_36 {dimension_numbers = #tpu.dot_dimension_numbers<[2], [1], [1], [2], [0, 0, 0, 1, 1, 2], [0], [0]>} : vector<4x8x8xf32>, vector<4x8x32xf32>, vector<4x8x32xf32> -> vector<4x8x32xf32>
    "tpu.trace_stop"() : () -> ()
    %cst_37 = arith.constant dense<0.000000e+00> : vector<8x32xf32>
    %56 = vector.multi_reduction <add>, %55, %cst_37 [0] : vector<4x8x32xf32> to vector<8x32xf32>
    %57 = vector.broadcast %38 : vector<1x32xf32> to vector<8x32xf32>
    %58 = arith.addf %56, %57 : vector<8x32xf32>
    %59 = arith.addf %12, %58 : vector<8x32xf32>
    %c0_38 = arith.constant 0 : index
    %c0_39 = arith.constant 0 : index
    %60 = vector.load %arg11[%c0_38, %c0_39] : memref<1x32xf32, #tpu.memory_space<vmem>>, vector<1x32xf32>
    %c0_40 = arith.constant 0 : index
    %c0_41 = arith.constant 0 : index
    %61 = vector.load %arg12[%c0_40, %c0_41] : memref<1x32xf32, #tpu.memory_space<vmem>>, vector<1x32xf32>
    %cst_42 = arith.constant dense<0.000000e+00> : vector<8xf32>
    %62 = vector.multi_reduction <add>, %59, %cst_42 [1] : vector<8x32xf32> to vector<8xf32>
    %63 = vector.shape_cast %62 : vector<8xf32> to vector<8x1xf32>
    %cst_43 = arith.constant 3.200000e+01 : f32
    %64 = vector.broadcast %cst_43 : f32 to vector<8x1xf32>
    %65 = arith.divf %63, %64 : vector<8x1xf32>
    %66 = vector.broadcast %65 : vector<8x1xf32> to vector<8x32xf32>
    %67 = arith.subf %59, %66 : vector<8x32xf32>
    %68 = arith.mulf %67, %67 : vector<8x32xf32>
    %cst_44 = arith.constant dense<0.000000e+00> : vector<8xf32>
    %69 = vector.multi_reduction <add>, %68, %cst_44 [1] : vector<8x32xf32> to vector<8xf32>
    %70 = vector.shape_cast %69 : vector<8xf32> to vector<8x1xf32>
    %cst_45 = arith.constant 3.200000e+01 : f32
    %71 = vector.broadcast %cst_45 : f32 to vector<8x1xf32>
    %72 = arith.divf %70, %71 : vector<8x1xf32>
    %73 = vector.broadcast %65 : vector<8x1xf32> to vector<8x32xf32>
    %74 = arith.subf %59, %73 : vector<8x32xf32>
    %cst_46 = arith.constant 9.99999974E-6 : f32
    %75 = vector.broadcast %cst_46 : f32 to vector<8x1xf32>
    %76 = arith.addf %72, %75 : vector<8x1xf32>
    %77 = math.rsqrt %76 : vector<8x1xf32>
    %78 = vector.broadcast %77 : vector<8x1xf32> to vector<8x32xf32>
    %79 = arith.mulf %74, %78 : vector<8x32xf32>
    %80 = vector.broadcast %60 : vector<1x32xf32> to vector<8x32xf32>
    %81 = arith.mulf %79, %80 : vector<8x32xf32>
    %82 = vector.broadcast %61 : vector<1x32xf32> to vector<8x32xf32>
    %83 = arith.addf %81, %82 : vector<8x32xf32>
    %c0_47 = arith.constant 0 : index
    %c0_48 = arith.constant 0 : index
    %c0_49 = arith.constant 0 : index
    %84 = vector.load %arg2[%c0_47, %c0_48, %c0_49] : memref<1x8x32xf32, #tpu.memory_space<vmem>>, vector<1x8x32xf32>
    %85 = vector.shape_cast %84 : vector<1x8x32xf32> to vector<8x32xf32>
    %86 = vector.shape_cast %83 : vector<8x32xf32> to vector<1x8x32xf32>
    %87 = vector.broadcast %86 : vector<1x8x32xf32> to vector<4x8x32xf32>
    %88 = vector.shape_cast %85 : vector<8x32xf32> to vector<1x8x32xf32>
    %89 = vector.broadcast %88 : vector<1x8x32xf32> to vector<4x8x32xf32>
    %c0_50 = arith.constant 0 : index
    %c0_51 = arith.constant 0 : index
    %c0_52 = arith.constant 0 : index
    %90 = vector.load %arg13[%c0_50, %c0_51, %c0_52] : memref<4x32x8xf32, #tpu.memory_space<vmem>>, vector<4x32x8xf32>
    "tpu.trace_start"() <{level = 10 : i32, message = "htd,hdk->htk"}> : () -> ()
    %cst_53 = arith.constant dense<0.000000e+00> : vector<4x8x8xf32>
    %91 = tpu.matmul %87, %90, %cst_53 {dimension_numbers = #tpu.dot_dimension_numbers<[2], [1], [1], [2], [0, 0, 0, 1, 1, 2], [0], [0]>} : vector<4x8x32xf32>, vector<4x32x8xf32>, vector<4x8x8xf32> -> vector<4x8x8xf32>
    "tpu.trace_stop"() : () -> ()
    %c0_54 = arith.constant 0 : index
    %c0_55 = arith.constant 0 : index
    %c0_56 = arith.constant 0 : index
    %92 = vector.load %arg14[%c0_54, %c0_55, %c0_56] : memref<4x1x8xf32, #tpu.memory_space<vmem>>, vector<4x1x8xf32>
    %93 = vector.broadcast %92 : vector<4x1x8xf32> to vector<4x8x8xf32>
    %94 = arith.addf %91, %93 : vector<4x8x8xf32>
    %c0_57 = arith.constant 0 : index
    %c0_58 = arith.constant 0 : index
    %c0_59 = arith.constant 0 : index
    %95 = vector.load %arg15[%c0_57, %c0_58, %c0_59] : memref<4x32x16xf32, #tpu.memory_space<vmem>>, vector<4x32x16xf32>
    "tpu.trace_start"() <{level = 10 : i32, message = "htd,hdk->htk"}> : () -> ()
    %cst_60 = arith.constant dense<0.000000e+00> : vector<4x8x16xf32>
    %96 = tpu.matmul %89, %95, %cst_60 {dimension_numbers = #tpu.dot_dimension_numbers<[2], [1], [1], [2], [0, 0, 0, 1, 1, 2], [0], [0]>} : vector<4x8x32xf32>, vector<4x32x16xf32>, vector<4x8x16xf32> -> vector<4x8x16xf32>
    "tpu.trace_stop"() : () -> ()
    %c0_61 = arith.constant 0 : index
    %c0_62 = arith.constant 0 : index
    %c0_63 = arith.constant 0 : index
    %97 = vector.load %arg16[%c0_61, %c0_62, %c0_63] : memref<4x1x16xf32, #tpu.memory_space<vmem>>, vector<4x1x16xf32>
    %98 = vector.broadcast %97 : vector<4x1x16xf32> to vector<4x8x16xf32>
    %99 = arith.addf %96, %98 : vector<4x8x16xf32>
    %100 = vector.extract_strided_slice %99 {offsets = [0, 0, 0], sizes = [4, 8, 8], strides = [1, 1, 1]} : vector<4x8x16xf32> to vector<4x8x8xf32>
    %101 = vector.extract_strided_slice %99 {offsets = [0, 0, 8], sizes = [4, 8, 8], strides = [1, 1, 1]} : vector<4x8x16xf32> to vector<4x8x8xf32>
    %c0_64 = arith.constant 0 : index
    %c0_65 = arith.constant 0 : index
    %c0_66 = arith.constant 0 : index
    %102 = vector.load %arg17[%c0_64, %c0_65, %c0_66] : memref<4x8x32xf32, #tpu.memory_space<vmem>>, vector<4x8x32xf32>
    %c0_67 = arith.constant 0 : index
    %c0_68 = arith.constant 0 : index
    %103 = vector.load %arg18[%c0_67, %c0_68] : memref<1x32xf32, #tpu.memory_space<vmem>>, vector<1x32xf32>
    "tpu.trace_start"() <{level = 10 : i32, message = "hqd,hkd->hqk"}> : () -> ()
    %cst_69 = arith.constant dense<0.000000e+00> : vector<4x8x8xf32>
    %104 = tpu.matmul %94, %100, %cst_69 {dimension_numbers = #tpu.dot_dimension_numbers<[2], [2], [1], [1], [0, 0, 0, 1, 1, 1], [0], [0]>} : vector<4x8x8xf32>, vector<4x8x8xf32>, vector<4x8x8xf32> -> vector<4x8x8xf32>
    "tpu.trace_stop"() : () -> ()
    %cst_70 = arith.constant 0.353553385 : f32
    %105 = vector.broadcast %cst_70 : f32 to vector<4x8x8xf32>
    %106 = arith.mulf %104, %105 : vector<4x8x8xf32>
    %107 = vector.shape_cast %26 : vector<1x8xf32> to vector<1x1x8xf32>
    %108 = vector.broadcast %107 : vector<1x1x8xf32> to vector<4x8x8xf32>
    %109 = arith.addf %106, %108 : vector<4x8x8xf32>
    %cst_71 = arith.constant dense<0xFF800000> : vector<4x8xf32>
    %110 = vector.multi_reduction <maximumf>, %109, %cst_71 [2] : vector<4x8x8xf32> to vector<4x8xf32>
    %111 = vector.shape_cast %110 : vector<4x8xf32> to vector<4x8x1xf32>
    %112 = vector.broadcast %111 : vector<4x8x1xf32> to vector<4x8x8xf32>
    %113 = arith.subf %109, %112 : vector<4x8x8xf32>
    %114 = math.exp %113 : vector<4x8x8xf32>
    %cst_72 = arith.constant dense<0.000000e+00> : vector<4x8xf32>
    %115 = vector.multi_reduction <add>, %114, %cst_72 [2] : vector<4x8x8xf32> to vector<4x8xf32>
    %116 = vector.shape_cast %115 : vector<4x8xf32> to vector<4x8x1xf32>
    %117 = vector.broadcast %116 : vector<4x8x1xf32> to vector<4x8x8xf32>
    %118 = arith.divf %114, %117 : vector<4x8x8xf32>
    "tpu.trace_start"() <{level = 10 : i32, message = "hqk,hkd->hqd"}> : () -> ()
    %cst_73 = arith.constant dense<0.000000e+00> : vector<4x8x8xf32>
    %119 = tpu.matmul %118, %101, %cst_73 {dimension_numbers = #tpu.dot_dimension_numbers<[2], [1], [1], [2], [0, 0, 0, 1, 1, 2], [0], [0]>} : vector<4x8x8xf32>, vector<4x8x8xf32>, vector<4x8x8xf32> -> vector<4x8x8xf32>
    "tpu.trace_stop"() : () -> ()
    "tpu.trace_start"() <{level = 10 : i32, message = "hqc,hcd->hqd"}> : () -> ()
    %cst_74 = arith.constant dense<0.000000e+00> : vector<4x8x32xf32>
    %120 = tpu.matmul %119, %102, %cst_74 {dimension_numbers = #tpu.dot_dimension_numbers<[2], [1], [1], [2], [0, 0, 0, 1, 1, 2], [0], [0]>} : vector<4x8x8xf32>, vector<4x8x32xf32>, vector<4x8x32xf32> -> vector<4x8x32xf32>
    "tpu.trace_stop"() : () -> ()
    %cst_75 = arith.constant dense<0.000000e+00> : vector<8x32xf32>
    %121 = vector.multi_reduction <add>, %120, %cst_75 [0] : vector<4x8x32xf32> to vector<8x32xf32>
    %122 = vector.broadcast %103 : vector<1x32xf32> to vector<8x32xf32>
    %123 = arith.addf %121, %122 : vector<8x32xf32>
    %124 = arith.addf %83, %123 : vector<8x32xf32>
    %c0_76 = arith.constant 0 : index
    %c0_77 = arith.constant 0 : index
    %125 = vector.load %arg19[%c0_76, %c0_77] : memref<1x32xf32, #tpu.memory_space<vmem>>, vector<1x32xf32>
    %c0_78 = arith.constant 0 : index
    %c0_79 = arith.constant 0 : index
    %126 = vector.load %arg20[%c0_78, %c0_79] : memref<1x32xf32, #tpu.memory_space<vmem>>, vector<1x32xf32>
    %cst_80 = arith.constant dense<0.000000e+00> : vector<8xf32>
    %127 = vector.multi_reduction <add>, %124, %cst_80 [1] : vector<8x32xf32> to vector<8xf32>
    %128 = vector.shape_cast %127 : vector<8xf32> to vector<8x1xf32>
    %cst_81 = arith.constant 3.200000e+01 : f32
    %129 = vector.broadcast %cst_81 : f32 to vector<8x1xf32>
    %130 = arith.divf %128, %129 : vector<8x1xf32>
    %131 = vector.broadcast %130 : vector<8x1xf32> to vector<8x32xf32>
    %132 = arith.subf %124, %131 : vector<8x32xf32>
    %133 = arith.mulf %132, %132 : vector<8x32xf32>
    %cst_82 = arith.constant dense<0.000000e+00> : vector<8xf32>
    %134 = vector.multi_reduction <add>, %133, %cst_82 [1] : vector<8x32xf32> to vector<8xf32>
    %135 = vector.shape_cast %134 : vector<8xf32> to vector<8x1xf32>
    %cst_83 = arith.constant 3.200000e+01 : f32
    %136 = vector.broadcast %cst_83 : f32 to vector<8x1xf32>
    %137 = arith.divf %135, %136 : vector<8x1xf32>
    %138 = vector.broadcast %130 : vector<8x1xf32> to vector<8x32xf32>
    %139 = arith.subf %124, %138 : vector<8x32xf32>
    %cst_84 = arith.constant 9.99999974E-6 : f32
    %140 = vector.broadcast %cst_84 : f32 to vector<8x1xf32>
    %141 = arith.addf %137, %140 : vector<8x1xf32>
    %142 = math.rsqrt %141 : vector<8x1xf32>
    %143 = vector.broadcast %142 : vector<8x1xf32> to vector<8x32xf32>
    %144 = arith.mulf %139, %143 : vector<8x32xf32>
    %145 = vector.broadcast %125 : vector<1x32xf32> to vector<8x32xf32>
    %146 = arith.mulf %144, %145 : vector<8x32xf32>
    %147 = vector.broadcast %126 : vector<1x32xf32> to vector<8x32xf32>
    %148 = arith.addf %146, %147 : vector<8x32xf32>
    %c0_85 = arith.constant 0 : index
    %c0_86 = arith.constant 0 : index
    %149 = vector.load %arg21[%c0_85, %c0_86] : memref<32x64xf32, #tpu.memory_space<vmem>>, vector<32x64xf32>
    %cst_87 = arith.constant dense<0.000000e+00> : vector<8x64xf32>
    %150 = tpu.matmul %148, %149, %cst_87 {dimension_numbers = #tpu.dot_dimension_numbers<[1], [0], [0], [1], [0, 0, 1, 1], [], []>} : vector<8x32xf32>, vector<32x64xf32>, vector<8x64xf32> -> vector<8x64xf32>
    %c0_88 = arith.constant 0 : index
    %c0_89 = arith.constant 0 : index
    %151 = vector.load %arg22[%c0_88, %c0_89] : memref<1x64xf32, #tpu.memory_space<vmem>>, vector<1x64xf32>
    %152 = vector.broadcast %151 : vector<1x64xf32> to vector<8x64xf32>
    %153 = arith.addf %150, %152 : vector<8x64xf32>
    %cst_90 = arith.constant 0.000000e+00 : f32
    %154 = vector.broadcast %cst_90 : f32 to vector<8x64xf32>
    %155 = arith.maximumf %153, %154 : vector<8x64xf32>
    %c0_91 = arith.constant 0 : index
    %c0_92 = arith.constant 0 : index
    %156 = vector.load %arg23[%c0_91, %c0_92] : memref<64x32xf32, #tpu.memory_space<vmem>>, vector<64x32xf32>
    %cst_93 = arith.constant dense<0.000000e+00> : vector<8x32xf32>
    %157 = tpu.matmul %155, %156, %cst_93 {dimension_numbers = #tpu.dot_dimension_numbers<[1], [0], [0], [1], [0, 0, 1, 1], [], []>} : vector<8x64xf32>, vector<64x32xf32>, vector<8x32xf32> -> vector<8x32xf32>
    %158 = arith.addf %148, %157 : vector<8x32xf32>
    %c0_94 = arith.constant 0 : index
    %c0_95 = arith.constant 0 : index
    %159 = vector.load %arg24[%c0_94, %c0_95] : memref<1x32xf32, #tpu.memory_space<vmem>>, vector<1x32xf32>
    %160 = vector.broadcast %159 : vector<1x32xf32> to vector<8x32xf32>
    %161 = arith.addf %158, %160 : vector<8x32xf32>
    %c0_96 = arith.constant 0 : index
    %c0_97 = arith.constant 0 : index
    %162 = vector.load %arg25[%c0_96, %c0_97] : memref<1x32xf32, #tpu.memory_space<vmem>>, vector<1x32xf32>
    %c0_98 = arith.constant 0 : index
    %c0_99 = arith.constant 0 : index
    %163 = vector.load %arg26[%c0_98, %c0_99] : memref<1x32xf32, #tpu.memory_space<vmem>>, vector<1x32xf32>
    %cst_100 = arith.constant dense<0.000000e+00> : vector<8xf32>
    %164 = vector.multi_reduction <add>, %161, %cst_100 [1] : vector<8x32xf32> to vector<8xf32>
    %165 = vector.shape_cast %164 : vector<8xf32> to vector<8x1xf32>
    %cst_101 = arith.constant 3.200000e+01 : f32
    %166 = vector.broadcast %cst_101 : f32 to vector<8x1xf32>
    %167 = arith.divf %165, %166 : vector<8x1xf32>
    %168 = vector.broadcast %167 : vector<8x1xf32> to vector<8x32xf32>
    %169 = arith.subf %161, %168 : vector<8x32xf32>
    %170 = arith.mulf %169, %169 : vector<8x32xf32>
    %cst_102 = arith.constant dense<0.000000e+00> : vector<8xf32>
    %171 = vector.multi_reduction <add>, %170, %cst_102 [1] : vector<8x32xf32> to vector<8xf32>
    %172 = vector.shape_cast %171 : vector<8xf32> to vector<8x1xf32>
    %cst_103 = arith.constant 3.200000e+01 : f32
    %173 = vector.broadcast %cst_103 : f32 to vector<8x1xf32>
    %174 = arith.divf %172, %173 : vector<8x1xf32>
    %175 = vector.broadcast %167 : vector<8x1xf32> to vector<8x32xf32>
    %176 = arith.subf %161, %175 : vector<8x32xf32>
    %cst_104 = arith.constant 9.99999974E-6 : f32
    %177 = vector.broadcast %cst_104 : f32 to vector<8x1xf32>
    %178 = arith.addf %174, %177 : vector<8x1xf32>
    %179 = math.rsqrt %178 : vector<8x1xf32>
    %180 = vector.broadcast %179 : vector<8x1xf32> to vector<8x32xf32>
    %181 = arith.mulf %176, %180 : vector<8x32xf32>
    %182 = vector.broadcast %162 : vector<1x32xf32> to vector<8x32xf32>
    %183 = arith.mulf %181, %182 : vector<8x32xf32>
    %184 = vector.broadcast %163 : vector<1x32xf32> to vector<8x32xf32>
    %185 = arith.addf %183, %184 : vector<8x32xf32>
    %c0_105 = arith.constant 0 : index
    %c0_106 = arith.constant 0 : index
    %186 = vector.load %arg27[%c0_105, %c0_106] : memref<32x128xf32, #tpu.memory_space<vmem>>, vector<32x128xf32>
    %cst_107 = arith.constant dense<0.000000e+00> : vector<8x128xf32>
    %187 = tpu.matmul %185, %186, %cst_107 {dimension_numbers = #tpu.dot_dimension_numbers<[1], [0], [0], [1], [0, 0, 1, 1], [], []>} : vector<8x32xf32>, vector<32x128xf32>, vector<8x128xf32> -> vector<8x128xf32>
    %c0_108 = arith.constant 0 : index
    %c0_109 = arith.constant 0 : index
    %188 = vector.load %arg28[%c0_108, %c0_109] : memref<1x128xf32, #tpu.memory_space<vmem>>, vector<1x128xf32>
    %189 = vector.broadcast %188 : vector<1x128xf32> to vector<8x128xf32>
    %190 = arith.addf %187, %189 : vector<8x128xf32>
    %c0_110 = arith.constant 0 : index
    %c0_111 = arith.constant 0 : index
    %c0_112 = arith.constant 0 : index
    %191 = vector.load %arg29[%c0_110, %c0_111, %c0_112] : memref<1x8x128xf32, #tpu.memory_space<vmem>>, vector<1x8x128xf32>
    %192 = vector.shape_cast %191 : vector<1x8x128xf32> to vector<8x128xf32>
    %193 = vector.shape_cast %190 : vector<8x128xf32> to vector<1x8x128xf32>
    tpu.vector_store %arg29[%c0_110, %c0_111, %c0_112], %193 {strides = array<i32>} : memref<1x8x128xf32, #tpu.memory_space<vmem>>, vector<1x8x128xf32>,
    return
  }
  func.func @transform_0(%arg0: i32) -> (i32, i32, i32) {
    %c0_i32 = arith.constant 0 : i32
    %c0_i32_0 = arith.constant 0 : i32
    %c0_i32_1 = arith.constant 0 : i32
    return %arg0, %c0_i32, %c0_i32_0 : i32, i32, i32
  }
  func.func @transform_1(%arg0: i32) -> (i32, i32, i32) {
    %c0_i32 = arith.constant 0 : i32
    %c0_i32_0 = arith.constant 0 : i32
    %c0_i32_1 = arith.constant 0 : i32
    return %arg0, %c0_i32, %c0_i32_0 : i32, i32, i32
  }
  func.func @transform_2(%arg0: i32) -> (i32, i32, i32) {
    %c0_i32 = arith.constant 0 : i32
    %c0_i32_0 = arith.constant 0 : i32
    %c0_i32_1 = arith.constant 0 : i32
    return %arg0, %c0_i32, %c0_i32_0 : i32, i32, i32
  }
  func.func @transform_3(%arg0: i32) -> (i32, i32, i32) {
    %c0_i32 = arith.constant 0 : i32
    %c0_i32_0 = arith.constant 0 : i32
    %c0_i32_1 = arith.constant 0 : i32
    return %arg0, %c0_i32, %c0_i32_0 : i32, i32, i32
  }
  func.func @transform_4(%arg0: i32) -> (i32, i32) {
    %c0_i32 = arith.constant 0 : i32
    %c0_i32_0 = arith.constant 0 : i32
    %c0_i32_1 = arith.constant 0 : i32
    return %c0_i32, %c0_i32_0 : i32, i32
  }
  func.func @transform_5(%arg0: i32) -> (i32, i32) {
    %c0_i32 = arith.constant 0 : i32
    %c0_i32_0 = arith.constant 0 : i32
    %c0_i32_1 = arith.constant 0 : i32
    return %c0_i32, %c0_i32_0 : i32, i32
  }
  func.func @transform_6(%arg0: i32) -> (i32, i32, i32) {
    %c0_i32 = arith.constant 0 : i32
    %c0_i32_0 = arith.constant 0 : i32
    %c0_i32_1 = arith.constant 0 : i32
    %c0_i32_2 = arith.constant 0 : i32
    return %c0_i32, %c0_i32_0, %c0_i32_1 : i32, i32, i32
  }
  func.func @transform_7(%arg0: i32) -> (i32, i32, i32) {
    %c0_i32 = arith.constant 0 : i32
    %c0_i32_0 = arith.constant 0 : i32
    %c0_i32_1 = arith.constant 0 : i32
    %c0_i32_2 = arith.constant 0 : i32
    return %c0_i32, %c0_i32_0, %c0_i32_1 : i32, i32, i32
  }
  func.func @transform_8(%arg0: i32) -> (i32, i32, i32) {
    %c0_i32 = arith.constant 0 : i32
    %c0_i32_0 = arith.constant 0 : i32
    %c0_i32_1 = arith.constant 0 : i32
    %c0_i32_2 = arith.constant 0 : i32
    return %c0_i32, %c0_i32_0, %c0_i32_1 : i32, i32, i32
  }
  func.func @transform_9(%arg0: i32) -> (i32, i32) {
    %c0_i32 = arith.constant 0 : i32
    %c0_i32_0 = arith.constant 0 : i32
    %c0_i32_1 = arith.constant 0 : i32
    return %c0_i32, %c0_i32_0 : i32, i32
  }
  func.func @transform_10(%arg0: i32) -> (i32, i32) {
    %c0_i32 = arith.constant 0 : i32
    %c0_i32_0 = arith.constant 0 : i32
    %c0_i32_1 = arith.constant 0 : i32
    return %c0_i32, %c0_i32_0 : i32, i32
  }
  func.func @transform_11(%arg0: i32) -> (i32, i32) {
    %c0_i32 = arith.constant 0 : i32
    %c0_i32_0 = arith.constant 0 : i32
    %c0_i32_1 = arith.constant 0 : i32
    return %c0_i32, %c0_i32_0 : i32, i32
  }
  func.func @transform_12(%arg0: i32) -> (i32, i32, i32) {
    %c0_i32 = arith.constant 0 : i32
    %c0_i32_0 = arith.constant 0 : i32
    %c0_i32_1 = arith.constant 0 : i32
    %c0_i32_2 = arith.constant 0 : i32
    return %c0_i32, %c0_i32_0, %c0_i32_1 : i32, i32, i32
  }
  func.func @transform_13(%arg0: i32) -> (i32, i32, i32) {
    %c0_i32 = arith.constant 0 : i32
    %c0_i32_0 = arith.constant 0 : i32
    %c0_i32_1 = arith.constant 0 : i32
    %c0_i32_2 = arith.constant 0 : i32
    return %c0_i32, %c0_i32_0, %c0_i32_1 : i32, i32, i32
  }
  func.func @transform_14(%arg0: i32) -> (i32, i32, i32) {
    %c0_i32 = arith.constant 0 : i32
    %c0_i32_0 = arith.constant 0 : i32
    %c0_i32_1 = arith.constant 0 : i32
    %c0_i32_2 = arith.constant 0 : i32
    return %c0_i32, %c0_i32_0, %c0_i32_1 : i32, i32, i32
  }
  func.func @transform_15(%arg0: i32) -> (i32, i32, i32) {
    %c0_i32 = arith.constant 0 : i32
    %c0_i32_0 = arith.constant 0 : i32
    %c0_i32_1 = arith.constant 0 : i32
    %c0_i32_2 = arith.constant 0 : i32
    return %c0_i32, %c0_i32_0, %c0_i32_1 : i32, i32, i32
  }
  func.func @transform_16(%arg0: i32) -> (i32, i32, i32) {
    %c0_i32 = arith.constant 0 : i32
    %c0_i32_0 = arith.constant 0 : i32
    %c0_i32_1 = arith.constant 0 : i32
    %c0_i32_2 = arith.constant 0 : i32
    return %c0_i32, %c0_i32_0, %c0_i32_1 : i32, i32, i32
  }
  func.func @transform_17(%arg0: i32) -> (i32, i32) {
    %c0_i32 = arith.constant 0 : i32
    %c0_i32_0 = arith.constant 0 : i32
    %c0_i32_1 = arith.constant 0 : i32
    return %c0_i32, %c0_i32_0 : i32, i32
  }
  func.func @transform_18(%arg0: i32) -> (i32, i32) {
    %c0_i32 = arith.constant 0 : i32
    %c0_i32_0 = arith.constant 0 : i32
    %c0_i32_1 = arith.constant 0 : i32
    return %c0_i32, %c0_i32_0 : i32, i32
  }
  func.func @transform_19(%arg0: i32) -> (i32, i32) {
    %c0_i32 = arith.constant 0 : i32
    %c0_i32_0 = arith.constant 0 : i32
    %c0_i32_1 = arith.constant 0 : i32
    return %c0_i32, %c0_i32_0 : i32, i32
  }
  func.func @transform_20(%arg0: i32) -> (i32, i32) {
    %c0_i32 = arith.constant 0 : i32
    %c0_i32_0 = arith.constant 0 : i32
    %c0_i32_1 = arith.constant 0 : i32
    return %c0_i32, %c0_i32_0 : i32, i32
  }
  func.func @transform_21(%arg0: i32) -> (i32, i32) {
    %c0_i32 = arith.constant 0 : i32
    %c0_i32_0 = arith.constant 0 : i32
    %c0_i32_1 = arith.constant 0 : i32
    return %c0_i32, %c0_i32_0 : i32, i32
  }
  func.func @transform_22(%arg0: i32) -> (i32, i32) {
    %c0_i32 = arith.constant 0 : i32
    %c0_i32_0 = arith.constant 0 : i32
    %c0_i32_1 = arith.constant 0 : i32
    return %c0_i32, %c0_i32_0 : i32, i32
  }
  func.func @transform_23(%arg0: i32) -> (i32, i32) {
    %c0_i32 = arith.constant 0 : i32
    %c0_i32_0 = arith.constant 0 : i32
    %c0_i32_1 = arith.constant 0 : i32
    return %c0_i32, %c0_i32_0 : i32, i32
  }
  func.func @transform_24(%arg0: i32) -> (i32, i32) {
    %c0_i32 = arith.constant 0 : i32
    %c0_i32_0 = arith.constant 0 : i32
    %c0_i32_1 = arith.constant 0 : i32
    return %c0_i32, %c0_i32_0 : i32, i32
  }
  func.func @transform_25(%arg0: i32) -> (i32, i32) {
    %c0_i32 = arith.constant 0 : i32
    %c0_i32_0 = arith.constant 0 : i32
    %c0_i32_1 = arith.constant 0 : i32
    return %c0_i32, %c0_i32_0 : i32, i32
  }
  func.func @transform_26(%arg0: i32) -> (i32, i32) {
    %c0_i32 = arith.constant 0 : i32
    %c0_i32_0 = arith.constant 0 : i32
    %c0_i32_1 = arith.constant 0 : i32
    return %c0_i32, %c0_i32_0 : i32, i32
  }
  func.func @transform_27(%arg0: i32) -> (i32, i32) {
    %c0_i32 = arith.constant 0 : i32
    %c0_i32_0 = arith.constant 0 : i32
    %c0_i32_1 = arith.constant 0 : i32
    return %c0_i32, %c0_i32_0 : i32, i32
  }
  func.func @transform_28(%arg0: i32) -> (i32, i32, i32) {
    %c0_i32 = arith.constant 0 : i32
    %c0_i32_0 = arith.constant 0 : i32
    %c0_i32_1 = arith.constant 0 : i32
    return %arg0, %c0_i32, %c0_i32_0 : i32, i32, i32
  }
}

</mosaic_0001>

<llo_original>
// kernel: tpu_custom_call.1
$region0: #{tpu_custom_call.1}
  #allocation0 [shape = 'u32[]', space=smem, size = 0x4, offset = 0x4, fixed_abs, tag = 'smem constant byte address 0x4 - core index']
  #allocation1 [shape = 'u32[144,128]{1,0:T(1,128)}', space=vmem, size = 0x12000, scoped, tag = 'internal scratch']
  %s0 = inlined_call_operand.vmem [shape: s32[2,8,1], index: 0, kind: input, shape index: {}]
  %s1 = inlined_call_operand.vmem [shape: f32[2,8,32], index: 1, kind: input, shape index: {}]
  %s2 = inlined_call_operand.vmem [shape: f32[2,8,8], index: 2, kind: input, shape index: {}]
  %s3 = inlined_call_operand.vmem [shape: f32[2,1,8], index: 3, kind: input, shape index: {}]
  %s4 = inlined_call_operand.vmem [shape: f32[16,32], index: 4, kind: input, shape index: {}]
  %s5 = inlined_call_operand.vmem [shape: f32[1000,32], index: 5, kind: input, shape index: {}]
  %s6 = inlined_call_operand.vmem [shape: f32[4,32,24], index: 6, kind: input, shape index: {}]
  %s7 = inlined_call_operand.vmem [shape: f32[4,1,24], index: 7, kind: input, shape index: {}]
  %s8 = inlined_call_operand.vmem [shape: f32[4,8,32], index: 8, kind: input, shape index: {}]
  %s9 = inlined_call_operand.vmem [shape: f32[1,32], index: 9, kind: input, shape index: {}]
  %s10 = inlined_call_operand.vmem [shape: f32[1,32], index: 10, kind: input, shape index: {}]
  %s11 = inlined_call_operand.vmem [shape: f32[1,32], index: 11, kind: input, shape index: {}]
  %s12 = inlined_call_operand.vmem [shape: f32[4,32,8], index: 12, kind: input, shape index: {}]
  %s13 = inlined_call_operand.vmem [shape: f32[4,1,8], index: 13, kind: input, shape index: {}]
  %s14 = inlined_call_operand.vmem [shape: f32[4,32,16], index: 14, kind: input, shape index: {}]
  %s15 = inlined_call_operand.vmem [shape: f32[4,1,16], index: 15, kind: input, shape index: {}]
  %s16 = inlined_call_operand.vmem [shape: f32[4,8,32], index: 16, kind: input, shape index: {}]
  %s17 = inlined_call_operand.vmem [shape: f32[1,32], index: 17, kind: input, shape index: {}]
  %s18 = inlined_call_operand.vmem [shape: f32[1,32], index: 18, kind: input, shape index: {}]
  %s19 = inlined_call_operand.vmem [shape: f32[1,32], index: 19, kind: input, shape index: {}]
  %s20 = inlined_call_operand.vmem [shape: f32[32,64], index: 20, kind: input, shape index: {}]
  %s21 = inlined_call_operand.vmem [shape: f32[1,64], index: 21, kind: input, shape index: {}]
  %s22 = inlined_call_operand.vmem [shape: f32[64,32], index: 22, kind: input, shape index: {}]
  %s23 = inlined_call_operand.vmem [shape: f32[1,32], index: 23, kind: input, shape index: {}]
  %s24 = inlined_call_operand.vmem [shape: f32[1,32], index: 24, kind: input, shape index: {}]
  %s25 = inlined_call_operand.vmem [shape: f32[1,32], index: 25, kind: input, shape index: {}]
  %s26 = inlined_call_operand.vmem [shape: f32[32,128], index: 26, kind: input, shape index: {}]
  %s27 = inlined_call_operand.vmem [shape: f32[1,128], index: 27, kind: input, shape index: {}]
  %s28 = inlined_call_operand.hbm [shape: f32[2,8,128], index: 28, kind: output, shape index: {}]
  %s29 = sld [smem:[#allocation0]]
  $region145: #{tpu_custom_call.1} parent=0
    _
  %s31 = ssub.s32 1, %s29
  %s32 = scalar_select 0, %s31, %s29
  $region1: #{tpu_custom_call.1} parent=0
    #allocation2 [shape = 'u8[8192]{0}', space=vmem, size = 0x2000, scoped, tag = 'output window, operand 0']
    #allocation3 [shape = 's32[2]{0}', space=sflag, size = 0x8, scoped, tag = 'scoped memory for tpu_custom_call.1']
    %33 = vsyncpa [#allocation3], 0
    %s34 = scalar_lea.sflag [#allocation3], 1
    %35 = vsyncpa %s34, 0
    loop: start=0, step=1, limit=4
    $region2: #{tpu_custom_call.1} parent=1 // loop_pre_header
      _
    $region3: #{tpu_custom_call.1} parent=1 // loop_header
      %s37 = sphi 0, %s41
      %p38 = scmp.ge.s32.totalorder %s37, 4
      %s47 = sphi 0, %s49
      %s50 = sphi 0, %s47
      %s51 = sphi 0, %s50
      %s67 = sphi 0, %s51
      %s73 = sphi 0, %s75
      %s76 = sphi 0, %s73
      %s77 = sphi 0, %s76
      %s93 = sphi 0, %s77
      %s99 = sphi 0, %s101
      %s102 = sphi 0, %s99
      %s103 = sphi 0, %s102
      %s119 = sphi 0, %s103
      %s125 = sphi 0, %s127
      %s128 = sphi 0, %s125
      %s129 = sphi 0, %s128
      %s145 = sphi 0, %s129
      %s149 = sphi 0, %s149
      %s151 = sphi 0, %s149
      %s152 = sphi 0, %s151
      %s166 = sphi 0, %s152
      %s170 = sphi 0, %s170
      %s172 = sphi 0, %s170
      %s173 = sphi 0, %s172
      %s187 = sphi 0, %s173
      %s191 = sphi 0, %s191
      %s193 = sphi 0, %s191
      %s194 = sphi 0, %s193
      %s208 = sphi 0, %s194
      %s212 = sphi 0, %s212
      %s214 = sphi 0, %s212
      %s215 = sphi 0, %s214
      %s229 = sphi 0, %s215
      %s233 = sphi 0, %s233
      %s235 = sphi 0, %s233
      %s236 = sphi 0, %s235
      %s250 = sphi 0, %s236
      %s254 = sphi 0, %s254
      %s256 = sphi 0, %s254
      %s257 = sphi 0, %s256
      %s271 = sphi 0, %s257
      %s275 = sphi 0, %s275
      %s277 = sphi 0, %s275
      %s278 = sphi 0, %s277
      %s292 = sphi 0, %s278
      %s296 = sphi 0, %s296
      %s298 = sphi 0, %s296
      %s299 = sphi 0, %s298
      %s313 = sphi 0, %s299
      %s317 = sphi 0, %s317
      %s319 = sphi 0, %s317
      %s320 = sphi 0, %s319
      %s334 = sphi 0, %s320
      %s338 = sphi 0, %s338
      %s340 = sphi 0, %s338
      %s341 = sphi 0, %s340
      %s355 = sphi 0, %s341
      %s359 = sphi 0, %s359
      %s361 = sphi 0, %s359
      %s362 = sphi 0, %s361
      %s376 = sphi 0, %s362
      %s380 = sphi 0, %s380
      %s382 = sphi 0, %s380
      %s383 = sphi 0, %s382
      %s397 = sphi 0, %s383
      %s401 = sphi 0, %s401
      %s403 = sphi 0, %s401
      %s404 = sphi 0, %s403
      %s418 = sphi 0, %s404
      %s422 = sphi 0, %s422
      %s424 = sphi 0, %s422
      %s425 = sphi 0, %s424
      %s439 = sphi 0, %s425
      %s443 = sphi 0, %s443
      %s445 = sphi 0, %s443
      %s446 = sphi 0, %s445
      %s460 = sphi 0, %s446
      %s464 = sphi 0, %s464
      %s466 = sphi 0, %s464
      %s467 = sphi 0, %s466
      %s481 = sphi 0, %s467
      %s485 = sphi 0, %s485
      %s487 = sphi 0, %s485
      %s488 = sphi 0, %s487
      %s502 = sphi 0, %s488
      %s506 = sphi 0, %s506
      %s508 = sphi 0, %s506
      %s509 = sphi 0, %s508
      %s523 = sphi 0, %s509
      %s527 = sphi 0, %s527
      %s529 = sphi 0, %s527
      %s530 = sphi 0, %s529
      %s544 = sphi 0, %s530
      %s548 = sphi 0, %s548
      %s550 = sphi 0, %s548
      %s551 = sphi 0, %s550
      %s565 = sphi 0, %s551
      %s569 = sphi 0, %s569
      %s571 = sphi 0, %s569
      %s572 = sphi 0, %s571
      %s586 = sphi 0, %s572
      %s590 = sphi 0, %s590
      %s592 = sphi 0, %s590
      %s593 = sphi 0, %s592
      %s607 = sphi 0, %s593
      %s611 = sphi 0, %s611
      %s613 = sphi 0, %s611
      %s614 = sphi 0, %s613
      %s628 = sphi 0, %s614
      %s632 = sphi 0, %s632
      %s634 = sphi 0, %s632
      %s635 = sphi 0, %s634
      %s649 = sphi 0, %s635
      %s655 = sphi 0, %s657
      %s658 = sphi 0, %s655
      %s659 = sphi 0, %s658
      %s675 = sphi 0, %s659
    $region4: #{tpu_custom_call.1} parent=1 // loop_header_branch
      %40 = sbr.rel (%p38) target = $region8
    $region5: #{tpu_custom_call.1} parent=1 // loop_body
      %s42 = ssub.s32 %s37, 1
      %s43 = ssub.s32 %s37, 2
      %s44 = sadd.s32 %s37, 1
      %s45 = ssub.s32 %s37, %s44
      %p46 = scmp.eq.s32.totalorder %s45, 0
      %s48 = sadd.s32 %s47, 1
      %s49 = scalar_select %p46, %s47, %s48
      %p52 = pneg %p46
      %p53 = scmp.eq.s32.totalorder %s37, 1
      %p54 = por %p52, %p53
      %p55 = scmp.ne.s32.totalorder %s47, %s50
      %p56 = scmp.eq.s32.totalorder %s37, 0
      %p57 = por %p55, %p56
      %p58 = scmp.ne.s32.totalorder %s47, %s50
      %p59 = scmp.eq.s32.totalorder %s42, 1
      %p60 = por %p58, %p59
      %p61 = scmp.ne.s32.totalorder %s50, %s51
      %p62 = scmp.eq.s32.totalorder %s42, 0
      %p63 = por %p61, %p62
      %p64 = scmp.ne.s32.totalorder %s50, %s51
      %p65 = scmp.eq.s32.totalorder %s43, 1
      %p66 = por %p64, %p65
      %p68 = scmp.ne.s32.totalorder %s51, %s67
      %p69 = scmp.eq.s32.totalorder %s43, 0
      %p70 = por %p68, %p69
      %s71 = ssub.s32 %s37, %s44
      %p72 = scmp.eq.s32.totalorder %s71, 0
      %s74 = sadd.s32 %s73, 1
      %s75 = scalar_select %p72, %s73, %s74
      %p78 = pneg %p72
      %p79 = scmp.eq.s32.totalorder %s37, 1
      %p80 = por %p78, %p79
      %p81 = scmp.ne.s32.totalorder %s73, %s76
      %p82 = scmp.eq.s32.totalorder %s37, 0
      %p83 = por %p81, %p82
      %p84 = scmp.ne.s32.totalorder %s73, %s76
      %p85 = scmp.eq.s32.totalorder %s42, 1
      %p86 = por %p84, %p85
      %p87 = scmp.ne.s32.totalorder %s76, %s77
      %p88 = scmp.eq.s32.totalorder %s42, 0
      %p89 = por %p87, %p88
      %p90 = scmp.ne.s32.totalorder %s76, %s77
      %p91 = scmp.eq.s32.totalorder %s43, 1
      %p92 = por %p90, %p91
      %p94 = scmp.ne.s32.totalorder %s77, %s93
      %p95 = scmp.eq.s32.totalorder %s43, 0
      %p96 = por %p94, %p95
      %s97 = ssub.s32 %s37, %s44
      %p98 = scmp.eq.s32.totalorder %s97, 0
      %s100 = sadd.s32 %s99, 1
      %s101 = scalar_select %p98, %s99, %s100
      %p104 = pneg %p98
      %p105 = scmp.eq.s32.totalorder %s37, 1
      %p106 = por %p104, %p105
      %p107 = scmp.ne.s32.totalorder %s99, %s102
      %p108 = scmp.eq.s32.totalorder %s37, 0
      %p109 = por %p107, %p108
      %p110 = scmp.ne.s32.totalorder %s99, %s102
      %p111 = scmp.eq.s32.totalorder %s42, 1
      %p112 = por %p110, %p111
      %p113 = scmp.ne.s32.totalorder %s102, %s103
      %p114 = scmp.eq.s32.totalorder %s42, 0
      %p115 = por %p113, %p114
      %p116 = scmp.ne.s32.totalorder %s102, %s103
      %p117 = scmp.eq.s32.totalorder %s43, 1
      %p118 = por %p116, %p117
      %p120 = scmp.ne.s32.totalorder %s103, %s119
      %p121 = scmp.eq.s32.totalorder %s43, 0
      %p122 = por %p120, %p121
      %s123 = ssub.s32 %s37, %s44
      %p124 = scmp.eq.s32.totalorder %s123, 0
      %s126 = sadd.s32 %s125, 1
      %s127 = scalar_select %p124, %s125, %s126
      %p130 = pneg %p124
      %p131 = scmp.eq.s32.totalorder %s37, 1
      %p132 = por %p130, %p131
      %p133 = scmp.ne.s32.totalorder %s125, %s128
      %p134 = scmp.eq.s32.totalorder %s37, 0
      %p135 = por %p133, %p134
      %p136 = scmp.ne.s32.totalorder %s125, %s128
      %p137 = scmp.eq.s32.totalorder %s42, 1
      %p138 = por %p136, %p137
      %p139 = scmp.ne.s32.totalorder %s128, %s129
      %p140 = scmp.eq.s32.totalorder %s42, 0
      %p141 = por %p139, %p140
      %p142 = scmp.ne.s32.totalorder %s128, %s129
      %p143 = scmp.eq.s32.totalorder %s43, 1
      %p144 = por %p142, %p143
      %p146 = scmp.ne.s32.totalorder %s129, %s145
      %p147 = scmp.eq.s32.totalorder %s43, 0
      %p148 = por %p146, %p147
      %s150 = sadd.s32 %s149, 1
      %p153 = scmp.eq.s32.totalorder %s37, 1
      %p154 = scmp.ne.s32.totalorder %s149, %s151
      %p155 = scmp.eq.s32.totalorder %s37, 0
      %p156 = por %p154, %p155
      %p157 = scmp.ne.s32.totalorder %s149, %s151
      %p158 = scmp.eq.s32.totalorder %s42, 1
      %p159 = por %p157, %p158
      %p160 = scmp.ne.s32.totalorder %s151, %s152
      %p161 = scmp.eq.s32.totalorder %s42, 0
      %p162 = por %p160, %p161
      %p163 = scmp.ne.s32.totalorder %s151, %s152
      %p164 = scmp.eq.s32.totalorder %s43, 1
      %p165 = por %p163, %p164
      %p167 = scmp.ne.s32.totalorder %s152, %s166
      %p168 = scmp.eq.s32.totalorder %s43, 0
      %p169 = por %p167, %p168
      %s171 = sadd.s32 %s170, 1
      %p174 = scmp.eq.s32.totalorder %s37, 1
      %p175 = scmp.ne.s32.totalorder %s170, %s172
      %p176 = scmp.eq.s32.totalorder %s37, 0
      %p177 = por %p175, %p176
      %p178 = scmp.ne.s32.totalorder %s170, %s172
      %p179 = scmp.eq.s32.totalorder %s42, 1
      %p180 = por %p178, %p179
      %p181 = scmp.ne.s32.totalorder %s172, %s173
      %p182 = scmp.eq.s32.totalorder %s42, 0
      %p183 = por %p181, %p182
      %p184 = scmp.ne.s32.totalorder %s172, %s173
      %p185 = scmp.eq.s32.totalorder %s43, 1
      %p186 = por %p184, %p185
      %p188 = scmp.ne.s32.totalorder %s173, %s187
      %p189 = scmp.eq.s32.totalorder %s43, 0
      %p190 = por %p188, %p189
      %s192 = sadd.s32 %s191, 1
      %p195 = scmp.eq.s32.totalorder %s37, 1
      %p196 = scmp.ne.s32.totalorder %s191, %s193
      %p197 = scmp.eq.s32.totalorder %s37, 0
      %p198 = por %p196, %p197
      %p199 = scmp.ne.s32.totalorder %s191, %s193
      %p200 = scmp.eq.s32.totalorder %s42, 1
      %p201 = por %p199, %p200
      %p202 = scmp.ne.s32.totalorder %s193, %s194
      %p203 = scmp.eq.s32.totalorder %s42, 0
      %p204 = por %p202, %p203
      %p205 = scmp.ne.s32.totalorder %s193, %s194
      %p206 = scmp.eq.s32.totalorder %s43, 1
      %p207 = por %p205, %p206
      %p209 = scmp.ne.s32.totalorder %s194, %s208
      %p210 = scmp.eq.s32.totalorder %s43, 0
      %p211 = por %p209, %p210
      %s213 = sadd.s32 %s212, 1
      %p216 = scmp.eq.s32.totalorder %s37, 1
      %p217 = scmp.ne.s32.totalorder %s212, %s214
      %p218 = scmp.eq.s32.totalorder %s37, 0
      %p219 = por %p217, %p218
      %p220 = scmp.ne.s32.totalorder %s212, %s214
      %p221 = scmp.eq.s32.totalorder %s42, 1
      %p222 = por %p220, %p221
      %p223 = scmp.ne.s32.totalorder %s214, %s215
      %p224 = scmp.eq.s32.totalorder %s42, 0
      %p225 = por %p223, %p224
      %p226 = scmp.ne.s32.totalorder %s214, %s215
      %p227 = scmp.eq.s32.totalorder %s43, 1
      %p228 = por %p226, %p227
      %p230 = scmp.ne.s32.totalorder %s215, %s229
      %p231 = scmp.eq.s32.totalorder %s43, 0
      %p232 = por %p230, %p231
      %s234 = sadd.s32 %s233, 1
      %p237 = scmp.eq.s32.totalorder %s37, 1
      %p238 = scmp.ne.s32.totalorder %s233, %s235
      %p239 = scmp.eq.s32.totalorder %s37, 0
      %p240 = por %p238, %p239
      %p241 = scmp.ne.s32.totalorder %s233, %s235
      %p242 = scmp.eq.s32.totalorder %s42, 1
      %p243 = por %p241, %p242
      %p244 = scmp.ne.s32.totalorder %s235, %s236
      %p245 = scmp.eq.s32.totalorder %s42, 0
      %p246 = por %p244, %p245
      %p247 = scmp.ne.s32.totalorder %s235, %s236
      %p248 = scmp.eq.s32.totalorder %s43, 1
      %p249 = por %p247, %p248
      %p251 = scmp.ne.s32.totalorder %s236, %s250
      %p252 = scmp.eq.s32.totalorder %s43, 0
      %p253 = por %p251, %p252
      %s255 = sadd.s32 %s254, 1
      %p258 = scmp.eq.s32.totalorder %s37, 1
      %p259 = scmp.ne.s32.totalorder %s254, %s256
      %p260 = scmp.eq.s32.totalorder %s37, 0
      %p261 = por %p259, %p260
      %p262 = scmp.ne.s32.totalorder %s254, %s256
      %p263 = scmp.eq.s32.totalorder %s42, 1
      %p264 = por %p262, %p263
      %p265 = scmp.ne.s32.totalorder %s256, %s257
      %p266 = scmp.eq.s32.totalorder %s42, 0
      %p267 = por %p265, %p266
      %p268 = scmp.ne.s32.totalorder %s256, %s257
      %p269 = scmp.eq.s32.totalorder %s43, 1
      %p270 = por %p268, %p269
      %p272 = scmp.ne.s32.totalorder %s257, %s271
      %p273 = scmp.eq.s32.totalorder %s43, 0
      %p274 = por %p272, %p273
      %s276 = sadd.s32 %s275, 1
      %p279 = scmp.eq.s32.totalorder %s37, 1
      %p280 = scmp.ne.s32.totalorder %s275, %s277
      %p281 = scmp.eq.s32.totalorder %s37, 0
      %p282 = por %p280, %p281
      %p283 = scmp.ne.s32.totalorder %s275, %s277
      %p284 = scmp.eq.s32.totalorder %s42, 1
      %p285 = por %p283, %p284
      %p286 = scmp.ne.s32.totalorder %s277, %s278
      %p287 = scmp.eq.s32.totalorder %s42, 0
      %p288 = por %p286, %p287
      %p289 = scmp.ne.s32.totalorder %s277, %s278
      %p290 = scmp.eq.s32.totalorder %s43, 1
      %p291 = por %p289, %p290
      %p293 = scmp.ne.s32.totalorder %s278, %s292
      %p294 = scmp.eq.s32.totalorder %s43, 0
      %p295 = por %p293, %p294
      %s297 = sadd.s32 %s296, 1
      %p300 = scmp.eq.s32.totalorder %s37, 1
      %p301 = scmp.ne.s32.totalorder %s296, %s298
      %p302 = scmp.eq.s32.totalorder %s37, 0
      %p303 = por %p301, %p302
      %p304 = scmp.ne.s32.totalorder %s296, %s298
      %p305 = scmp.eq.s32.totalorder %s42, 1
      %p306 = por %p304, %p305
      %p307 = scmp.ne.s32.totalorder %s298, %s299
      %p308 = scmp.eq.s32.totalorder %s42, 0
      %p309 = por %p307, %p308
      %p310 = scmp.ne.s32.totalorder %s298, %s299
      %p311 = scmp.eq.s32.totalorder %s43, 1
      %p312 = por %p310, %p311
      %p314 = scmp.ne.s32.totalorder %s299, %s313
      %p315 = scmp.eq.s32.totalorder %s43, 0
      %p316 = por %p314, %p315
      %s318 = sadd.s32 %s317, 1
      %p321 = scmp.eq.s32.totalorder %s37, 1
      %p322 = scmp.ne.s32.totalorder %s317, %s319
      %p323 = scmp.eq.s32.totalorder %s37, 0
      %p324 = por %p322, %p323
      %p325 = scmp.ne.s32.totalorder %s317, %s319
      %p326 = scmp.eq.s32.totalorder %s42, 1
      %p327 = por %p325, %p326
      %p328 = scmp.ne.s32.totalorder %s319, %s320
      %p329 = scmp.eq.s32.totalorder %s42, 0
      %p330 = por %p328, %p329
      %p331 = scmp.ne.s32.totalorder %s319, %s320
      %p332 = scmp.eq.s32.totalorder %s43, 1
      %p333 = por %p331, %p332
      %p335 = scmp.ne.s32.totalorder %s320, %s334
      %p336 = scmp.eq.s32.totalorder %s43, 0
      %p337 = por %p335, %p336
      %s339 = sadd.s32 %s338, 1
      %p342 = scmp.eq.s32.totalorder %s37, 1
      %p343 = scmp.ne.s32.totalorder %s338, %s340
      %p344 = scmp.eq.s32.totalorder %s37, 0
      %p345 = por %p343, %p344
      %p346 = scmp.ne.s32.totalorder %s338, %s340
      %p347 = scmp.eq.s32.totalorder %s42, 1
      %p348 = por %p346, %p347
      %p349 = scmp.ne.s32.totalorder %s340, %s341
      %p350 = scmp.eq.s32.totalorder %s42, 0
      %p351 = por %p349, %p350
      %p352 = scmp.ne.s32.totalorder %s340, %s341
      %p353 = scmp.eq.s32.totalorder %s43, 1
      %p354 = por %p352, %p353
      %p356 = scmp.ne.s32.totalorder %s341, %s355
      %p357 = scmp.eq.s32.totalorder %s43, 0
      %p358 = por %p356, %p357
      %s360 = sadd.s32 %s359, 1
      %p363 = scmp.eq.s32.totalorder %s37, 1
      %p364 = scmp.ne.s32.totalorder %s359, %s361
      %p365 = scmp.eq.s32.totalorder %s37, 0
      %p366 = por %p364, %p365
      %p367 = scmp.ne.s32.totalorder %s359, %s361
      %p368 = scmp.eq.s32.totalorder %s42, 1
      %p369 = por %p367, %p368
      %p370 = scmp.ne.s32.totalorder %s361, %s362
      %p371 = scmp.eq.s32.totalorder %s42, 0
      %p372 = por %p370, %p371
      %p373 = scmp.ne.s32.totalorder %s361, %s362
      %p374 = scmp.eq.s32.totalorder %s43, 1
      %p375 = por %p373, %p374
      %p377 = scmp.ne.s32.totalorder %s362, %s376
      %p378 = scmp.eq.s32.totalorder %s43, 0
      %p379 = por %p377, %p378
      %s381 = sadd.s32 %s380, 1
      %p384 = scmp.eq.s32.totalorder %s37, 1
      %p385 = scmp.ne.s32.totalorder %s380, %s382
      %p386 = scmp.eq.s32.totalorder %s37, 0
      %p387 = por %p385, %p386
      %p388 = scmp.ne.s32.totalorder %s380, %s382
      %p389 = scmp.eq.s32.totalorder %s42, 1
      %p390 = por %p388, %p389
      %p391 = scmp.ne.s32.totalorder %s382, %s383
      %p392 = scmp.eq.s32.totalorder %s42, 0
      %p393 = por %p391, %p392
      %p394 = scmp.ne.s32.totalorder %s382, %s383
      %p395 = scmp.eq.s32.totalorder %s43, 1
      %p396 = por %p394, %p395
      %p398 = scmp.ne.s32.totalorder %s383, %s397
      %p399 = scmp.eq.s32.totalorder %s43, 0
      %p400 = por %p398, %p399
      %s402 = sadd.s32 %s401, 1
      %p405 = scmp.eq.s32.totalorder %s37, 1
      %p406 = scmp.ne.s32.totalorder %s401, %s403
      %p407 = scmp.eq.s32.totalorder %s37, 0
      %p408 = por %p406, %p407
      %p409 = scmp.ne.s32.totalorder %s401, %s403
      %p410 = scmp.eq.s32.totalorder %s42, 1
      %p411 = por %p409, %p410
      %p412 = scmp.ne.s32.totalorder %s403, %s404
      %p413 = scmp.eq.s32.totalorder %s42, 0
      %p414 = por %p412, %p413
      %p415 = scmp.ne.s32.totalorder %s403, %s404
      %p416 = scmp.eq.s32.totalorder %s43, 1
      %p417 = por %p415, %p416
      %p419 = scmp.ne.s32.totalorder %s404, %s418
      %p420 = scmp.eq.s32.totalorder %s43, 0
      %p421 = por %p419, %p420
      %s423 = sadd.s32 %s422, 1
      %p426 = scmp.eq.s32.totalorder %s37, 1
      %p427 = scmp.ne.s32.totalorder %s422, %s424
      %p428 = scmp.eq.s32.totalorder %s37, 0
      %p429 = por %p427, %p428
      %p430 = scmp.ne.s32.totalorder %s422, %s424
      %p431 = scmp.eq.s32.totalorder %s42, 1
      %p432 = por %p430, %p431
      %p433 = scmp.ne.s32.totalorder %s424, %s425
      %p434 = scmp.eq.s32.totalorder %s42, 0
      %p435 = por %p433, %p434
      %p436 = scmp.ne.s32.totalorder %s424, %s425
      %p437 = scmp.eq.s32.totalorder %s43, 1
      %p438 = por %p436, %p437
      %p440 = scmp.ne.s32.totalorder %s425, %s439
      %p441 = scmp.eq.s32.totalorder %s43, 0
      %p442 = por %p440, %p441
      %s444 = sadd.s32 %s443, 1
      %p447 = scmp.eq.s32.totalorder %s37, 1
      %p448 = scmp.ne.s32.totalorder %s443, %s445
      %p449 = scmp.eq.s32.totalorder %s37, 0
      %p450 = por %p448, %p449
      %p451 = scmp.ne.s32.totalorder %s443, %s445
      %p452 = scmp.eq.s32.totalorder %s42, 1
      %p453 = por %p451, %p452
      %p454 = scmp.ne.s32.totalorder %s445, %s446
      %p455 = scmp.eq.s32.totalorder %s42, 0
      %p456 = por %p454, %p455
      %p457 = scmp.ne.s32.totalorder %s445, %s446
      %p458 = scmp.eq.s32.totalorder %s43, 1
      %p459 = por %p457, %p458
      %p461 = scmp.ne.s32.totalorder %s446, %s460
      %p462 = scmp.eq.s32.totalorder %s43, 0
      %p463 = por %p461, %p462
      %s465 = sadd.s32 %s464, 1
      %p468 = scmp.eq.s32.totalorder %s37, 1
      %p469 = scmp.ne.s32.totalorder %s464, %s466
      %p470 = scmp.eq.s32.totalorder %s37, 0
      %p471 = por %p469, %p470
      %p472 = scmp.ne.s32.totalorder %s464, %s466
      %p473 = scmp.eq.s32.totalorder %s42, 1
      %p474 = por %p472, %p473
      %p475 = scmp.ne.s32.totalorder %s466, %s467
      %p476 = scmp.eq.s32.totalorder %s42, 0
      %p477 = por %p475, %p476
      %p478 = scmp.ne.s32.totalorder %s466, %s467
      %p479 = scmp.eq.s32.totalorder %s43, 1
      %p480 = por %p478, %p479
      %p482 = scmp.ne.s32.totalorder %s467, %s481
      %p483 = scmp.eq.s32.totalorder %s43, 0
      %p484 = por %p482, %p483
      %s486 = sadd.s32 %s485, 1
      %p489 = scmp.eq.s32.totalorder %s37, 1
      %p490 = scmp.ne.s32.totalorder %s485, %s487
      %p491 = scmp.eq.s32.totalorder %s37, 0
      %p492 = por %p490, %p491
      %p493 = scmp.ne.s32.totalorder %s485, %s487
      %p494 = scmp.eq.s32.totalorder %s42, 1
      %p495 = por %p493, %p494
      %p496 = scmp.ne.s32.totalorder %s487, %s488
      %p497 = scmp.eq.s32.totalorder %s42, 0
      %p498 = por %p496, %p497
      %p499 = scmp.ne.s32.totalorder %s487, %s488
      %p500 = scmp.eq.s32.totalorder %s43, 1
      %p501 = por %p499, %p500
      %p503 = scmp.ne.s32.totalorder %s488, %s502
      %p504 = scmp.eq.s32.totalorder %s43, 0
      %p505 = por %p503, %p504
      %s507 = sadd.s32 %s506, 1
      %p510 = scmp.eq.s32.totalorder %s37, 1
      %p511 = scmp.ne.s32.totalorder %s506, %s508
      %p512 = scmp.eq.s32.totalorder %s37, 0
      %p513 = por %p511, %p512
      %p514 = scmp.ne.s32.totalorder %s506, %s508
      %p515 = scmp.eq.s32.totalorder %s42, 1
      %p516 = por %p514, %p515
      %p517 = scmp.ne.s32.totalorder %s508, %s509
      %p518 = scmp.eq.s32.totalorder %s42, 0
      %p519 = por %p517, %p518
      %p520 = scmp.ne.s32.totalorder %s508, %s509
      %p521 = scmp.eq.s32.totalorder %s43, 1
      %p522 = por %p520, %p521
      %p524 = scmp.ne.s32.totalorder %s509, %s523
      %p525 = scmp.eq.s32.totalorder %s43, 0
      %p526 = por %p524, %p525
      %s528 = sadd.s32 %s527, 1
      %p531 = scmp.eq.s32.totalorder %s37, 1
      %p532 = scmp.ne.s32.totalorder %s527, %s529
      %p533 = scmp.eq.s32.totalorder %s37, 0
      %p534 = por %p532, %p533
      %p535 = scmp.ne.s32.totalorder %s527, %s529
      %p536 = scmp.eq.s32.totalorder %s42, 1
      %p537 = por %p535, %p536
      %p538 = scmp.ne.s32.totalorder %s529, %s530
      %p539 = scmp.eq.s32.totalorder %s42, 0
      %p540 = por %p538, %p539
      %p541 = scmp.ne.s32.totalorder %s529, %s530
      %p542 = scmp.eq.s32.totalorder %s43, 1
      %p543 = por %p541, %p542
      %p545 = scmp.ne.s32.totalorder %s530, %s544
      %p546 = scmp.eq.s32.totalorder %s43, 0
      %p547 = por %p545, %p546
      %s549 = sadd.s32 %s548, 1
      %p552 = scmp.eq.s32.totalorder %s37, 1
      %p553 = scmp.ne.s32.totalorder %s548, %s550
      %p554 = scmp.eq.s32.totalorder %s37, 0
      %p555 = por %p553, %p554
      %p556 = scmp.ne.s32.totalorder %s548, %s550
      %p557 = scmp.eq.s32.totalorder %s42, 1
      %p558 = por %p556, %p557
      %p559 = scmp.ne.s32.totalorder %s550, %s551
      %p560 = scmp.eq.s32.totalorder %s42, 0
      %p561 = por %p559, %p560
      %p562 = scmp.ne.s32.totalorder %s550, %s551
      %p563 = scmp.eq.s32.totalorder %s43, 1
      %p564 = por %p562, %p563
      %p566 = scmp.ne.s32.totalorder %s551, %s565
      %p567 = scmp.eq.s32.totalorder %s43, 0
      %p568 = por %p566, %p567
      %s570 = sadd.s32 %s569, 1
      %p573 = scmp.eq.s32.totalorder %s37, 1
      %p574 = scmp.ne.s32.totalorder %s569, %s571
      %p575 = scmp.eq.s32.totalorder %s37, 0
      %p576 = por %p574, %p575
      %p577 = scmp.ne.s32.totalorder %s569, %s571
      %p578 = scmp.eq.s32.totalorder %s42, 1
      %p579 = por %p577, %p578
      %p580 = scmp.ne.s32.totalorder %s571, %s572
      %p581 = scmp.eq.s32.totalorder %s42, 0
      %p582 = por %p580, %p581
      %p583 = scmp.ne.s32.totalorder %s571, %s572
      %p584 = scmp.eq.s32.totalorder %s43, 1
      %p585 = por %p583, %p584
      %p587 = scmp.ne.s32.totalorder %s572, %s586
      %p588 = scmp.eq.s32.totalorder %s43, 0
      %p589 = por %p587, %p588
      %s591 = sadd.s32 %s590, 1
      %p594 = scmp.eq.s32.totalorder %s37, 1
      %p595 = scmp.ne.s32.totalorder %s590, %s592
      %p596 = scmp.eq.s32.totalorder %s37, 0
      %p597 = por %p595, %p596
      %p598 = scmp.ne.s32.totalorder %s590, %s592
      %p599 = scmp.eq.s32.totalorder %s42, 1
      %p600 = por %p598, %p599
      %p601 = scmp.ne.s32.totalorder %s592, %s593
      %p602 = scmp.eq.s32.totalorder %s42, 0
      %p603 = por %p601, %p602
      %p604 = scmp.ne.s32.totalorder %s592, %s593
      %p605 = scmp.eq.s32.totalorder %s43, 1
      %p606 = por %p604, %p605
      %p608 = scmp.ne.s32.totalorder %s593, %s607
      %p609 = scmp.eq.s32.totalorder %s43, 0
      %p610 = por %p608, %p609
      %s612 = sadd.s32 %s611, 1
      %p615 = scmp.eq.s32.totalorder %s37, 1
      %p616 = scmp.ne.s32.totalorder %s611, %s613
      %p617 = scmp.eq.s32.totalorder %s37, 0
      %p618 = por %p616, %p617
      %p619 = scmp.ne.s32.totalorder %s611, %s613
      %p620 = scmp.eq.s32.totalorder %s42, 1
      %p621 = por %p619, %p620
      %p622 = scmp.ne.s32.totalorder %s613, %s614
      %p623 = scmp.eq.s32.totalorder %s42, 0
      %p624 = por %p622, %p623
      %p625 = scmp.ne.s32.totalorder %s613, %s614
      %p626 = scmp.eq.s32.totalorder %s43, 1
      %p627 = por %p625, %p626
      %p629 = scmp.ne.s32.totalorder %s614, %s628
      %p630 = scmp.eq.s32.totalorder %s43, 0
      %p631 = por %p629, %p630
      %s633 = sadd.s32 %s632, 1
      %p636 = scmp.eq.s32.totalorder %s37, 1
      %p637 = scmp.ne.s32.totalorder %s632, %s634
      %p638 = scmp.eq.s32.totalorder %s37, 0
      %p639 = por %p637, %p638
      %p640 = scmp.ne.s32.totalorder %s632, %s634
      %p641 = scmp.eq.s32.totalorder %s42, 1
      %p642 = por %p640, %p641
      %p643 = scmp.ne.s32.totalorder %s634, %s635
      %p644 = scmp.eq.s32.totalorder %s42, 0
      %p645 = por %p643, %p644
      %p646 = scmp.ne.s32.totalorder %s634, %s635
      %p647 = scmp.eq.s32.totalorder %s43, 1
      %p648 = por %p646, %p647
      %p650 = scmp.ne.s32.totalorder %s635, %s649
      %p651 = scmp.eq.s32.totalorder %s43, 0
      %p652 = por %p650, %p651
      %s653 = ssub.s32 %s37, %s44
      %p654 = scmp.eq.s32.totalorder %s653, 0
      %s656 = sadd.s32 %s655, 1
      %s657 = scalar_select %p654, %s655, %s656
      %p660 = pneg %p654
      %p661 = scmp.eq.s32.totalorder %s37, 1
      %p662 = por %p660, %p661
      %p663 = scmp.ne.s32.totalorder %s655, %s658
      %p664 = scmp.eq.s32.totalorder %s37, 0
      %p665 = por %p663, %p664
      %p666 = scmp.ne.s32.totalorder %s655, %s658
      %p667 = scmp.eq.s32.totalorder %s42, 1
      %p668 = por %p666, %p667
      %p669 = scmp.ne.s32.totalorder %s658, %s659
      %p670 = scmp.eq.s32.totalorder %s42, 0
      %p671 = por %p669, %p670
      %p672 = scmp.ne.s32.totalorder %s658, %s659
      %p673 = scmp.eq.s32.totalorder %s43, 1
      %p674 = por %p672, %p673
      %p676 = scmp.ne.s32.totalorder %s659, %s675
      %p677 = scmp.eq.s32.totalorder %s43, 0
      %p678 = por %p676, %p677
      %p679 = scmp.le.s32.totalorder 1, %s37
      %p680 = scmp.lt.s32.totalorder %s37, 3
      %p681 = pnand %p679, %p680
      %p682 = pneg %p681
      // Predicated region
      $region9: #{tpu_custom_call.1} parent=5 // pred_check
        _
      $region10: #{tpu_custom_call.1} parent=5 // pred_check_branch
        %684 = sbr.rel (%p681) target = $region12
      $region11: #{tpu_custom_call.1} parent=5 // pred_region
        %s685 = ssub.s32 %s37, 1
        // Predicated region
        $region13: #{tpu_custom_call.1} parent=11 // pred_check
          %p686 = pneg %p162
        $region14: #{tpu_custom_call.1} parent=11 // pred_check_branch
          %688 = sbr.rel (%p686) target = $region16
        $region15: #{tpu_custom_call.1} parent=11 // pred_region
          _
        $region16: #{tpu_custom_call.1} parent=11 // pred_fallthru
          _
        // Predicated region
        $region17: #{tpu_custom_call.1} parent=11 // pred_check
          %p689 = pneg %p183
        $region18: #{tpu_custom_call.1} parent=11 // pred_check_branch
          %691 = sbr.rel (%p689) target = $region20
        $region19: #{tpu_custom_call.1} parent=11 // pred_region
          _
        $region20: #{tpu_custom_call.1} parent=11 // pred_fallthru
          _
        // Predicated region
        $region21: #{tpu_custom_call.1} parent=11 // pred_check
          %p692 = pneg %p204
        $region22: #{tpu_custom_call.1} parent=11 // pred_check_branch
          %694 = sbr.rel (%p692) target = $region24
        $region23: #{tpu_custom_call.1} parent=11 // pred_region
          _
        $region24: #{tpu_custom_call.1} parent=11 // pred_fallthru
          _
        // Predicated region
        $region25: #{tpu_custom_call.1} parent=11 // pred_check
          %p695 = pneg %p225
        $region26: #{tpu_custom_call.1} parent=11 // pred_check_branch
          %697 = sbr.rel (%p695) target = $region28
        $region27: #{tpu_custom_call.1} parent=11 // pred_region
          _
        $region28: #{tpu_custom_call.1} parent=11 // pred_fallthru
          _
        // Predicated region
        $region29: #{tpu_custom_call.1} parent=11 // pred_check
          %p698 = pneg %p246
        $region30: #{tpu_custom_call.1} parent=11 // pred_check_branch
          %700 = sbr.rel (%p698) target = $region32
        $region31: #{tpu_custom_call.1} parent=11 // pred_region
          _
        $region32: #{tpu_custom_call.1} parent=11 // pred_fallthru
          _
        // Predicated region
        $region33: #{tpu_custom_call.1} parent=11 // pred_check
          %p701 = pneg %p267
        $region34: #{tpu_custom_call.1} parent=11 // pred_check_branch
          %703 = sbr.rel (%p701) target = $region36
        $region35: #{tpu_custom_call.1} parent=11 // pred_region
          _
        $region36: #{tpu_custom_call.1} parent=11 // pred_fallthru
          _
        // Predicated region
        $region37: #{tpu_custom_call.1} parent=11 // pred_check
          %p704 = pneg %p288
        $region38: #{tpu_custom_call.1} parent=11 // pred_check_branch
          %706 = sbr.rel (%p704) target = $region40
        $region39: #{tpu_custom_call.1} parent=11 // pred_region
          _
        $region40: #{tpu_custom_call.1} parent=11 // pred_fallthru
          _
        // Predicated region
        $region41: #{tpu_custom_call.1} parent=11 // pred_check
          %p707 = pneg %p309
        $region42: #{tpu_custom_call.1} parent=11 // pred_check_branch
          %709 = sbr.rel (%p707) target = $region44
        $region43: #{tpu_custom_call.1} parent=11 // pred_region
          _
        $region44: #{tpu_custom_call.1} parent=11 // pred_fallthru
          _
        // Predicated region
        $region45: #{tpu_custom_call.1} parent=11 // pred_check
          %p710 = pneg %p330
        $region46: #{tpu_custom_call.1} parent=11 // pred_check_branch
          %712 = sbr.rel (%p710) target = $region48
        $region47: #{tpu_custom_call.1} parent=11 // pred_region
          _
        $region48: #{tpu_custom_call.1} parent=11 // pred_fallthru
          _
        // Predicated region
        $region49: #{tpu_custom_call.1} parent=11 // pred_check
          %p713 = pneg %p351
        $region50: #{tpu_custom_call.1} parent=11 // pred_check_branch
          %715 = sbr.rel (%p713) target = $region52
        $region51: #{tpu_custom_call.1} parent=11 // pred_region
          _
        $region52: #{tpu_custom_call.1} parent=11 // pred_fallthru
          _
        // Predicated region
        $region53: #{tpu_custom_call.1} parent=11 // pred_check
          %p716 = pneg %p372
        $region54: #{tpu_custom_call.1} parent=11 // pred_check_branch
          %718 = sbr.rel (%p716) target = $region56
        $region55: #{tpu_custom_call.1} parent=11 // pred_region
          _
        $region56: #{tpu_custom_call.1} parent=11 // pred_fallthru
          _
        // Predicated region
        $region57: #{tpu_custom_call.1} parent=11 // pred_check
          %p719 = pneg %p393
        $region58: #{tpu_custom_call.1} parent=11 // pred_check_branch
          %721 = sbr.rel (%p719) target = $region60
        $region59: #{tpu_custom_call.1} parent=11 // pred_region
          _
        $region60: #{tpu_custom_call.1} parent=11 // pred_fallthru
          _
        // Predicated region
        $region61: #{tpu_custom_call.1} parent=11 // pred_check
          %p722 = pneg %p414
        $region62: #{tpu_custom_call.1} parent=11 // pred_check_branch
          %724 = sbr.rel (%p722) target = $region64
        $region63: #{tpu_custom_call.1} parent=11 // pred_region
          _
        $region64: #{tpu_custom_call.1} parent=11 // pred_fallthru
          _
        // Predicated region
        $region65: #{tpu_custom_call.1} parent=11 // pred_check
          %p725 = pneg %p435
        $region66: #{tpu_custom_call.1} parent=11 // pred_check_branch
          %727 = sbr.rel (%p725) target = $region68
        $region67: #{tpu_custom_call.1} parent=11 // pred_region
          _
        $region68: #{tpu_custom_call.1} parent=11 // pred_fallthru
          _
        // Predicated region
        $region69: #{tpu_custom_call.1} parent=11 // pred_check
          %p728 = pneg %p456
        $region70: #{tpu_custom_call.1} parent=11 // pred_check_branch
          %730 = sbr.rel (%p728) target = $region72
        $region71: #{tpu_custom_call.1} parent=11 // pred_region
          _
        $region72: #{tpu_custom_call.1} parent=11 // pred_fallthru
          _
        // Predicated region
        $region73: #{tpu_custom_call.1} parent=11 // pred_check
          %p731 = pneg %p477
        $region74: #{tpu_custom_call.1} parent=11 // pred_check_branch
          %733 = sbr.rel (%p731) target = $region76
        $region75: #{tpu_custom_call.1} parent=11 // pred_region
          _
        $region76: #{tpu_custom_call.1} parent=11 // pred_fallthru
          _
        // Predicated region
        $region77: #{tpu_custom_call.1} parent=11 // pred_check
          %p734 = pneg %p498
        $region78: #{tpu_custom_call.1} parent=11 // pred_check_branch
          %736 = sbr.rel (%p734) target = $region80
        $region79: #{tpu_custom_call.1} parent=11 // pred_region
          _
        $region80: #{tpu_custom_call.1} parent=11 // pred_fallthru
          _
        // Predicated region
        $region81: #{tpu_custom_call.1} parent=11 // pred_check
          %p737 = pneg %p519
        $region82: #{tpu_custom_call.1} parent=11 // pred_check_branch
          %739 = sbr.rel (%p737) target = $region84
        $region83: #{tpu_custom_call.1} parent=11 // pred_region
          _
        $region84: #{tpu_custom_call.1} parent=11 // pred_fallthru
          _
        // Predicated region
        $region85: #{tpu_custom_call.1} parent=11 // pred_check
          %p740 = pneg %p540
        $region86: #{tpu_custom_call.1} parent=11 // pred_check_branch
          %742 = sbr.rel (%p740) target = $region88
        $region87: #{tpu_custom_call.1} parent=11 // pred_region
          _
        $region88: #{tpu_custom_call.1} parent=11 // pred_fallthru
          _
        // Predicated region
        $region89: #{tpu_custom_call.1} parent=11 // pred_check
          %p743 = pneg %p561
        $region90: #{tpu_custom_call.1} parent=11 // pred_check_branch
          %745 = sbr.rel (%p743) target = $region92
        $region91: #{tpu_custom_call.1} parent=11 // pred_region
          _
        $region92: #{tpu_custom_call.1} parent=11 // pred_fallthru
          _
        // Predicated region
        $region93: #{tpu_custom_call.1} parent=11 // pred_check
          %p746 = pneg %p582
        $region94: #{tpu_custom_call.1} parent=11 // pred_check_branch
          %748 = sbr.rel (%p746) target = $region96
        $region95: #{tpu_custom_call.1} parent=11 // pred_region
          _
        $region96: #{tpu_custom_call.1} parent=11 // pred_fallthru
          _
        // Predicated region
        $region97: #{tpu_custom_call.1} parent=11 // pred_check
          %p749 = pneg %p603
        $region98: #{tpu_custom_call.1} parent=11 // pred_check_branch
          %751 = sbr.rel (%p749) target = $region100
        $region99: #{tpu_custom_call.1} parent=11 // pred_region
          _
        $region100: #{tpu_custom_call.1} parent=11 // pred_fallthru
          _
        // Predicated region
        $region101: #{tpu_custom_call.1} parent=11 // pred_check
          %p752 = pneg %p624
        $region102: #{tpu_custom_call.1} parent=11 // pred_check_branch
          %754 = sbr.rel (%p752) target = $region104
        $region103: #{tpu_custom_call.1} parent=11 // pred_region
          _
        $region104: #{tpu_custom_call.1} parent=11 // pred_fallthru
          _
        // Predicated region
        $region105: #{tpu_custom_call.1} parent=11 // pred_check
          %p755 = pneg %p645
        $region106: #{tpu_custom_call.1} parent=11 // pred_check_branch
          %757 = sbr.rel (%p755) target = $region108
        $region107: #{tpu_custom_call.1} parent=11 // pred_region
          _
        $region108: #{tpu_custom_call.1} parent=11 // pred_fallthru
          _
      $region12: #{tpu_custom_call.1} parent=5 // pred_fallthru
        _
      %p758 = scmp.lt.s32.totalorder %s37, 2
      // Predicated region
      $region109: #{tpu_custom_call.1} parent=5 // pred_check
        %p759 = pneg %p758
      $region110: #{tpu_custom_call.1} parent=5 // pred_check_branch
        %761 = sbr.rel (%p759) target = $region112
      $region111: #{tpu_custom_call.1} parent=5 // pred_region
        // Predicated region
        $region113: #{tpu_custom_call.1} parent=111 // pred_check
          %p762 = pneg %p57
        $region114: #{tpu_custom_call.1} parent=111 // pred_check_branch
          %764 = sbr.rel (%p762) target = $region116
        $region115: #{tpu_custom_call.1} parent=111 // pred_region
          %p765 = scmp.lt.s32.totalorder %s37, 1
          %s766 = scalar_select %p765, %s37, 1
          %s767 = smul.addr %s766, 8
          %s768 = scalar_lea.vmem %s0, %s767
        $region116: #{tpu_custom_call.1} parent=111 // pred_fallthru
          _
        // Predicated region
        $region117: #{tpu_custom_call.1} parent=111 // pred_check
          %p769 = pneg %p83
        $region118: #{tpu_custom_call.1} parent=111 // pred_check_branch
          %771 = sbr.rel (%p769) target = $region120
        $region119: #{tpu_custom_call.1} parent=111 // pred_region
          %p772 = scmp.lt.s32.totalorder %s37, 1
          %s773 = scalar_select %p772, %s37, 1
          %s774 = smul.addr %s773, 8
          %s775 = scalar_lea.vmem %s1, %s774
        $region120: #{tpu_custom_call.1} parent=111 // pred_fallthru
          _
        // Predicated region
        $region121: #{tpu_custom_call.1} parent=111 // pred_check
          %p776 = pneg %p109
        $region122: #{tpu_custom_call.1} parent=111 // pred_check_branch
          %778 = sbr.rel (%p776) target = $region124
        $region123: #{tpu_custom_call.1} parent=111 // pred_region
          %p779 = scmp.lt.s32.totalorder %s37, 1
          %s780 = scalar_select %p779, %s37, 1
          %s781 = smul.addr %s780, 8
          %s782 = scalar_lea.vmem %s2, %s781
        $region124: #{tpu_custom_call.1} parent=111 // pred_fallthru
          _
        // Predicated region
        $region125: #{tpu_custom_call.1} parent=111 // pred_check
          %p783 = pneg %p135
        $region126: #{tpu_custom_call.1} parent=111 // pred_check_branch
          %785 = sbr.rel (%p783) target = $region128
        $region127: #{tpu_custom_call.1} parent=111 // pred_region
          %p786 = scmp.lt.s32.totalorder %s37, 1
          %s787 = scalar_select %p786, %s37, 1
          %s788 = scalar_lea.vmem %s3, %s787
        $region128: #{tpu_custom_call.1} parent=111 // pred_fallthru
          _
      $region112: #{tpu_custom_call.1} parent=5 // pred_fallthru
        _
      %p789 = scmp.le.s32.totalorder 1, %s37
      %p790 = scmp.lt.s32.totalorder %s37, 3
      %p791 = pnand %p789, %p790
      %p792 = pneg %p791
      // Predicated region
      $region129: #{tpu_custom_call.1} parent=5 // pred_check
        _
      $region130: #{tpu_custom_call.1} parent=5 // pred_check_branch
        %794 = sbr.rel (%p791) target = $region132
      $region131: #{tpu_custom_call.1} parent=5 // pred_region
        %s795 = ssub.s32 %s37, 1
        %p796 = scmp.lt.s32.totalorder %s42, 1
        %s797 = scalar_select %p796, %s42, 1
        %s798 = smul.addr %s797, 8
        %s799 = scalar_lea.vmem %s0, %s798
        %p800 = pneg %p63
        %p801 = pneg %p60
        %p802 = scmp.lt.s32.totalorder %s42, 1
        %s803 = scalar_select %p802, %s42, 1
        %s804 = smul.addr %s803, 8
        %s805 = scalar_lea.vmem %s1, %s804
        %p806 = pneg %p89
        %p807 = pneg %p86
        %p808 = scmp.lt.s32.totalorder %s42, 1
        %s809 = scalar_select %p808, %s42, 1
        %s810 = smul.addr %s809, 8
        %s811 = scalar_lea.vmem %s2, %s810
        %p812 = pneg %p115
        %p813 = pneg %p112
        %p814 = scmp.lt.s32.totalorder %s42, 1
        %s815 = scalar_select %p814, %s42, 1
        %s816 = scalar_lea.vmem %s3, %s815
        %p817 = pneg %p141
        %p818 = pneg %p138
        %p819 = pneg %p162
        %p820 = pneg %p159
        %p821 = pneg %p183
        %p822 = pneg %p180
        %p823 = pneg %p204
        %p824 = pneg %p201
        %p825 = pneg %p225
        %p826 = pneg %p222
        %p827 = pneg %p246
        %p828 = pneg %p243
        %p829 = pneg %p267
        %p830 = pneg %p264
        %p831 = pneg %p288
        %p832 = pneg %p285
        %p833 = pneg %p309
        %p834 = pneg %p306
        %p835 = pneg %p330
        %p836 = pneg %p327
        %p837 = pneg %p351
        %p838 = pneg %p348
        %p839 = pneg %p372
        %p840 = pneg %p369
        %p841 = pneg %p393
        %p842 = pneg %p390
        %p843 = pneg %p414
        %p844 = pneg %p411
        %p845 = pneg %p435
        %p846 = pneg %p432
        %p847 = pneg %p456
        %p848 = pneg %p453
        %p849 = pneg %p477
        %p850 = pneg %p474
        %p851 = pneg %p498
        %p852 = pneg %p495
        %p853 = pneg %p519
        %p854 = pneg %p516
        %p855 = pneg %p540
        %p856 = pneg %p537
        %p857 = pneg %p561
        %p858 = pneg %p558
        %p859 = pneg %p582
        %p860 = pneg %p579
        %p861 = pneg %p603
        %p862 = pneg %p600
        %p863 = pneg %p624
        %p864 = pneg %p621
        %p865 = pneg %p645
        %p866 = pneg %p642
        %p867 = pneg %p671
        %p868 = pneg %p668
        %s869 = sand.u32 %s658, 1
        %s870 = scalar_lea.sflag [#allocation3], %s869
        %s871 = sand.u32 %s658, 1
        %s872 = smul.addr %s871, 8
        %s873 = scalar_lea.vmem [#allocation2], %s872
        %p874 = scmp.lt.s32.totalorder %s42, 1
        %s875 = scalar_select %p874, %s42, 1
        %s876 = smul.addr %s875, 8
        %s877 = scalar_lea.vmem %s0, %s876
        %p878 = scmp.lt.s32.totalorder %s42, 1
        %s879 = scalar_select %p878, %s42, 1
        %s880 = smul.addr %s879, 8
        %s881 = scalar_lea.vmem %s1, %s880
        %p882 = scmp.lt.s32.totalorder %s42, 1
        %s883 = scalar_select %p882, %s42, 1
        %s884 = smul.addr %s883, 8
        %s885 = scalar_lea.vmem %s2, %s884
        %p886 = scmp.lt.s32.totalorder %s42, 1
        %s887 = scalar_select %p886, %s42, 1
        %s888 = scalar_lea.vmem %s3, %s887
        %v889 = vld [vmem:[%s877] sm:$0xff]
        %v890 = vlaneseq
        %v891 = vand.u32 %v890, 127
        %892 = vset.pattern.permute.xlu0 0
        %893 = vperm.xlu0 %892, %v889
        %v894 = vpop.permute.xlu0 %893
        %vm895 = vcmp.eq.s32.totalorder %v894, %v891
        %v896 = vsel %vm895, 1, 0
        %v897 = vcvt.s32.f32 %v896
        %v898 = vld [vmem:[%s4] sm:$0xff]
        %v899 = vld [vmem:[%s4 + $0x8] sm:$0xff]
        %vm900 = vcmask 130048
        %v902 = vsel %vm900, %v897, 0
        %904 = vmatprep.subr.mxu0 0.0
        %905 = vmatpush1.msra.mxu0 %v898
        %906 = vmatprep.subr.mxu0 0.0
        %907 = vmatpush1.msra.mxu0 %v899
        %908 = vmatprep.subr.mxu0 0.0
        %909 = vmatpush1.msra.mxu0 0.0
        %910 = vmatprep.subr.mxu0 0.0
        %911 = vmatpush1.msra.mxu0 0.0
        %912 = vmatprep.subr.mxu0 0.0
        %913 = vmatpush1.msra.mxu0 0.0
        %914 = vmatprep.subr.mxu0 0.0
        %915 = vmatpush1.msra.mxu0 0.0
        %916 = vmatprep.subr.mxu0 0.0
        %917 = vmatpush1.msra.mxu0 0.0
        %918 = vmatprep.subr.mxu0 0.0
        %919 = vmatpush1.msra.mxu0 0.0
        %920 = vmatprep.subr.mxu0 0.0
        %921 = vmatpush1.msra.mxu0 0.0
        %922 = vmatprep.subr.mxu0 0.0
        %923 = vmatpush1.msra.mxu0 0.0
        %924 = vmatprep.subr.mxu0 0.0
        %925 = vmatpush1.msra.mxu0 0.0
        %926 = vmatprep.subr.mxu0 0.0
        %927 = vmatpush1.msra.mxu0 0.0
        %928 = vmatprep.subr.mxu0 0.0
        %929 = vmatpush1.msra.mxu0 0.0
        %930 = vmatprep.subr.mxu0 0.0
        %931 = vmatpush1.msra.mxu0 0.0
        %932 = vmatprep.subr.mxu0 0.0
        %933 = vmatpush1.msra.mxu0 0.0
        %934 = vmatprep.subr.mxu0 0.0
        %935 = vmatpush1.msra.mxu0 0.0
        %936 = vmatprep.subr.mxu0 0.0
        %937 = vmatpush1.msra.mxu0 0.0
        %938 = vmatprep.subr.mxu0 0.0
        %939 = vmatpush1.msra.mxu0 0.0
        %940 = vmatprep.subr.mxu0 0.0
        %941 = vmatpush1.msra.mxu0 0.0
        %942 = vmatprep.subr.mxu0 0.0
        %943 = vmatpush1.msra.mxu0 0.0
        %944 = vmatprep.subr.mxu0 0.0
        %945 = vmatpush1.msra.mxu0 0.0
        %946 = vmatprep.subr.mxu0 0.0
        %947 = vmatpush1.msra.mxu0 0.0
        %948 = vmatprep.subr.mxu0 0.0
        %949 = vmatpush1.msra.mxu0 0.0
        %950 = vmatprep.subr.mxu0 0.0
        %951 = vmatpush1.msra.mxu0 0.0
        %952 = vmatprep.subr.mxu0 0.0
        %953 = vmatpush1.msra.mxu0 0.0
        %954 = vmatprep.subr.mxu0 0.0
        %955 = vmatpush1.msra.mxu0 0.0
        %956 = vmatprep.subr.mxu0 0.0
        %957 = vmatpush1.msra.mxu0 0.0
        %958 = vmatprep.subr.mxu0 0.0
        %959 = vmatpush1.msra.mxu0 0.0
        %960 = vmatprep.subr.mxu0 0.0
        %961 = vmatpush1.msra.mxu0 0.0
        %962 = vmatprep.subr.mxu0 0.0
        %963 = vmatpush1.msra.mxu0 0.0
        %964 = vmatprep.subr.mxu0 0.0
        %965 = vmatpush1.msra.mxu0 0.0
        %966 = vmatprep.subr.mxu0 0.0
        %967 = vmatpush1.msra.mxu0 0.0
        %968 = vmatprep.mubr.f32.mxu0 0.0
        %969 = vmatmul.mubr.f32.gmra.mrb[0].mxu0 %v902
        %v970 = vpop.f32.mrb[0].mxu0
        %v971 = vadd.f32 0.0, %v970
        %v972 = vpop.f32.mrb[0].mxu0
        %973 = vdwg.mxu0
        %v974 = vmul.f32 %v971, 5.656854
        %v975 = vld [vmem:[%s5] sm:$0xff]
        %v976 = vadd.f32 %v974, %v975
        %v977 = vld [vmem:[%s885] sm:$0xff]
        %vm978 = vcmp.eq.f32.partialorder %v977, 0.0
        %v979 = vsel %vm978, -1e+10, 0.0
        %v980 = vld [vmem:[%s888] sm:$0x1]
        %vm981 = vcmp.eq.f32.partialorder %v980, 0.0
        %v982 = vsel %vm981, -1e+10, 0.0
        %v983 = vld [vmem:[%s6] sm:$0xff]
        %v984 = vld [vmem:[%s6 + $0x8] sm:$0xff]
        %v985 = vld [vmem:[%s6 + $0x10] sm:$0xff]
        %v986 = vld [vmem:[%s6 + $0x18] sm:$0xff]
        %v987 = vld [vmem:[%s6 + $0x20] sm:$0xff]
        %v988 = vld [vmem:[%s6 + $0x28] sm:$0xff]
        %v989 = vld [vmem:[%s6 + $0x30] sm:$0xff]
        %v990 = vld [vmem:[%s6 + $0x38] sm:$0xff]
        %v991 = vld [vmem:[%s6 + $0x40] sm:$0xff]
        %v992 = vld [vmem:[%s6 + $0x48] sm:$0xff]
        %v993 = vld [vmem:[%s6 + $0x50] sm:$0xff]
        %v994 = vld [vmem:[%s6 + $0x58] sm:$0xff]
        %v995 = vld [vmem:[%s6 + $0x60] sm:$0xff]
        %v996 = vld [vmem:[%s6 + $0x68] sm:$0xff]
        %v997 = vld [vmem:[%s6 + $0x70] sm:$0xff]
        %v998 = vld [vmem:[%s6 + $0x78] sm:$0xff]
        %v999 = vld [vmem:[%s7] sm:$0x1]
        %v1000 = vld [vmem:[%s7 + $0x1] sm:$0x1]
        %v1001 = vld [vmem:[%s7 + $0x2] sm:$0x1]
        %v1002 = vld [vmem:[%s7 + $0x3] sm:$0x1]
        %v1007 = vlaneseq
        %v1008 = vshrl.u32 %v1007, 7
        %v1009 = vsub.s32 0, %v1008
        %v1010 = vrot.slane %v999, %v1009
        %v1011 = vlaneseq
        %v1012 = vshrl.u32 %v1011, 7
        %v1013 = vsub.s32 0, %v1012
        %v1014 = vrot.slane %v1000, %v1013
        %v1015 = vlaneseq
        %v1016 = vshrl.u32 %v1015, 7
        %v1017 = vsub.s32 0, %v1016
        %v1018 = vrot.slane %v1001, %v1017
        %v1019 = vlaneseq
        %v1020 = vshrl.u32 %v1019, 7
        %v1021 = vsub.s32 0, %v1020
        %v1022 = vrot.slane %v1002, %v1021
        %vm1027 = vcmask 261120
        %v1029 = vsel %vm1027, %v976, 0
        %1031 = vmatprep.subr.mxu0 0.0
        %1032 = vmatpush1.msra.mxu0 %v983
        %1033 = vmatprep.subr.mxu0 0.0
        %1034 = vmatpush1.msra.mxu0 %v984
        %1035 = vmatprep.subr.mxu0 0.0
        %1036 = vmatpush1.msra.mxu0 %v985
        %1037 = vmatprep.subr.mxu0 0.0
        %1038 = vmatpush1.msra.mxu0 %v986
        %1039 = vmatprep.subr.mxu0 0.0
        %1040 = vmatpush1.msra.mxu0 0.0
        %1041 = vmatprep.subr.mxu0 0.0
        %1042 = vmatpush1.msra.mxu0 0.0
        %1043 = vmatprep.subr.mxu0 0.0
        %1044 = vmatpush1.msra.mxu0 0.0
        %1045 = vmatprep.subr.mxu0 0.0
        %1046 = vmatpush1.msra.mxu0 0.0
        %1047 = vmatprep.subr.mxu0 0.0
        %1048 = vmatpush1.msra.mxu0 0.0
        %1049 = vmatprep.subr.mxu0 0.0
        %1050 = vmatpush1.msra.mxu0 0.0
        %1051 = vmatprep.subr.mxu0 0.0
        %1052 = vmatpush1.msra.mxu0 0.0
        %1053 = vmatprep.subr.mxu0 0.0
        %1054 = vmatpush1.msra.mxu0 0.0
        %1055 = vmatprep.subr.mxu0 0.0
        %1056 = vmatpush1.msra.mxu0 0.0
        %1057 = vmatprep.subr.mxu0 0.0
        %1058 = vmatpush1.msra.mxu0 0.0
        %1059 = vmatprep.subr.mxu0 0.0
        %1060 = vmatpush1.msra.mxu0 0.0
        %1061 = vmatprep.subr.mxu0 0.0
        %1062 = vmatpush1.msra.mxu0 0.0
        %1063 = vmatprep.subr.mxu0 0.0
        %1064 = vmatpush1.msra.mxu0 0.0
        %1065 = vmatprep.subr.mxu0 0.0
        %1066 = vmatpush1.msra.mxu0 0.0
        %1067 = vmatprep.subr.mxu0 0.0
        %1068 = vmatpush1.msra.mxu0 0.0
        %1069 = vmatprep.subr.mxu0 0.0
        %1070 = vmatpush1.msra.mxu0 0.0
        %1071 = vmatprep.subr.mxu0 0.0
        %1072 = vmatpush1.msra.mxu0 0.0
        %1073 = vmatprep.subr.mxu0 0.0
        %1074 = vmatpush1.msra.mxu0 0.0
        %1075 = vmatprep.subr.mxu0 0.0
        %1076 = vmatpush1.msra.mxu0 0.0
        %1077 = vmatprep.subr.mxu0 0.0
        %1078 = vmatpush1.msra.mxu0 0.0
        %1079 = vmatprep.subr.mxu0 0.0
        %1080 = vmatpush1.msra.mxu0 0.0
        %1081 = vmatprep.subr.mxu0 0.0
        %1082 = vmatpush1.msra.mxu0 0.0
        %1083 = vmatprep.subr.mxu0 0.0
        %1084 = vmatpush1.msra.mxu0 0.0
        %1085 = vmatprep.subr.mxu0 0.0
        %1086 = vmatpush1.msra.mxu0 0.0
        %1087 = vmatprep.subr.mxu0 0.0
        %1088 = vmatpush1.msra.mxu0 0.0
        %1089 = vmatprep.subr.mxu0 0.0
        %1090 = vmatpush1.msra.mxu0 0.0
        %1091 = vmatprep.subr.mxu0 0.0
        %1092 = vmatpush1.msra.mxu0 0.0
        %1093 = vmatprep.subr.mxu0 0.0
        %1094 = vmatpush1.msra.mxu0 0.0
        %1095 = vmatprep.mubr.f32.mxu0 0.0
        %1096 = vmatmul.mubr.f32.gmra.mrb[0].mxu0 %v1029
        %v1097 = vpop.f32.mrb[0].mxu0
        %v1098 = vadd.f32 %v1010, %v1097
        %v1099 = vpop.f32.mrb[0].mxu0
        %1100 = vdwg.mxu0
        %1101 = vmatprep.subr.mxu0 0.0
        %1102 = vmatpush1.msra.mxu0 %v987
        %1103 = vmatprep.subr.mxu0 0.0
        %1104 = vmatpush1.msra.mxu0 %v988
        %1105 = vmatprep.subr.mxu0 0.0
        %1106 = vmatpush1.msra.mxu0 %v989
        %1107 = vmatprep.subr.mxu0 0.0
        %1108 = vmatpush1.msra.mxu0 %v990
        %1109 = vmatprep.subr.mxu0 0.0
        %1110 = vmatpush1.msra.mxu0 0.0
        %1111 = vmatprep.subr.mxu0 0.0
        %1112 = vmatpush1.msra.mxu0 0.0
        %1113 = vmatprep.subr.mxu0 0.0
        %1114 = vmatpush1.msra.mxu0 0.0
        %1115 = vmatprep.subr.mxu0 0.0
        %1116 = vmatpush1.msra.mxu0 0.0
        %1117 = vmatprep.subr.mxu0 0.0
        %1118 = vmatpush1.msra.mxu0 0.0
        %1119 = vmatprep.subr.mxu0 0.0
        %1120 = vmatpush1.msra.mxu0 0.0
        %1121 = vmatprep.subr.mxu0 0.0
        %1122 = vmatpush1.msra.mxu0 0.0
        %1123 = vmatprep.subr.mxu0 0.0
        %1124 = vmatpush1.msra.mxu0 0.0
        %1125 = vmatprep.subr.mxu0 0.0
        %1126 = vmatpush1.msra.mxu0 0.0
        %1127 = vmatprep.subr.mxu0 0.0
        %1128 = vmatpush1.msra.mxu0 0.0
        %1129 = vmatprep.subr.mxu0 0.0
        %1130 = vmatpush1.msra.mxu0 0.0
        %1131 = vmatprep.subr.mxu0 0.0
        %1132 = vmatpush1.msra.mxu0 0.0
        %1133 = vmatprep.subr.mxu0 0.0
        %1134 = vmatpush1.msra.mxu0 0.0
        %1135 = vmatprep.subr.mxu0 0.0
        %1136 = vmatpush1.msra.mxu0 0.0
        %1137 = vmatprep.subr.mxu0 0.0
        %1138 = vmatpush1.msra.mxu0 0.0
        %1139 = vmatprep.subr.mxu0 0.0
        %1140 = vmatpush1.msra.mxu0 0.0
        %1141 = vmatprep.subr.mxu0 0.0
        %1142 = vmatpush1.msra.mxu0 0.0
        %1143 = vmatprep.subr.mxu0 0.0
        %1144 = vmatpush1.msra.mxu0 0.0
        %1145 = vmatprep.subr.mxu0 0.0
        %1146 = vmatpush1.msra.mxu0 0.0
        %1147 = vmatprep.subr.mxu0 0.0
        %1148 = vmatpush1.msra.mxu0 0.0
        %1149 = vmatprep.subr.mxu0 0.0
        %1150 = vmatpush1.msra.mxu0 0.0
        %1151 = vmatprep.subr.mxu0 0.0
        %1152 = vmatpush1.msra.mxu0 0.0
        %1153 = vmatprep.subr.mxu0 0.0
        %1154 = vmatpush1.msra.mxu0 0.0
        %1155 = vmatprep.subr.mxu0 0.0
        %1156 = vmatpush1.msra.mxu0 0.0
        %1157 = vmatprep.subr.mxu0 0.0
        %1158 = vmatpush1.msra.mxu0 0.0
        %1159 = vmatprep.subr.mxu0 0.0
        %1160 = vmatpush1.msra.mxu0 0.0
        %1161 = vmatprep.subr.mxu0 0.0
        %1162 = vmatpush1.msra.mxu0 0.0
        %1163 = vmatprep.subr.mxu0 0.0
        %1164 = vmatpush1.msra.mxu0 0.0
        %1165 = vmatprep.mubr.f32.mxu0 0.0
        %1166 = vmatmul.mubr.f32.gmra.mrb[0].mxu0 %v1029
        %v1167 = vpop.f32.mrb[0].mxu0
        %v1168 = vadd.f32 %v1014, %v1167
        %v1169 = vpop.f32.mrb[0].mxu0
        %1170 = vdwg.mxu0
        %1171 = vmatprep.subr.mxu0 0.0
        %1172 = vmatpush1.msra.mxu0 %v991
        %1173 = vmatprep.subr.mxu0 0.0
        %1174 = vmatpush1.msra.mxu0 %v992
        %1175 = vmatprep.subr.mxu0 0.0
        %1176 = vmatpush1.msra.mxu0 %v993
        %1177 = vmatprep.subr.mxu0 0.0
        %1178 = vmatpush1.msra.mxu0 %v994
        %1179 = vmatprep.subr.mxu0 0.0
        %1180 = vmatpush1.msra.mxu0 0.0
        %1181 = vmatprep.subr.mxu0 0.0
        %1182 = vmatpush1.msra.mxu0 0.0
        %1183 = vmatprep.subr.mxu0 0.0
        %1184 = vmatpush1.msra.mxu0 0.0
        %1185 = vmatprep.subr.mxu0 0.0
        %1186 = vmatpush1.msra.mxu0 0.0
        %1187 = vmatprep.subr.mxu0 0.0
        %1188 = vmatpush1.msra.mxu0 0.0
        %1189 = vmatprep.subr.mxu0 0.0
        %1190 = vmatpush1.msra.mxu0 0.0
        %1191 = vmatprep.subr.mxu0 0.0
        %1192 = vmatpush1.msra.mxu0 0.0
        %1193 = vmatprep.subr.mxu0 0.0
        %1194 = vmatpush1.msra.mxu0 0.0
        %1195 = vmatprep.subr.mxu0 0.0
        %1196 = vmatpush1.msra.mxu0 0.0
        %1197 = vmatprep.subr.mxu0 0.0
        %1198 = vmatpush1.msra.mxu0 0.0
        %1199 = vmatprep.subr.mxu0 0.0
        %1200 = vmatpush1.msra.mxu0 0.0
        %1201 = vmatprep.subr.mxu0 0.0
        %1202 = vmatpush1.msra.mxu0 0.0
        %1203 = vmatprep.subr.mxu0 0.0
        %1204 = vmatpush1.msra.mxu0 0.0
        %1205 = vmatprep.subr.mxu0 0.0
        %1206 = vmatpush1.msra.mxu0 0.0
        %1207 = vmatprep.subr.mxu0 0.0
        %1208 = vmatpush1.msra.mxu0 0.0
        %1209 = vmatprep.subr.mxu0 0.0
        %1210 = vmatpush1.msra.mxu0 0.0
        %1211 = vmatprep.subr.mxu0 0.0
        %1212 = vmatpush1.msra.mxu0 0.0
        %1213 = vmatprep.subr.mxu0 0.0
        %1214 = vmatpush1.msra.mxu0 0.0
        %1215 = vmatprep.subr.mxu0 0.0
        %1216 = vmatpush1.msra.mxu0 0.0
        %1217 = vmatprep.subr.mxu0 0.0
        %1218 = vmatpush1.msra.mxu0 0.0
        %1219 = vmatprep.subr.mxu0 0.0
        %1220 = vmatpush1.msra.mxu0 0.0
        %1221 = vmatprep.subr.mxu0 0.0
        %1222 = vmatpush1.msra.mxu0 0.0
        %1223 = vmatprep.subr.mxu0 0.0
        %1224 = vmatpush1.msra.mxu0 0.0
        %1225 = vmatprep.subr.mxu0 0.0
        %1226 = vmatpush1.msra.mxu0 0.0
        %1227 = vmatprep.subr.mxu0 0.0
        %1228 = vmatpush1.msra.mxu0 0.0
        %1229 = vmatprep.subr.mxu0 0.0
        %1230 = vmatpush1.msra.mxu0 0.0
        %1231 = vmatprep.subr.mxu0 0.0
        %1232 = vmatpush1.msra.mxu0 0.0
        %1233 = vmatprep.subr.mxu0 0.0
        %1234 = vmatpush1.msra.mxu0 0.0
        %1235 = vmatprep.mubr.f32.mxu0 0.0
        %1236 = vmatmul.mubr.f32.gmra.mrb[0].mxu0 %v1029
        %v1237 = vpop.f32.mrb[0].mxu0
        %v1238 = vadd.f32 %v1018, %v1237
        %v1239 = vpop.f32.mrb[0].mxu0
        %1240 = vdwg.mxu0
        %1241 = vmatprep.subr.mxu0 0.0
        %1242 = vmatpush1.msra.mxu0 %v995
        %1243 = vmatprep.subr.mxu0 0.0
        %1244 = vmatpush1.msra.mxu0 %v996
        %1245 = vmatprep.subr.mxu0 0.0
        %1246 = vmatpush1.msra.mxu0 %v997
        %1247 = vmatprep.subr.mxu0 0.0
        %1248 = vmatpush1.msra.mxu0 %v998
        %1249 = vmatprep.subr.mxu0 0.0
        %1250 = vmatpush1.msra.mxu0 0.0
        %1251 = vmatprep.subr.mxu0 0.0
        %1252 = vmatpush1.msra.mxu0 0.0
        %1253 = vmatprep.subr.mxu0 0.0
        %1254 = vmatpush1.msra.mxu0 0.0
        %1255 = vmatprep.subr.mxu0 0.0
        %1256 = vmatpush1.msra.mxu0 0.0
        %1257 = vmatprep.subr.mxu0 0.0
        %1258 = vmatpush1.msra.mxu0 0.0
        %1259 = vmatprep.subr.mxu0 0.0
        %1260 = vmatpush1.msra.mxu0 0.0
        %1261 = vmatprep.subr.mxu0 0.0
        %1262 = vmatpush1.msra.mxu0 0.0
        %1263 = vmatprep.subr.mxu0 0.0
        %1264 = vmatpush1.msra.mxu0 0.0
        %1265 = vmatprep.subr.mxu0 0.0
        %1266 = vmatpush1.msra.mxu0 0.0
        %1267 = vmatprep.subr.mxu0 0.0
        %1268 = vmatpush1.msra.mxu0 0.0
        %1269 = vmatprep.subr.mxu0 0.0
        %1270 = vmatpush1.msra.mxu0 0.0
        %1271 = vmatprep.subr.mxu0 0.0
        %1272 = vmatpush1.msra.mxu0 0.0
        %1273 = vmatprep.subr.mxu0 0.0
        %1274 = vmatpush1.msra.mxu0 0.0
        %1275 = vmatprep.subr.mxu0 0.0
        %1276 = vmatpush1.msra.mxu0 0.0
        %1277 = vmatprep.subr.mxu0 0.0
        %1278 = vmatpush1.msra.mxu0 0.0
        %1279 = vmatprep.subr.mxu0 0.0
        %1280 = vmatpush1.msra.mxu0 0.0
        %1281 = vmatprep.subr.mxu0 0.0
        %1282 = vmatpush1.msra.mxu0 0.0
        %1283 = vmatprep.subr.mxu0 0.0
        %1284 = vmatpush1.msra.mxu0 0.0
        %1285 = vmatprep.subr.mxu0 0.0
        %1286 = vmatpush1.msra.mxu0 0.0
        %1287 = vmatprep.subr.mxu0 0.0
        %1288 = vmatpush1.msra.mxu0 0.0
        %1289 = vmatprep.subr.mxu0 0.0
        %1290 = vmatpush1.msra.mxu0 0.0
        %1291 = vmatprep.subr.mxu0 0.0
        %1292 = vmatpush1.msra.mxu0 0.0
        %1293 = vmatprep.subr.mxu0 0.0
        %1294 = vmatpush1.msra.mxu0 0.0
        %1295 = vmatprep.subr.mxu0 0.0
        %1296 = vmatpush1.msra.mxu0 0.0
        %1297 = vmatprep.subr.mxu0 0.0
        %1298 = vmatpush1.msra.mxu0 0.0
        %1299 = vmatprep.subr.mxu0 0.0
        %1300 = vmatpush1.msra.mxu0 0.0
        %1301 = vmatprep.subr.mxu0 0.0
        %1302 = vmatpush1.msra.mxu0 0.0
        %1303 = vmatprep.subr.mxu0 0.0
        %1304 = vmatpush1.msra.mxu0 0.0
        %1305 = vmatprep.mubr.f32.mxu0 0.0
        %1306 = vmatmul.mubr.f32.gmra.mrb[0].mxu0 %v1029
        %v1307 = vpop.f32.mrb[0].mxu0
        %v1308 = vadd.f32 %v1022, %v1307
        %v1309 = vpop.f32.mrb[0].mxu0
        %1310 = vdwg.mxu0
        %v1311 = vld [vmem:[%s8] sm:$0xff]
        %v1312 = vld [vmem:[%s8 + $0x8] sm:$0xff]
        %v1313 = vld [vmem:[%s8 + $0x10] sm:$0xff]
        %v1314 = vld [vmem:[%s8 + $0x18] sm:$0xff]
        %v1315 = vld [vmem:[%s9] sm:$0x1]
        %1317 = vrot.lane.b32.xlu0 %v1098, 120
        %v1318 = vpop.permute.xlu0 %1317
        %vm1319 = vcmask 64512
        %v1320 = vsel %vm1319, %v1098, 0
        %v1322 = vsel %vm1319, %v1318, 0
        %1324 = vmatprep.subr.mxu0 0.0
        %1325 = vmatpush1.xpose.msra.mxu0 %v1322
        %1326 = vmatprep.subr.mxu0 0.0
        %1327 = vmatpush1.xpose.msra.mxu0 0.0
        %1328 = vmatprep.subr.mxu0 0.0
        %1329 = vmatpush1.xpose.msra.mxu0 0.0
        %1330 = vmatprep.subr.mxu0 0.0
        %1331 = vmatpush1.xpose.msra.mxu0 0.0
        %1332 = vmatprep.subr.mxu0 0.0
        %1333 = vmatpush1.xpose.msra.mxu0 0.0
        %1334 = vmatprep.subr.mxu0 0.0
        %1335 = vmatpush1.xpose.msra.mxu0 0.0
        %1336 = vmatprep.subr.mxu0 0.0
        %1337 = vmatpush1.xpose.msra.mxu0 0.0
        %1338 = vmatprep.subr.mxu0 0.0
        %1339 = vmatpush1.xpose.msra.mxu0 0.0
        %1340 = vmatprep.subr.mxu0 0.0
        %1341 = vmatpush1.xpose.msra.mxu0 0.0
        %1342 = vmatprep.subr.mxu0 0.0
        %1343 = vmatpush1.xpose.msra.mxu0 0.0
        %1344 = vmatprep.subr.mxu0 0.0
        %1345 = vmatpush1.xpose.msra.mxu0 0.0
        %1346 = vmatprep.subr.mxu0 0.0
        %1347 = vmatpush1.xpose.msra.mxu0 0.0
        %1348 = vmatprep.subr.mxu0 0.0
        %1349 = vmatpush1.xpose.msra.mxu0 0.0
        %1350 = vmatprep.subr.mxu0 0.0
        %1351 = vmatpush1.xpose.msra.mxu0 0.0
        %1352 = vmatprep.subr.mxu0 0.0
        %1353 = vmatpush1.xpose.msra.mxu0 0.0
        %1354 = vmatprep.subr.mxu0 0.0
        %1355 = vmatpush1.xpose.msra.mxu0 0.0
        %1356 = vmatprep.subr.mxu0 0.0
        %1357 = vmatpush1.xpose.msra.mxu0 0.0
        %1358 = vmatprep.subr.mxu0 0.0
        %1359 = vmatpush1.xpose.msra.mxu0 0.0
        %1360 = vmatprep.subr.mxu0 0.0
        %1361 = vmatpush1.xpose.msra.mxu0 0.0
        %1362 = vmatprep.subr.mxu0 0.0
        %1363 = vmatpush1.xpose.msra.mxu0 0.0
        %1364 = vmatprep.subr.mxu0 0.0
        %1365 = vmatpush1.xpose.msra.mxu0 0.0
        %1366 = vmatprep.subr.mxu0 0.0
        %1367 = vmatpush1.xpose.msra.mxu0 0.0
        %1368 = vmatprep.subr.mxu0 0.0
        %1369 = vmatpush1.xpose.msra.mxu0 0.0
        %1370 = vmatprep.subr.mxu0 0.0
        %1371 = vmatpush1.xpose.msra.mxu0 0.0
        %1372 = vmatprep.subr.mxu0 0.0
        %1373 = vmatpush1.xpose.msra.mxu0 0.0
        %1374 = vmatprep.subr.mxu0 0.0
        %1375 = vmatpush1.xpose.msra.mxu0 0.0
        %1376 = vmatprep.subr.mxu0 0.0
        %1377 = vmatpush1.xpose.msra.mxu0 0.0
        %1378 = vmatprep.subr.mxu0 0.0
        %1379 = vmatpush1.xpose.msra.mxu0 0.0
        %1380 = vmatprep.subr.mxu0 0.0
        %1381 = vmatpush1.xpose.msra.mxu0 0.0
        %1382 = vmatprep.subr.mxu0 0.0
        %1383 = vmatpush1.xpose.msra.mxu0 0.0
        %1384 = vmatprep.subr.mxu0 0.0
        %1385 = vmatpush1.xpose.msra.mxu0 0.0
        %1386 = vmatprep.subr.mxu0 0.0
        %1387 = vmatpush1.xpose.msra.mxu0 0.0
        %1388 = vmatprep.mubr.f32.mxu0 0.0
        %1389 = vmatmul.mubr.f32.gmra.mrb[0].mxu0 %v1320
        %v1390 = vpop.f32.mrb[0].mxu0
        %v1391 = vadd.f32 0.0, %v1390
        %v1392 = vpop.f32.mrb[0].mxu0
        %1393 = vdwg.mxu0
        %1395 = vrot.lane.b32.xlu0 %v1168, 120
        %v1396 = vpop.permute.xlu0 %1395
        %v1397 = vsel %vm1319, %v1168, 0
        %v1399 = vsel %vm1319, %v1396, 0
        %1401 = vmatprep.subr.mxu0 0.0
        %1402 = vmatpush1.xpose.msra.mxu0 %v1399
        %1403 = vmatprep.subr.mxu0 0.0
        %1404 = vmatpush1.xpose.msra.mxu0 0.0
        %1405 = vmatprep.subr.mxu0 0.0
        %1406 = vmatpush1.xpose.msra.mxu0 0.0
        %1407 = vmatprep.subr.mxu0 0.0
        %1408 = vmatpush1.xpose.msra.mxu0 0.0
        %1409 = vmatprep.subr.mxu0 0.0
        %1410 = vmatpush1.xpose.msra.mxu0 0.0
        %1411 = vmatprep.subr.mxu0 0.0
        %1412 = vmatpush1.xpose.msra.mxu0 0.0
        %1413 = vmatprep.subr.mxu0 0.0
        %1414 = vmatpush1.xpose.msra.mxu0 0.0
        %1415 = vmatprep.subr.mxu0 0.0
        %1416 = vmatpush1.xpose.msra.mxu0 0.0
        %1417 = vmatprep.subr.mxu0 0.0
        %1418 = vmatpush1.xpose.msra.mxu0 0.0
        %1419 = vmatprep.subr.mxu0 0.0
        %1420 = vmatpush1.xpose.msra.mxu0 0.0
        %1421 = vmatprep.subr.mxu0 0.0
        %1422 = vmatpush1.xpose.msra.mxu0 0.0
        %1423 = vmatprep.subr.mxu0 0.0
        %1424 = vmatpush1.xpose.msra.mxu0 0.0
        %1425 = vmatprep.subr.mxu0 0.0
        %1426 = vmatpush1.xpose.msra.mxu0 0.0
        %1427 = vmatprep.subr.mxu0 0.0
        %1428 = vmatpush1.xpose.msra.mxu0 0.0
        %1429 = vmatprep.subr.mxu0 0.0
        %1430 = vmatpush1.xpose.msra.mxu0 0.0
        %1431 = vmatprep.subr.mxu0 0.0
        %1432 = vmatpush1.xpose.msra.mxu0 0.0
        %1433 = vmatprep.subr.mxu0 0.0
        %1434 = vmatpush1.xpose.msra.mxu0 0.0
        %1435 = vmatprep.subr.mxu0 0.0
        %1436 = vmatpush1.xpose.msra.mxu0 0.0
        %1437 = vmatprep.subr.mxu0 0.0
        %1438 = vmatpush1.xpose.msra.mxu0 0.0
        %1439 = vmatprep.subr.mxu0 0.0
        %1440 = vmatpush1.xpose.msra.mxu0 0.0
        %1441 = vmatprep.subr.mxu0 0.0
        %1442 = vmatpush1.xpose.msra.mxu0 0.0
        %1443 = vmatprep.subr.mxu0 0.0
        %1444 = vmatpush1.xpose.msra.mxu0 0.0
        %1445 = vmatprep.subr.mxu0 0.0
        %1446 = vmatpush1.xpose.msra.mxu0 0.0
        %1447 = vmatprep.subr.mxu0 0.0
        %1448 = vmatpush1.xpose.msra.mxu0 0.0
        %1449 = vmatprep.subr.mxu0 0.0
        %1450 = vmatpush1.xpose.msra.mxu0 0.0
        %1451 = vmatprep.subr.mxu0 0.0
        %1452 = vmatpush1.xpose.msra.mxu0 0.0
        %1453 = vmatprep.subr.mxu0 0.0
        %1454 = vmatpush1.xpose.msra.mxu0 0.0
        %1455 = vmatprep.subr.mxu0 0.0
        %1456 = vmatpush1.xpose.msra.mxu0 0.0
        %1457 = vmatprep.subr.mxu0 0.0
        %1458 = vmatpush1.xpose.msra.mxu0 0.0
        %1459 = vmatprep.subr.mxu0 0.0
        %1460 = vmatpush1.xpose.msra.mxu0 0.0
        %1461 = vmatprep.subr.mxu0 0.0
        %1462 = vmatpush1.xpose.msra.mxu0 0.0
        %1463 = vmatprep.subr.mxu0 0.0
        %1464 = vmatpush1.xpose.msra.mxu0 0.0
        %1465 = vmatprep.mubr.f32.mxu0 0.0
        %1466 = vmatmul.mubr.f32.gmra.mrb[0].mxu0 %v1397
        %v1467 = vpop.f32.mrb[0].mxu0
        %v1468 = vadd.f32 0.0, %v1467
        %v1469 = vpop.f32.mrb[0].mxu0
        %1470 = vdwg.mxu0
        %1472 = vrot.lane.b32.xlu0 %v1238, 120
        %v1473 = vpop.permute.xlu0 %1472
        %v1474 = vsel %vm1319, %v1238, 0
        %v1476 = vsel %vm1319, %v1473, 0
        %1478 = vmatprep.subr.mxu0 0.0
        %1479 = vmatpush1.xpose.msra.mxu0 %v1476
        %1480 = vmatprep.subr.mxu0 0.0
        %1481 = vmatpush1.xpose.msra.mxu0 0.0
        %1482 = vmatprep.subr.mxu0 0.0
        %1483 = vmatpush1.xpose.msra.mxu0 0.0
        %1484 = vmatprep.subr.mxu0 0.0
        %1485 = vmatpush1.xpose.msra.mxu0 0.0
        %1486 = vmatprep.subr.mxu0 0.0
        %1487 = vmatpush1.xpose.msra.mxu0 0.0
        %1488 = vmatprep.subr.mxu0 0.0
        %1489 = vmatpush1.xpose.msra.mxu0 0.0
        %1490 = vmatprep.subr.mxu0 0.0
        %1491 = vmatpush1.xpose.msra.mxu0 0.0
        %1492 = vmatprep.subr.mxu0 0.0
        %1493 = vmatpush1.xpose.msra.mxu0 0.0
        %1494 = vmatprep.subr.mxu0 0.0
        %1495 = vmatpush1.xpose.msra.mxu0 0.0
        %1496 = vmatprep.subr.mxu0 0.0
        %1497 = vmatpush1.xpose.msra.mxu0 0.0
        %1498 = vmatprep.subr.mxu0 0.0
        %1499 = vmatpush1.xpose.msra.mxu0 0.0
        %1500 = vmatprep.subr.mxu0 0.0
        %1501 = vmatpush1.xpose.msra.mxu0 0.0
        %1502 = vmatprep.subr.mxu0 0.0
        %1503 = vmatpush1.xpose.msra.mxu0 0.0
        %1504 = vmatprep.subr.mxu0 0.0
        %1505 = vmatpush1.xpose.msra.mxu0 0.0
        %1506 = vmatprep.subr.mxu0 0.0
        %1507 = vmatpush1.xpose.msra.mxu0 0.0
        %1508 = vmatprep.subr.mxu0 0.0
        %1509 = vmatpush1.xpose.msra.mxu0 0.0
        %1510 = vmatprep.subr.mxu0 0.0
        %1511 = vmatpush1.xpose.msra.mxu0 0.0
        %1512 = vmatprep.subr.mxu0 0.0
        %1513 = vmatpush1.xpose.msra.mxu0 0.0
        %1514 = vmatprep.subr.mxu0 0.0
        %1515 = vmatpush1.xpose.msra.mxu0 0.0
        %1516 = vmatprep.subr.mxu0 0.0
        %1517 = vmatpush1.xpose.msra.mxu0 0.0
        %1518 = vmatprep.subr.mxu0 0.0
        %1519 = vmatpush1.xpose.msra.mxu0 0.0
        %1520 = vmatprep.subr.mxu0 0.0
        %1521 = vmatpush1.xpose.msra.mxu0 0.0
        %1522 = vmatprep.subr.mxu0 0.0
        %1523 = vmatpush1.xpose.msra.mxu0 0.0
        %1524 = vmatprep.subr.mxu0 0.0
        %1525 = vmatpush1.xpose.msra.mxu0 0.0
        %1526 = vmatprep.subr.mxu0 0.0
        %1527 = vmatpush1.xpose.msra.mxu0 0.0
        %1528 = vmatprep.subr.mxu0 0.0
        %1529 = vmatpush1.xpose.msra.mxu0 0.0
        %1530 = vmatprep.subr.mxu0 0.0
        %1531 = vmatpush1.xpose.msra.mxu0 0.0
        %1532 = vmatprep.subr.mxu0 0.0
        %1533 = vmatpush1.xpose.msra.mxu0 0.0
        %1534 = vmatprep.subr.mxu0 0.0
        %1535 = vmatpush1.xpose.msra.mxu0 0.0
        %1536 = vmatprep.subr.mxu0 0.0
        %1537 = vmatpush1.xpose.msra.mxu0 0.0
        %1538 = vmatprep.subr.mxu0 0.0
        %1539 = vmatpush1.xpose.msra.mxu0 0.0
        %1540 = vmatprep.subr.mxu0 0.0
        %1541 = vmatpush1.xpose.msra.mxu0 0.0
        %1542 = vmatprep.mubr.f32.mxu0 0.0
        %1543 = vmatmul.mubr.f32.gmra.mrb[0].mxu0 %v1474
        %v1544 = vpop.f32.mrb[0].mxu0
        %v1545 = vadd.f32 0.0, %v1544
        %v1546 = vpop.f32.mrb[0].mxu0
        %1547 = vdwg.mxu0
        %1549 = vrot.lane.b32.xlu0 %v1308, 120
        %v1550 = vpop.permute.xlu0 %1549
        %v1551 = vsel %vm1319, %v1308, 0
        %v1553 = vsel %vm1319, %v1550, 0
        %1555 = vmatprep.subr.mxu0 0.0
        %1556 = vmatpush1.xpose.msra.mxu0 %v1553
        %1557 = vmatprep.subr.mxu0 0.0
        %1558 = vmatpush1.xpose.msra.mxu0 0.0
        %1559 = vmatprep.subr.mxu0 0.0
        %1560 = vmatpush1.xpose.msra.mxu0 0.0
        %1561 = vmatprep.subr.mxu0 0.0
        %1562 = vmatpush1.xpose.msra.mxu0 0.0
        %1563 = vmatprep.subr.mxu0 0.0
        %1564 = vmatpush1.xpose.msra.mxu0 0.0
        %1565 = vmatprep.subr.mxu0 0.0
        %1566 = vmatpush1.xpose.msra.mxu0 0.0
        %1567 = vmatprep.subr.mxu0 0.0
        %1568 = vmatpush1.xpose.msra.mxu0 0.0
        %1569 = vmatprep.subr.mxu0 0.0
        %1570 = vmatpush1.xpose.msra.mxu0 0.0
        %1571 = vmatprep.subr.mxu0 0.0
        %1572 = vmatpush1.xpose.msra.mxu0 0.0
        %1573 = vmatprep.subr.mxu0 0.0
        %1574 = vmatpush1.xpose.msra.mxu0 0.0
        %1575 = vmatprep.subr.mxu0 0.0
        %1576 = vmatpush1.xpose.msra.mxu0 0.0
        %1577 = vmatprep.subr.mxu0 0.0
        %1578 = vmatpush1.xpose.msra.mxu0 0.0
        %1579 = vmatprep.subr.mxu0 0.0
        %1580 = vmatpush1.xpose.msra.mxu0 0.0
        %1581 = vmatprep.subr.mxu0 0.0
        %1582 = vmatpush1.xpose.msra.mxu0 0.0
        %1583 = vmatprep.subr.mxu0 0.0
        %1584 = vmatpush1.xpose.msra.mxu0 0.0
        %1585 = vmatprep.subr.mxu0 0.0
        %1586 = vmatpush1.xpose.msra.mxu0 0.0
        %1587 = vmatprep.subr.mxu0 0.0
        %1588 = vmatpush1.xpose.msra.mxu0 0.0
        %1589 = vmatprep.subr.mxu0 0.0
        %1590 = vmatpush1.xpose.msra.mxu0 0.0
        %1591 = vmatprep.subr.mxu0 0.0
        %1592 = vmatpush1.xpose.msra.mxu0 0.0
        %1593 = vmatprep.subr.mxu0 0.0
        %1594 = vmatpush1.xpose.msra.mxu0 0.0
        %1595 = vmatprep.subr.mxu0 0.0
        %1596 = vmatpush1.xpose.msra.mxu0 0.0
        %1597 = vmatprep.subr.mxu0 0.0
        %1598 = vmatpush1.xpose.msra.mxu0 0.0
        %1599 = vmatprep.subr.mxu0 0.0
        %1600 = vmatpush1.xpose.msra.mxu0 0.0
        %1601 = vmatprep.subr.mxu0 0.0
        %1602 = vmatpush1.xpose.msra.mxu0 0.0
        %1603 = vmatprep.subr.mxu0 0.0
        %1604 = vmatpush1.xpose.msra.mxu0 0.0
        %1605 = vmatprep.subr.mxu0 0.0
        %1606 = vmatpush1.xpose.msra.mxu0 0.0
        %1607 = vmatprep.subr.mxu0 0.0
        %1608 = vmatpush1.xpose.msra.mxu0 0.0
        %1609 = vmatprep.subr.mxu0 0.0
        %1610 = vmatpush1.xpose.msra.mxu0 0.0
        %1611 = vmatprep.subr.mxu0 0.0
        %1612 = vmatpush1.xpose.msra.mxu0 0.0
        %1613 = vmatprep.subr.mxu0 0.0
        %1614 = vmatpush1.xpose.msra.mxu0 0.0
        %1615 = vmatprep.subr.mxu0 0.0
        %1616 = vmatpush1.xpose.msra.mxu0 0.0
        %1617 = vmatprep.subr.mxu0 0.0
        %1618 = vmatpush1.xpose.msra.mxu0 0.0
        %1619 = vmatprep.mubr.f32.mxu0 0.0
        %1620 = vmatmul.mubr.f32.gmra.mrb[0].mxu0 %v1551
        %v1621 = vpop.f32.mrb[0].mxu0
        %v1622 = vadd.f32 0.0, %v1621
        %v1623 = vpop.f32.mrb[0].mxu0
        %1624 = vdwg.mxu0
        %v1625 = vmul.f32 %v1391, 0.35355338
        %v1626 = vmul.f32 %v1468, 0.35355338
        %v1627 = vmul.f32 %v1545, 0.35355338
        %v1628 = vmul.f32 %v1622, 0.35355338
        %v1629 = vadd.f32 %v1625, %v979
        %v1630 = vadd.f32 %v1626, %v979
        %v1631 = vadd.f32 %v1627, %v979
        %v1632 = vadd.f32 %v1628, %v979
        %v1633 = vsel %vm1319, %v1629, -inf
        %1634 = vmax.xlane.f32.xlu0 %v1633
        %v1635 = vpop.xlane.xlu0 %1634
        %v1636 = vsel %vm1319, %v1630, -inf
        %1637 = vmax.xlane.f32.xlu0 %v1636
        %v1638 = vpop.xlane.xlu0 %1637
        %v1639 = vsel %vm1319, %v1631, -inf
        %1640 = vmax.xlane.f32.xlu0 %v1639
        %v1641 = vpop.xlane.xlu0 %1640
        %v1642 = vsel %vm1319, %v1632, -inf
        %1643 = vmax.xlane.f32.xlu0 %v1642
        %v1644 = vpop.xlane.xlu0 %1643
        %v1645 = vsub.f32 %v1629, %v1635
        %v1646 = vsub.f32 %v1630, %v1638
        %v1647 = vsub.f32 %v1631, %v1641
        %v1648 = vsub.f32 %v1632, %v1644
        %v1649 = vmul.f32 %v1645, 1.442695
        %v1650 = vpow.pop %v1649
        %v1651 = vmul.f32 %v1646, 1.442695
        %v1652 = vpow.pop %v1651
        %v1653 = vmul.f32 %v1647, 1.442695
        %v1654 = vpow.pop %v1653
        %v1655 = vmul.f32 %v1648, 1.442695
        %v1656 = vpow.pop %v1655
        %v1657 = vsel %vm1319, %v1650, 0.0
        %1658 = vadd.xlane.f32.xlu0 %v1657
        %v1659 = vpop.xlane.xlu0 %1658
        %v1660 = vsel %vm1319, %v1652, 0.0
        %1661 = vadd.xlane.f32.xlu0 %v1660
        %v1662 = vpop.xlane.xlu0 %1661
        %v1663 = vsel %vm1319, %v1654, 0.0
        %1664 = vadd.xlane.f32.xlu0 %v1663
        %v1665 = vpop.xlane.xlu0 %1664
        %v1666 = vsel %vm1319, %v1656, 0.0
        %1667 = vadd.xlane.f32.xlu0 %v1666
        %v1668 = vpop.xlane.xlu0 %1667
        %v1669 = vrcp.pop %v1659
        %v1670 = vmul.f32 %v1650, %v1669
        %v1671 = vrcp.pop %v1662
        %v1672 = vmul.f32 %v1652, %v1671
        %v1673 = vrcp.pop %v1665
        %v1674 = vmul.f32 %v1654, %v1673
        %v1675 = vrcp.pop %v1668
        %v1676 = vmul.f32 %v1656, %v1675
        %1677 = vrot.lane.b32.xlu0 %v1098, 112
        %v1678 = vpop.permute.xlu0 %1677
        %v1681 = vsel %vm1319, %v1670, 0
        %1683 = vmatprep.subr.mxu0 0.0
        %1684 = vmatpush1.msra.mxu0 %v1678
        %1685 = vmatprep.subr.mxu0 0.0
        %1686 = vmatpush1.msra.mxu0 0.0
        %1687 = vmatprep.subr.mxu0 0.0
        %1688 = vmatpush1.msra.mxu0 0.0
        %1689 = vmatprep.subr.mxu0 0.0
        %1690 = vmatpush1.msra.mxu0 0.0
        %1691 = vmatprep.subr.mxu0 0.0
        %1692 = vmatpush1.msra.mxu0 0.0
        %1693 = vmatprep.subr.mxu0 0.0
        %1694 = vmatpush1.msra.mxu0 0.0
        %1695 = vmatprep.subr.mxu0 0.0
        %1696 = vmatpush1.msra.mxu0 0.0
        %1697 = vmatprep.subr.mxu0 0.0
        %1698 = vmatpush1.msra.mxu0 0.0
        %1699 = vmatprep.subr.mxu0 0.0
        %1700 = vmatpush1.msra.mxu0 0.0
        %1701 = vmatprep.subr.mxu0 0.0
        %1702 = vmatpush1.msra.mxu0 0.0
        %1703 = vmatprep.subr.mxu0 0.0
        %1704 = vmatpush1.msra.mxu0 0.0
        %1705 = vmatprep.subr.mxu0 0.0
        %1706 = vmatpush1.msra.mxu0 0.0
        %1707 = vmatprep.subr.mxu0 0.0
        %1708 = vmatpush1.msra.mxu0 0.0
        %1709 = vmatprep.subr.mxu0 0.0
        %1710 = vmatpush1.msra.mxu0 0.0
        %1711 = vmatprep.subr.mxu0 0.0
        %1712 = vmatpush1.msra.mxu0 0.0
        %1713 = vmatprep.subr.mxu0 0.0
        %1714 = vmatpush1.msra.mxu0 0.0
        %1715 = vmatprep.subr.mxu0 0.0
        %1716 = vmatpush1.msra.mxu0 0.0
        %1717 = vmatprep.subr.mxu0 0.0
        %1718 = vmatpush1.msra.mxu0 0.0
        %1719 = vmatprep.subr.mxu0 0.0
        %1720 = vmatpush1.msra.mxu0 0.0
        %1721 = vmatprep.subr.mxu0 0.0
        %1722 = vmatpush1.msra.mxu0 0.0
        %1723 = vmatprep.subr.mxu0 0.0
        %1724 = vmatpush1.msra.mxu0 0.0
        %1725 = vmatprep.subr.mxu0 0.0
        %1726 = vmatpush1.msra.mxu0 0.0
        %1727 = vmatprep.subr.mxu0 0.0
        %1728 = vmatpush1.msra.mxu0 0.0
        %1729 = vmatprep.subr.mxu0 0.0
        %1730 = vmatpush1.msra.mxu0 0.0
        %1731 = vmatprep.subr.mxu0 0.0
        %1732 = vmatpush1.msra.mxu0 0.0
        %1733 = vmatprep.subr.mxu0 0.0
        %1734 = vmatpush1.msra.mxu0 0.0
        %1735 = vmatprep.subr.mxu0 0.0
        %1736 = vmatpush1.msra.mxu0 0.0
        %1737 = vmatprep.subr.mxu0 0.0
        %1738 = vmatpush1.msra.mxu0 0.0
        %1739 = vmatprep.subr.mxu0 0.0
        %1740 = vmatpush1.msra.mxu0 0.0
        %1741 = vmatprep.subr.mxu0 0.0
        %1742 = vmatpush1.msra.mxu0 0.0
        %1743 = vmatprep.subr.mxu0 0.0
        %1744 = vmatpush1.msra.mxu0 0.0
        %1745 = vmatprep.subr.mxu0 0.0
        %1746 = vmatpush1.msra.mxu0 0.0
        %1747 = vmatprep.mubr.f32.mxu0 0.0
        %1748 = vmatmul.mubr.f32.gmra.mrb[0].mxu0 %v1681
        %v1749 = vpop.f32.mrb[0].mxu0
        %v1750 = vadd.f32 0.0, %v1749
        %v1751 = vpop.f32.mrb[0].mxu0
        %1752 = vdwg.mxu0
        %1753 = vrot.lane.b32.xlu0 %v1168, 112
        %v1754 = vpop.permute.xlu0 %1753
        %v1757 = vsel %vm1319, %v1672, 0
        %1759 = vmatprep.subr.mxu0 0.0
        %1760 = vmatpush1.msra.mxu0 %v1754
        %1761 = vmatprep.subr.mxu0 0.0
        %1762 = vmatpush1.msra.mxu0 0.0
        %1763 = vmatprep.subr.mxu0 0.0
        %1764 = vmatpush1.msra.mxu0 0.0
        %1765 = vmatprep.subr.mxu0 0.0
        %1766 = vmatpush1.msra.mxu0 0.0
        %1767 = vmatprep.subr.mxu0 0.0
        %1768 = vmatpush1.msra.mxu0 0.0
        %1769 = vmatprep.subr.mxu0 0.0
        %1770 = vmatpush1.msra.mxu0 0.0
        %1771 = vmatprep.subr.mxu0 0.0
        %1772 = vmatpush1.msra.mxu0 0.0
        %1773 = vmatprep.subr.mxu0 0.0
        %1774 = vmatpush1.msra.mxu0 0.0
        %1775 = vmatprep.subr.mxu0 0.0
        %1776 = vmatpush1.msra.mxu0 0.0
        %1777 = vmatprep.subr.mxu0 0.0
        %1778 = vmatpush1.msra.mxu0 0.0
        %1779 = vmatprep.subr.mxu0 0.0
        %1780 = vmatpush1.msra.mxu0 0.0
        %1781 = vmatprep.subr.mxu0 0.0
        %1782 = vmatpush1.msra.mxu0 0.0
        %1783 = vmatprep.subr.mxu0 0.0
        %1784 = vmatpush1.msra.mxu0 0.0
        %1785 = vmatprep.subr.mxu0 0.0
        %1786 = vmatpush1.msra.mxu0 0.0
        %1787 = vmatprep.subr.mxu0 0.0
        %1788 = vmatpush1.msra.mxu0 0.0
        %1789 = vmatprep.subr.mxu0 0.0
        %1790 = vmatpush1.msra.mxu0 0.0
        %1791 = vmatprep.subr.mxu0 0.0
        %1792 = vmatpush1.msra.mxu0 0.0
        %1793 = vmatprep.subr.mxu0 0.0
        %1794 = vmatpush1.msra.mxu0 0.0
        %1795 = vmatprep.subr.mxu0 0.0
        %1796 = vmatpush1.msra.mxu0 0.0
        %1797 = vmatprep.subr.mxu0 0.0
        %1798 = vmatpush1.msra.mxu0 0.0
        %1799 = vmatprep.subr.mxu0 0.0
        %1800 = vmatpush1.msra.mxu0 0.0
        %1801 = vmatprep.subr.mxu0 0.0
        %1802 = vmatpush1.msra.mxu0 0.0
        %1803 = vmatprep.subr.mxu0 0.0
        %1804 = vmatpush1.msra.mxu0 0.0
        %1805 = vmatprep.subr.mxu0 0.0
        %1806 = vmatpush1.msra.mxu0 0.0
        %1807 = vmatprep.subr.mxu0 0.0
        %1808 = vmatpush1.msra.mxu0 0.0
        %1809 = vmatprep.subr.mxu0 0.0
        %1810 = vmatpush1.msra.mxu0 0.0
        %1811 = vmatprep.subr.mxu0 0.0
        %1812 = vmatpush1.msra.mxu0 0.0
        %1813 = vmatprep.subr.mxu0 0.0
        %1814 = vmatpush1.msra.mxu0 0.0
        %1815 = vmatprep.subr.mxu0 0.0
        %1816 = vmatpush1.msra.mxu0 0.0
        %1817 = vmatprep.subr.mxu0 0.0
        %1818 = vmatpush1.msra.mxu0 0.0
        %1819 = vmatprep.subr.mxu0 0.0
        %1820 = vmatpush1.msra.mxu0 0.0
        %1821 = vmatprep.subr.mxu0 0.0
        %1822 = vmatpush1.msra.mxu0 0.0
        %1823 = vmatprep.mubr.f32.mxu0 0.0
        %1824 = vmatmul.mubr.f32.gmra.mrb[0].mxu0 %v1757
        %v1825 = vpop.f32.mrb[0].mxu0
        %v1826 = vadd.f32 0.0, %v1825
        %v1827 = vpop.f32.mrb[0].mxu0
        %1828 = vdwg.mxu0
        %1829 = vrot.lane.b32.xlu0 %v1238, 112
        %v1830 = vpop.permute.xlu0 %1829
        %v1833 = vsel %vm1319, %v1674, 0
        %1835 = vmatprep.subr.mxu0 0.0
        %1836 = vmatpush1.msra.mxu0 %v1830
        %1837 = vmatprep.subr.mxu0 0.0
        %1838 = vmatpush1.msra.mxu0 0.0
        %1839 = vmatprep.subr.mxu0 0.0
        %1840 = vmatpush1.msra.mxu0 0.0
        %1841 = vmatprep.subr.mxu0 0.0
        %1842 = vmatpush1.msra.mxu0 0.0
        %1843 = vmatprep.subr.mxu0 0.0
        %1844 = vmatpush1.msra.mxu0 0.0
        %1845 = vmatprep.subr.mxu0 0.0
        %1846 = vmatpush1.msra.mxu0 0.0
        %1847 = vmatprep.subr.mxu0 0.0
        %1848 = vmatpush1.msra.mxu0 0.0
        %1849 = vmatprep.subr.mxu0 0.0
        %1850 = vmatpush1.msra.mxu0 0.0
        %1851 = vmatprep.subr.mxu0 0.0
        %1852 = vmatpush1.msra.mxu0 0.0
        %1853 = vmatprep.subr.mxu0 0.0
        %1854 = vmatpush1.msra.mxu0 0.0
        %1855 = vmatprep.subr.mxu0 0.0
        %1856 = vmatpush1.msra.mxu0 0.0
        %1857 = vmatprep.subr.mxu0 0.0
        %1858 = vmatpush1.msra.mxu0 0.0
        %1859 = vmatprep.subr.mxu0 0.0
        %1860 = vmatpush1.msra.mxu0 0.0
        %1861 = vmatprep.subr.mxu0 0.0
        %1862 = vmatpush1.msra.mxu0 0.0
        %1863 = vmatprep.subr.mxu0 0.0
        %1864 = vmatpush1.msra.mxu0 0.0
        %1865 = vmatprep.subr.mxu0 0.0
        %1866 = vmatpush1.msra.mxu0 0.0
        %1867 = vmatprep.subr.mxu0 0.0
        %1868 = vmatpush1.msra.mxu0 0.0
        %1869 = vmatprep.subr.mxu0 0.0
        %1870 = vmatpush1.msra.mxu0 0.0
        %1871 = vmatprep.subr.mxu0 0.0
        %1872 = vmatpush1.msra.mxu0 0.0
        %1873 = vmatprep.subr.mxu0 0.0
        %1874 = vmatpush1.msra.mxu0 0.0
        %1875 = vmatprep.subr.mxu0 0.0
        %1876 = vmatpush1.msra.mxu0 0.0
        %1877 = vmatprep.subr.mxu0 0.0
        %1878 = vmatpush1.msra.mxu0 0.0
        %1879 = vmatprep.subr.mxu0 0.0
        %1880 = vmatpush1.msra.mxu0 0.0
        %1881 = vmatprep.subr.mxu0 0.0
        %1882 = vmatpush1.msra.mxu0 0.0
        %1883 = vmatprep.subr.mxu0 0.0
        %1884 = vmatpush1.msra.mxu0 0.0
        %1885 = vmatprep.subr.mxu0 0.0
        %1886 = vmatpush1.msra.mxu0 0.0
        %1887 = vmatprep.subr.mxu0 0.0
        %1888 = vmatpush1.msra.mxu0 0.0
        %1889 = vmatprep.subr.mxu0 0.0
        %1890 = vmatpush1.msra.mxu0 0.0
        %1891 = vmatprep.subr.mxu0 0.0
        %1892 = vmatpush1.msra.mxu0 0.0
        %1893 = vmatprep.subr.mxu0 0.0
        %1894 = vmatpush1.msra.mxu0 0.0
        %1895 = vmatprep.subr.mxu0 0.0
        %1896 = vmatpush1.msra.mxu0 0.0
        %1897 = vmatprep.subr.mxu0 0.0
        %1898 = vmatpush1.msra.mxu0 0.0
        %1899 = vmatprep.mubr.f32.mxu0 0.0
        %1900 = vmatmul.mubr.f32.gmra.mrb[0].mxu0 %v1833
        %v1901 = vpop.f32.mrb[0].mxu0
        %v1902 = vadd.f32 0.0, %v1901
        %v1903 = vpop.f32.mrb[0].mxu0
        %1904 = vdwg.mxu0
        %1905 = vrot.lane.b32.xlu0 %v1308, 112
        %v1906 = vpop.permute.xlu0 %1905
        %v1909 = vsel %vm1319, %v1676, 0
        %1911 = vmatprep.subr.mxu0 0.0
        %1912 = vmatpush1.msra.mxu0 %v1906
        %1913 = vmatprep.subr.mxu0 0.0
        %1914 = vmatpush1.msra.mxu0 0.0
        %1915 = vmatprep.subr.mxu0 0.0
        %1916 = vmatpush1.msra.mxu0 0.0
        %1917 = vmatprep.subr.mxu0 0.0
        %1918 = vmatpush1.msra.mxu0 0.0
        %1919 = vmatprep.subr.mxu0 0.0
        %1920 = vmatpush1.msra.mxu0 0.0
        %1921 = vmatprep.subr.mxu0 0.0
        %1922 = vmatpush1.msra.mxu0 0.0
        %1923 = vmatprep.subr.mxu0 0.0
        %1924 = vmatpush1.msra.mxu0 0.0
        %1925 = vmatprep.subr.mxu0 0.0
        %1926 = vmatpush1.msra.mxu0 0.0
        %1927 = vmatprep.subr.mxu0 0.0
        %1928 = vmatpush1.msra.mxu0 0.0
        %1929 = vmatprep.subr.mxu0 0.0
        %1930 = vmatpush1.msra.mxu0 0.0
        %1931 = vmatprep.subr.mxu0 0.0
        %1932 = vmatpush1.msra.mxu0 0.0
        %1933 = vmatprep.subr.mxu0 0.0
        %1934 = vmatpush1.msra.mxu0 0.0
        %1935 = vmatprep.subr.mxu0 0.0
        %1936 = vmatpush1.msra.mxu0 0.0
        %1937 = vmatprep.subr.mxu0 0.0
        %1938 = vmatpush1.msra.mxu0 0.0
        %1939 = vmatprep.subr.mxu0 0.0
        %1940 = vmatpush1.msra.mxu0 0.0
        %1941 = vmatprep.subr.mxu0 0.0
        %1942 = vmatpush1.msra.mxu0 0.0
        %1943 = vmatprep.subr.mxu0 0.0
        %1944 = vmatpush1.msra.mxu0 0.0
        %1945 = vmatprep.subr.mxu0 0.0
        %1946 = vmatpush1.msra.mxu0 0.0
        %1947 = vmatprep.subr.mxu0 0.0
        %1948 = vmatpush1.msra.mxu0 0.0
        %1949 = vmatprep.subr.mxu0 0.0
        %1950 = vmatpush1.msra.mxu0 0.0
        %1951 = vmatprep.subr.mxu0 0.0
        %1952 = vmatpush1.msra.mxu0 0.0
        %1953 = vmatprep.subr.mxu0 0.0
        %1954 = vmatpush1.msra.mxu0 0.0
        %1955 = vmatprep.subr.mxu0 0.0
        %1956 = vmatpush1.msra.mxu0 0.0
        %1957 = vmatprep.subr.mxu0 0.0
        %1958 = vmatpush1.msra.mxu0 0.0
        %1959 = vmatprep.subr.mxu0 0.0
        %1960 = vmatpush1.msra.mxu0 0.0
        %1961 = vmatprep.subr.mxu0 0.0
        %1962 = vmatpush1.msra.mxu0 0.0
        %1963 = vmatprep.subr.mxu0 0.0
        %1964 = vmatpush1.msra.mxu0 0.0
        %1965 = vmatprep.subr.mxu0 0.0
        %1966 = vmatpush1.msra.mxu0 0.0
        %1967 = vmatprep.subr.mxu0 0.0
        %1968 = vmatpush1.msra.mxu0 0.0
        %1969 = vmatprep.subr.mxu0 0.0
        %1970 = vmatpush1.msra.mxu0 0.0
        %1971 = vmatprep.subr.mxu0 0.0
        %1972 = vmatpush1.msra.mxu0 0.0
        %1973 = vmatprep.subr.mxu0 0.0
        %1974 = vmatpush1.msra.mxu0 0.0
        %1975 = vmatprep.mubr.f32.mxu0 0.0
        %1976 = vmatmul.mubr.f32.gmra.mrb[0].mxu0 %v1909
        %v1977 = vpop.f32.mrb[0].mxu0
        %v1978 = vadd.f32 0.0, %v1977
        %v1979 = vpop.f32.mrb[0].mxu0
        %1980 = vdwg.mxu0
        %v1982 = vsel %vm1319, %v1750, 0
        %1984 = vmatprep.subr.mxu0 0.0
        %1985 = vmatpush1.msra.mxu0 %v1311
        %1986 = vmatprep.subr.mxu0 0.0
        %1987 = vmatpush1.msra.mxu0 0.0
        %1988 = vmatprep.subr.mxu0 0.0
        %1989 = vmatpush1.msra.mxu0 0.0
        %1990 = vmatprep.subr.mxu0 0.0
        %1991 = vmatpush1.msra.mxu0 0.0
        %1992 = vmatprep.subr.mxu0 0.0
        %1993 = vmatpush1.msra.mxu0 0.0
        %1994 = vmatprep.subr.mxu0 0.0
        %1995 = vmatpush1.msra.mxu0 0.0
        %1996 = vmatprep.subr.mxu0 0.0
        %1997 = vmatpush1.msra.mxu0 0.0
        %1998 = vmatprep.subr.mxu0 0.0
        %1999 = vmatpush1.msra.mxu0 0.0
        %2000 = vmatprep.subr.mxu0 0.0
        %2001 = vmatpush1.msra.mxu0 0.0
        %2002 = vmatprep.subr.mxu0 0.0
        %2003 = vmatpush1.msra.mxu0 0.0
        %2004 = vmatprep.subr.mxu0 0.0
        %2005 = vmatpush1.msra.mxu0 0.0
        %2006 = vmatprep.subr.mxu0 0.0
        %2007 = vmatpush1.msra.mxu0 0.0
        %2008 = vmatprep.subr.mxu0 0.0
        %2009 = vmatpush1.msra.mxu0 0.0
        %2010 = vmatprep.subr.mxu0 0.0
        %2011 = vmatpush1.msra.mxu0 0.0
        %2012 = vmatprep.subr.mxu0 0.0
        %2013 = vmatpush1.msra.mxu0 0.0
        %2014 = vmatprep.subr.mxu0 0.0
        %2015 = vmatpush1.msra.mxu0 0.0
        %2016 = vmatprep.subr.mxu0 0.0
        %2017 = vmatpush1.msra.mxu0 0.0
        %2018 = vmatprep.subr.mxu0 0.0
        %2019 = vmatpush1.msra.mxu0 0.0
        %2020 = vmatprep.subr.mxu0 0.0
        %2021 = vmatpush1.msra.mxu0 0.0
        %2022 = vmatprep.subr.mxu0 0.0
        %2023 = vmatpush1.msra.mxu0 0.0
        %2024 = vmatprep.subr.mxu0 0.0
        %2025 = vmatpush1.msra.mxu0 0.0
        %2026 = vmatprep.subr.mxu0 0.0
        %2027 = vmatpush1.msra.mxu0 0.0
        %2028 = vmatprep.subr.mxu0 0.0
        %2029 = vmatpush1.msra.mxu0 0.0
        %2030 = vmatprep.subr.mxu0 0.0
        %2031 = vmatpush1.msra.mxu0 0.0
        %2032 = vmatprep.subr.mxu0 0.0
        %2033 = vmatpush1.msra.mxu0 0.0
        %2034 = vmatprep.subr.mxu0 0.0
        %2035 = vmatpush1.msra.mxu0 0.0
        %2036 = vmatprep.subr.mxu0 0.0
        %2037 = vmatpush1.msra.mxu0 0.0
        %2038 = vmatprep.subr.mxu0 0.0
        %2039 = vmatpush1.msra.mxu0 0.0
        %2040 = vmatprep.subr.mxu0 0.0
        %2041 = vmatpush1.msra.mxu0 0.0
        %2042 = vmatprep.subr.mxu0 0.0
        %2043 = vmatpush1.msra.mxu0 0.0
        %2044 = vmatprep.subr.mxu0 0.0
        %2045 = vmatpush1.msra.mxu0 0.0
        %2046 = vmatprep.subr.mxu0 0.0
        %2047 = vmatpush1.msra.mxu0 0.0
        %2048 = vmatprep.mubr.f32.mxu0 0.0
        %2049 = vmatmul.mubr.f32.gmra.mrb[0].mxu0 %v1982
        %v2050 = vpop.f32.mrb[0].mxu0
        %v2051 = vadd.f32 0.0, %v2050
        %v2052 = vpop.f32.mrb[0].mxu0
        %2053 = vdwg.mxu0
        %v2055 = vsel %vm1319, %v1826, 0
        %2057 = vmatprep.subr.mxu0 0.0
        %2058 = vmatpush1.msra.mxu0 %v1312
        %2059 = vmatprep.subr.mxu0 0.0
        %2060 = vmatpush1.msra.mxu0 0.0
        %2061 = vmatprep.subr.mxu0 0.0
        %2062 = vmatpush1.msra.mxu0 0.0
        %2063 = vmatprep.subr.mxu0 0.0
        %2064 = vmatpush1.msra.mxu0 0.0
        %2065 = vmatprep.subr.mxu0 0.0
        %2066 = vmatpush1.msra.mxu0 0.0
        %2067 = vmatprep.subr.mxu0 0.0
        %2068 = vmatpush1.msra.mxu0 0.0
        %2069 = vmatprep.subr.mxu0 0.0
        %2070 = vmatpush1.msra.mxu0 0.0
        %2071 = vmatprep.subr.mxu0 0.0
        %2072 = vmatpush1.msra.mxu0 0.0
        %2073 = vmatprep.subr.mxu0 0.0
        %2074 = vmatpush1.msra.mxu0 0.0
        %2075 = vmatprep.subr.mxu0 0.0
        %2076 = vmatpush1.msra.mxu0 0.0
        %2077 = vmatprep.subr.mxu0 0.0
        %2078 = vmatpush1.msra.mxu0 0.0
        %2079 = vmatprep.subr.mxu0 0.0
        %2080 = vmatpush1.msra.mxu0 0.0
        %2081 = vmatprep.subr.mxu0 0.0
        %2082 = vmatpush1.msra.mxu0 0.0
        %2083 = vmatprep.subr.mxu0 0.0
        %2084 = vmatpush1.msra.mxu0 0.0
        %2085 = vmatprep.subr.mxu0 0.0
        %2086 = vmatpush1.msra.mxu0 0.0
        %2087 = vmatprep.subr.mxu0 0.0
        %2088 = vmatpush1.msra.mxu0 0.0
        %2089 = vmatprep.subr.mxu0 0.0
        %2090 = vmatpush1.msra.mxu0 0.0
        %2091 = vmatprep.subr.mxu0 0.0
        %2092 = vmatpush1.msra.mxu0 0.0
        %2093 = vmatprep.subr.mxu0 0.0
        %2094 = vmatpush1.msra.mxu0 0.0
        %2095 = vmatprep.subr.mxu0 0.0
        %2096 = vmatpush1.msra.mxu0 0.0
        %2097 = vmatprep.subr.mxu0 0.0
        %2098 = vmatpush1.msra.mxu0 0.0
        %2099 = vmatprep.subr.mxu0 0.0
        %2100 = vmatpush1.msra.mxu0 0.0
        %2101 = vmatprep.subr.mxu0 0.0
        %2102 = vmatpush1.msra.mxu0 0.0
        %2103 = vmatprep.subr.mxu0 0.0
        %2104 = vmatpush1.msra.mxu0 0.0
        %2105 = vmatprep.subr.mxu0 0.0
        %2106 = vmatpush1.msra.mxu0 0.0
        %2107 = vmatprep.subr.mxu0 0.0
        %2108 = vmatpush1.msra.mxu0 0.0
        %2109 = vmatprep.subr.mxu0 0.0
        %2110 = vmatpush1.msra.mxu0 0.0
        %2111 = vmatprep.subr.mxu0 0.0
        %2112 = vmatpush1.msra.mxu0 0.0
        %2113 = vmatprep.subr.mxu0 0.0
        %2114 = vmatpush1.msra.mxu0 0.0
        %2115 = vmatprep.subr.mxu0 0.0
        %2116 = vmatpush1.msra.mxu0 0.0
        %2117 = vmatprep.subr.mxu0 0.0
        %2118 = vmatpush1.msra.mxu0 0.0
        %2119 = vmatprep.subr.mxu0 0.0
        %2120 = vmatpush1.msra.mxu0 0.0
        %2121 = vmatprep.mubr.f32.mxu0 0.0
        %2122 = vmatmul.mubr.f32.gmra.mrb[0].mxu0 %v2055
        %v2123 = vpop.f32.mrb[0].mxu0
        %v2124 = vadd.f32 0.0, %v2123
        %v2125 = vpop.f32.mrb[0].mxu0
        %2126 = vdwg.mxu0
        %v2128 = vsel %vm1319, %v1902, 0
        %2130 = vmatprep.subr.mxu0 0.0
        %2131 = vmatpush1.msra.mxu0 %v1313
        %2132 = vmatprep.subr.mxu0 0.0
        %2133 = vmatpush1.msra.mxu0 0.0
        %2134 = vmatprep.subr.mxu0 0.0
        %2135 = vmatpush1.msra.mxu0 0.0
        %2136 = vmatprep.subr.mxu0 0.0
        %2137 = vmatpush1.msra.mxu0 0.0
        %2138 = vmatprep.subr.mxu0 0.0
        %2139 = vmatpush1.msra.mxu0 0.0
        %2140 = vmatprep.subr.mxu0 0.0
        %2141 = vmatpush1.msra.mxu0 0.0
        %2142 = vmatprep.subr.mxu0 0.0
        %2143 = vmatpush1.msra.mxu0 0.0
        %2144 = vmatprep.subr.mxu0 0.0
        %2145 = vmatpush1.msra.mxu0 0.0
        %2146 = vmatprep.subr.mxu0 0.0
        %2147 = vmatpush1.msra.mxu0 0.0
        %2148 = vmatprep.subr.mxu0 0.0
        %2149 = vmatpush1.msra.mxu0 0.0
        %2150 = vmatprep.subr.mxu0 0.0
        %2151 = vmatpush1.msra.mxu0 0.0
        %2152 = vmatprep.subr.mxu0 0.0
        %2153 = vmatpush1.msra.mxu0 0.0
        %2154 = vmatprep.subr.mxu0 0.0
        %2155 = vmatpush1.msra.mxu0 0.0
        %2156 = vmatprep.subr.mxu0 0.0
        %2157 = vmatpush1.msra.mxu0 0.0
        %2158 = vmatprep.subr.mxu0 0.0
        %2159 = vmatpush1.msra.mxu0 0.0
        %2160 = vmatprep.subr.mxu0 0.0
        %2161 = vmatpush1.msra.mxu0 0.0
        %2162 = vmatprep.subr.mxu0 0.0
        %2163 = vmatpush1.msra.mxu0 0.0
        %2164 = vmatprep.subr.mxu0 0.0
        %2165 = vmatpush1.msra.mxu0 0.0
        %2166 = vmatprep.subr.mxu0 0.0
        %2167 = vmatpush1.msra.mxu0 0.0
        %2168 = vmatprep.subr.mxu0 0.0
        %2169 = vmatpush1.msra.mxu0 0.0
        %2170 = vmatprep.subr.mxu0 0.0
        %2171 = vmatpush1.msra.mxu0 0.0
        %2172 = vmatprep.subr.mxu0 0.0
        %2173 = vmatpush1.msra.mxu0 0.0
        %2174 = vmatprep.subr.mxu0 0.0
        %2175 = vmatpush1.msra.mxu0 0.0
        %2176 = vmatprep.subr.mxu0 0.0
        %2177 = vmatpush1.msra.mxu0 0.0
        %2178 = vmatprep.subr.mxu0 0.0
        %2179 = vmatpush1.msra.mxu0 0.0
        %2180 = vmatprep.subr.mxu0 0.0
        %2181 = vmatpush1.msra.mxu0 0.0
        %2182 = vmatprep.subr.mxu0 0.0
        %2183 = vmatpush1.msra.mxu0 0.0
        %2184 = vmatprep.subr.mxu0 0.0
        %2185 = vmatpush1.msra.mxu0 0.0
        %2186 = vmatprep.subr.mxu0 0.0
        %2187 = vmatpush1.msra.mxu0 0.0
        %2188 = vmatprep.subr.mxu0 0.0
        %2189 = vmatpush1.msra.mxu0 0.0
        %2190 = vmatprep.subr.mxu0 0.0
        %2191 = vmatpush1.msra.mxu0 0.0
        %2192 = vmatprep.subr.mxu0 0.0
        %2193 = vmatpush1.msra.mxu0 0.0
        %2194 = vmatprep.mubr.f32.mxu0 0.0
        %2195 = vmatmul.mubr.f32.gmra.mrb[0].mxu0 %v2128
        %v2196 = vpop.f32.mrb[0].mxu0
        %v2197 = vadd.f32 0.0, %v2196
        %v2198 = vpop.f32.mrb[0].mxu0
        %2199 = vdwg.mxu0
        %v2201 = vsel %vm1319, %v1978, 0
        %2203 = vmatprep.subr.mxu0 0.0
        %2204 = vmatpush1.msra.mxu0 %v1314
        %2205 = vmatprep.subr.mxu0 0.0
        %2206 = vmatpush1.msra.mxu0 0.0
        %2207 = vmatprep.subr.mxu0 0.0
        %2208 = vmatpush1.msra.mxu0 0.0
        %2209 = vmatprep.subr.mxu0 0.0
        %2210 = vmatpush1.msra.mxu0 0.0
        %2211 = vmatprep.subr.mxu0 0.0
        %2212 = vmatpush1.msra.mxu0 0.0
        %2213 = vmatprep.subr.mxu0 0.0
        %2214 = vmatpush1.msra.mxu0 0.0
        %2215 = vmatprep.subr.mxu0 0.0
        %2216 = vmatpush1.msra.mxu0 0.0
        %2217 = vmatprep.subr.mxu0 0.0
        %2218 = vmatpush1.msra.mxu0 0.0
        %2219 = vmatprep.subr.mxu0 0.0
        %2220 = vmatpush1.msra.mxu0 0.0
        %2221 = vmatprep.subr.mxu0 0.0
        %2222 = vmatpush1.msra.mxu0 0.0
        %2223 = vmatprep.subr.mxu0 0.0
        %2224 = vmatpush1.msra.mxu0 0.0
        %2225 = vmatprep.subr.mxu0 0.0
        %2226 = vmatpush1.msra.mxu0 0.0
        %2227 = vmatprep.subr.mxu0 0.0
        %2228 = vmatpush1.msra.mxu0 0.0
        %2229 = vmatprep.subr.mxu0 0.0
        %2230 = vmatpush1.msra.mxu0 0.0
        %2231 = vmatprep.subr.mxu0 0.0
        %2232 = vmatpush1.msra.mxu0 0.0
        %2233 = vmatprep.subr.mxu0 0.0
        %2234 = vmatpush1.msra.mxu0 0.0
        %2235 = vmatprep.subr.mxu0 0.0
        %2236 = vmatpush1.msra.mxu0 0.0
        %2237 = vmatprep.subr.mxu0 0.0
        %2238 = vmatpush1.msra.mxu0 0.0
        %2239 = vmatprep.subr.mxu0 0.0
        %2240 = vmatpush1.msra.mxu0 0.0
        %2241 = vmatprep.subr.mxu0 0.0
        %2242 = vmatpush1.msra.mxu0 0.0
        %2243 = vmatprep.subr.mxu0 0.0
        %2244 = vmatpush1.msra.mxu0 0.0
        %2245 = vmatprep.subr.mxu0 0.0
        %2246 = vmatpush1.msra.mxu0 0.0
        %2247 = vmatprep.subr.mxu0 0.0
        %2248 = vmatpush1.msra.mxu0 0.0
        %2249 = vmatprep.subr.mxu0 0.0
        %2250 = vmatpush1.msra.mxu0 0.0
        %2251 = vmatprep.subr.mxu0 0.0
        %2252 = vmatpush1.msra.mxu0 0.0
        %2253 = vmatprep.subr.mxu0 0.0
        %2254 = vmatpush1.msra.mxu0 0.0
        %2255 = vmatprep.subr.mxu0 0.0
        %2256 = vmatpush1.msra.mxu0 0.0
        %2257 = vmatprep.subr.mxu0 0.0
        %2258 = vmatpush1.msra.mxu0 0.0
        %2259 = vmatprep.subr.mxu0 0.0
        %2260 = vmatpush1.msra.mxu0 0.0
        %2261 = vmatprep.subr.mxu0 0.0
        %2262 = vmatpush1.msra.mxu0 0.0
        %2263 = vmatprep.subr.mxu0 0.0
        %2264 = vmatpush1.msra.mxu0 0.0
        %2265 = vmatprep.subr.mxu0 0.0
        %2266 = vmatpush1.msra.mxu0 0.0
        %2267 = vmatprep.mubr.f32.mxu0 0.0
        %2268 = vmatmul.mubr.f32.gmra.mrb[0].mxu0 %v2201
        %v2269 = vpop.f32.mrb[0].mxu0
        %v2270 = vadd.f32 0.0, %v2269
        %v2271 = vpop.f32.mrb[0].mxu0
        %2272 = vdwg.mxu0
        %v2273 = vsel %vm1027, %v2051, 0.0
        %v2274 = vsel %vm1027, %v2124, 0.0
        %v2275 = vadd.f32 %v2273, %v2274
        %v2276 = vsel %vm1027, %v2197, 0.0
        %v2277 = vadd.f32 %v2275, %v2276
        %v2278 = vsel %vm1027, %v2270, 0.0
        %v2279 = vadd.f32 %v2277, %v2278
        %v2281 = vlaneseq
        %v2282 = vshrl.u32 %v2281, 7
        %v2283 = vsub.s32 0, %v2282
        %v2284 = vrot.slane %v1315, %v2283
        %v2286 = vadd.f32 %v2279, %v2284
        %v2287 = vadd.f32 %v976, %v2286
        %v2288 = vld [vmem:[%s10] sm:$0x1]
        %v2289 = vld [vmem:[%s11] sm:$0x1]
        %v2290 = vsel %vm1027, %v2287, 0.0
        %2291 = vadd.xlane.f32.xlu0 %v2290
        %v2292 = vpop.xlane.xlu0 %2291
        %v2293 = vrcp.pop 32.0
        %v2294 = vmul.f32 %v2292, %v2293
        %v2295 = vsub.f32 %v2287, %v2294
        %v2296 = vmul.f32 %v2295, %v2295
        %v2297 = vsel %vm1027, %v2296, 0.0
        %2298 = vadd.xlane.f32.xlu0 %v2297
        %v2299 = vpop.xlane.xlu0 %2298
        %v2300 = vmul.f32 %v2299, %v2293
        %v2301 = vadd.f32 %v2300, 1e-05
        %v2302 = vrsqrt.pop %v2301
        %v2303 = vmul.f32 %v2295, %v2302
        %v2305 = vlaneseq
        %v2306 = vshrl.u32 %v2305, 7
        %v2307 = vsub.s32 0, %v2306
        %v2308 = vrot.slane %v2288, %v2307
        %v2310 = vmul.f32 %v2303, %v2308
        %v2312 = vlaneseq
        %v2313 = vshrl.u32 %v2312, 7
        %v2314 = vsub.s32 0, %v2313
        %v2315 = vrot.slane %v2289, %v2314
        %v2317 = vadd.f32 %v2310, %v2315
        %v2318 = vld [vmem:[%s881] sm:$0xff]
        %v2319 = vld [vmem:[%s12] sm:$0xff]
        %v2320 = vld [vmem:[%s12 + $0x8] sm:$0xff]
        %v2321 = vld [vmem:[%s12 + $0x10] sm:$0xff]
        %v2322 = vld [vmem:[%s12 + $0x18] sm:$0xff]
        %v2323 = vld [vmem:[%s12 + $0x20] sm:$0xff]
        %v2324 = vld [vmem:[%s12 + $0x28] sm:$0xff]
        %v2325 = vld [vmem:[%s12 + $0x30] sm:$0xff]
        %v2326 = vld [vmem:[%s12 + $0x38] sm:$0xff]
        %v2327 = vld [vmem:[%s12 + $0x40] sm:$0xff]
        %v2328 = vld [vmem:[%s12 + $0x48] sm:$0xff]
        %v2329 = vld [vmem:[%s12 + $0x50] sm:$0xff]
        %v2330 = vld [vmem:[%s12 + $0x58] sm:$0xff]
        %v2331 = vld [vmem:[%s12 + $0x60] sm:$0xff]
        %v2332 = vld [vmem:[%s12 + $0x68] sm:$0xff]
        %v2333 = vld [vmem:[%s12 + $0x70] sm:$0xff]
        %v2334 = vld [vmem:[%s12 + $0x78] sm:$0xff]
        %v2335 = vld [vmem:[%s13] sm:$0x1]
        %v2336 = vld [vmem:[%s13 + $0x1] sm:$0x1]
        %v2337 = vld [vmem:[%s13 + $0x2] sm:$0x1]
        %v2338 = vld [vmem:[%s13 + $0x3] sm:$0x1]
        %v2343 = vlaneseq
        %v2344 = vshrl.u32 %v2343, 7
        %v2345 = vsub.s32 0, %v2344
        %v2346 = vrot.slane %v2335, %v2345
        %v2347 = vlaneseq
        %v2348 = vshrl.u32 %v2347, 7
        %v2349 = vsub.s32 0, %v2348
        %v2350 = vrot.slane %v2336, %v2349
        %v2351 = vlaneseq
        %v2352 = vshrl.u32 %v2351, 7
        %v2353 = vsub.s32 0, %v2352
        %v2354 = vrot.slane %v2337, %v2353
        %v2355 = vlaneseq
        %v2356 = vshrl.u32 %v2355, 7
        %v2357 = vsub.s32 0, %v2356
        %v2358 = vrot.slane %v2338, %v2357
        %v2364 = vsel %vm1027, %v2317, 0
        %2366 = vmatprep.subr.mxu0 0.0
        %2367 = vmatpush1.msra.mxu0 %v2319
        %2368 = vmatprep.subr.mxu0 0.0
        %2369 = vmatpush1.msra.mxu0 %v2320
        %2370 = vmatprep.subr.mxu0 0.0
        %2371 = vmatpush1.msra.mxu0 %v2321
        %2372 = vmatprep.subr.mxu0 0.0
        %2373 = vmatpush1.msra.mxu0 %v2322
        %2374 = vmatprep.subr.mxu0 0.0
        %2375 = vmatpush1.msra.mxu0 0.0
        %2376 = vmatprep.subr.mxu0 0.0
        %2377 = vmatpush1.msra.mxu0 0.0
        %2378 = vmatprep.subr.mxu0 0.0
        %2379 = vmatpush1.msra.mxu0 0.0
        %2380 = vmatprep.subr.mxu0 0.0
        %2381 = vmatpush1.msra.mxu0 0.0
        %2382 = vmatprep.subr.mxu0 0.0
        %2383 = vmatpush1.msra.mxu0 0.0
        %2384 = vmatprep.subr.mxu0 0.0
        %2385 = vmatpush1.msra.mxu0 0.0
        %2386 = vmatprep.subr.mxu0 0.0
        %2387 = vmatpush1.msra.mxu0 0.0
        %2388 = vmatprep.subr.mxu0 0.0
        %2389 = vmatpush1.msra.mxu0 0.0
        %2390 = vmatprep.subr.mxu0 0.0
        %2391 = vmatpush1.msra.mxu0 0.0
        %2392 = vmatprep.subr.mxu0 0.0
        %2393 = vmatpush1.msra.mxu0 0.0
        %2394 = vmatprep.subr.mxu0 0.0
        %2395 = vmatpush1.msra.mxu0 0.0
        %2396 = vmatprep.subr.mxu0 0.0
        %2397 = vmatpush1.msra.mxu0 0.0
        %2398 = vmatprep.subr.mxu0 0.0
        %2399 = vmatpush1.msra.mxu0 0.0
        %2400 = vmatprep.subr.mxu0 0.0
        %2401 = vmatpush1.msra.mxu0 0.0
        %2402 = vmatprep.subr.mxu0 0.0
        %2403 = vmatpush1.msra.mxu0 0.0
        %2404 = vmatprep.subr.mxu0 0.0
        %2405 = vmatpush1.msra.mxu0 0.0
        %2406 = vmatprep.subr.mxu0 0.0
        %2407 = vmatpush1.msra.mxu0 0.0
        %2408 = vmatprep.subr.mxu0 0.0
        %2409 = vmatpush1.msra.mxu0 0.0
        %2410 = vmatprep.subr.mxu0 0.0
        %2411 = vmatpush1.msra.mxu0 0.0
        %2412 = vmatprep.subr.mxu0 0.0
        %2413 = vmatpush1.msra.mxu0 0.0
        %2414 = vmatprep.subr.mxu0 0.0
        %2415 = vmatpush1.msra.mxu0 0.0
        %2416 = vmatprep.subr.mxu0 0.0
        %2417 = vmatpush1.msra.mxu0 0.0
        %2418 = vmatprep.subr.mxu0 0.0
        %2419 = vmatpush1.msra.mxu0 0.0
        %2420 = vmatprep.subr.mxu0 0.0
        %2421 = vmatpush1.msra.mxu0 0.0
        %2422 = vmatprep.subr.mxu0 0.0
        %2423 = vmatpush1.msra.mxu0 0.0
        %2424 = vmatprep.subr.mxu0 0.0
        %2425 = vmatpush1.msra.mxu0 0.0
        %2426 = vmatprep.subr.mxu0 0.0
        %2427 = vmatpush1.msra.mxu0 0.0
        %2428 = vmatprep.subr.mxu0 0.0
        %2429 = vmatpush1.msra.mxu0 0.0
        %2430 = vmatprep.mubr.f32.mxu0 0.0
        %2431 = vmatmul.mubr.f32.gmra.mrb[0].mxu0 %v2364
        %v2432 = vpop.f32.mrb[0].mxu0
        %v2433 = vadd.f32 %v2346, %v2432
        %v2434 = vpop.f32.mrb[0].mxu0
        %2435 = vdwg.mxu0
        %2436 = vmatprep.subr.mxu0 0.0
        %2437 = vmatpush1.msra.mxu0 %v2323
        %2438 = vmatprep.subr.mxu0 0.0
        %2439 = vmatpush1.msra.mxu0 %v2324
        %2440 = vmatprep.subr.mxu0 0.0
        %2441 = vmatpush1.msra.mxu0 %v2325
        %2442 = vmatprep.subr.mxu0 0.0
        %2443 = vmatpush1.msra.mxu0 %v2326
        %2444 = vmatprep.subr.mxu0 0.0
        %2445 = vmatpush1.msra.mxu0 0.0
        %2446 = vmatprep.subr.mxu0 0.0
        %2447 = vmatpush1.msra.mxu0 0.0
        %2448 = vmatprep.subr.mxu0 0.0
        %2449 = vmatpush1.msra.mxu0 0.0
        %2450 = vmatprep.subr.mxu0 0.0
        %2451 = vmatpush1.msra.mxu0 0.0
        %2452 = vmatprep.subr.mxu0 0.0
        %2453 = vmatpush1.msra.mxu0 0.0
        %2454 = vmatprep.subr.mxu0 0.0
        %2455 = vmatpush1.msra.mxu0 0.0
        %2456 = vmatprep.subr.mxu0 0.0
        %2457 = vmatpush1.msra.mxu0 0.0
        %2458 = vmatprep.subr.mxu0 0.0
        %2459 = vmatpush1.msra.mxu0 0.0
        %2460 = vmatprep.subr.mxu0 0.0
        %2461 = vmatpush1.msra.mxu0 0.0
        %2462 = vmatprep.subr.mxu0 0.0
        %2463 = vmatpush1.msra.mxu0 0.0
        %2464 = vmatprep.subr.mxu0 0.0
        %2465 = vmatpush1.msra.mxu0 0.0
        %2466 = vmatprep.subr.mxu0 0.0
        %2467 = vmatpush1.msra.mxu0 0.0
        %2468 = vmatprep.subr.mxu0 0.0
        %2469 = vmatpush1.msra.mxu0 0.0
        %2470 = vmatprep.subr.mxu0 0.0
        %2471 = vmatpush1.msra.mxu0 0.0
        %2472 = vmatprep.subr.mxu0 0.0
        %2473 = vmatpush1.msra.mxu0 0.0
        %2474 = vmatprep.subr.mxu0 0.0
        %2475 = vmatpush1.msra.mxu0 0.0
        %2476 = vmatprep.subr.mxu0 0.0
        %2477 = vmatpush1.msra.mxu0 0.0
        %2478 = vmatprep.subr.mxu0 0.0
        %2479 = vmatpush1.msra.mxu0 0.0
        %2480 = vmatprep.subr.mxu0 0.0
        %2481 = vmatpush1.msra.mxu0 0.0
        %2482 = vmatprep.subr.mxu0 0.0
        %2483 = vmatpush1.msra.mxu0 0.0
        %2484 = vmatprep.subr.mxu0 0.0
        %2485 = vmatpush1.msra.mxu0 0.0
        %2486 = vmatprep.subr.mxu0 0.0
        %2487 = vmatpush1.msra.mxu0 0.0
        %2488 = vmatprep.subr.mxu0 0.0
        %2489 = vmatpush1.msra.mxu0 0.0
        %2490 = vmatprep.subr.mxu0 0.0
        %2491 = vmatpush1.msra.mxu0 0.0
        %2492 = vmatprep.subr.mxu0 0.0
        %2493 = vmatpush1.msra.mxu0 0.0
        %2494 = vmatprep.subr.mxu0 0.0
        %2495 = vmatpush1.msra.mxu0 0.0
        %2496 = vmatprep.subr.mxu0 0.0
        %2497 = vmatpush1.msra.mxu0 0.0
        %2498 = vmatprep.subr.mxu0 0.0
        %2499 = vmatpush1.msra.mxu0 0.0
        %2500 = vmatprep.mubr.f32.mxu0 0.0
        %2501 = vmatmul.mubr.f32.gmra.mrb[0].mxu0 %v2364
        %v2502 = vpop.f32.mrb[0].mxu0
        %v2503 = vadd.f32 %v2350, %v2502
        %v2504 = vpop.f32.mrb[0].mxu0
        %2505 = vdwg.mxu0
        %2506 = vmatprep.subr.mxu0 0.0
        %2507 = vmatpush1.msra.mxu0 %v2327
        %2508 = vmatprep.subr.mxu0 0.0
        %2509 = vmatpush1.msra.mxu0 %v2328
        %2510 = vmatprep.subr.mxu0 0.0
        %2511 = vmatpush1.msra.mxu0 %v2329
        %2512 = vmatprep.subr.mxu0 0.0
        %2513 = vmatpush1.msra.mxu0 %v2330
        %2514 = vmatprep.subr.mxu0 0.0
        %2515 = vmatpush1.msra.mxu0 0.0
        %2516 = vmatprep.subr.mxu0 0.0
        %2517 = vmatpush1.msra.mxu0 0.0
        %2518 = vmatprep.subr.mxu0 0.0
        %2519 = vmatpush1.msra.mxu0 0.0
        %2520 = vmatprep.subr.mxu0 0.0
        %2521 = vmatpush1.msra.mxu0 0.0
        %2522 = vmatprep.subr.mxu0 0.0
        %2523 = vmatpush1.msra.mxu0 0.0
        %2524 = vmatprep.subr.mxu0 0.0
        %2525 = vmatpush1.msra.mxu0 0.0
        %2526 = vmatprep.subr.mxu0 0.0
        %2527 = vmatpush1.msra.mxu0 0.0
        %2528 = vmatprep.subr.mxu0 0.0
        %2529 = vmatpush1.msra.mxu0 0.0
        %2530 = vmatprep.subr.mxu0 0.0
        %2531 = vmatpush1.msra.mxu0 0.0
        %2532 = vmatprep.subr.mxu0 0.0
        %2533 = vmatpush1.msra.mxu0 0.0
        %2534 = vmatprep.subr.mxu0 0.0
        %2535 = vmatpush1.msra.mxu0 0.0
        %2536 = vmatprep.subr.mxu0 0.0
        %2537 = vmatpush1.msra.mxu0 0.0
        %2538 = vmatprep.subr.mxu0 0.0
        %2539 = vmatpush1.msra.mxu0 0.0
        %2540 = vmatprep.subr.mxu0 0.0
        %2541 = vmatpush1.msra.mxu0 0.0
        %2542 = vmatprep.subr.mxu0 0.0
        %2543 = vmatpush1.msra.mxu0 0.0
        %2544 = vmatprep.subr.mxu0 0.0
        %2545 = vmatpush1.msra.mxu0 0.0
        %2546 = vmatprep.subr.mxu0 0.0
        %2547 = vmatpush1.msra.mxu0 0.0
        %2548 = vmatprep.subr.mxu0 0.0
        %2549 = vmatpush1.msra.mxu0 0.0
        %2550 = vmatprep.subr.mxu0 0.0
        %2551 = vmatpush1.msra.mxu0 0.0
        %2552 = vmatprep.subr.mxu0 0.0
        %2553 = vmatpush1.msra.mxu0 0.0
        %2554 = vmatprep.subr.mxu0 0.0
        %2555 = vmatpush1.msra.mxu0 0.0
        %2556 = vmatprep.subr.mxu0 0.0
        %2557 = vmatpush1.msra.mxu0 0.0
        %2558 = vmatprep.subr.mxu0 0.0
        %2559 = vmatpush1.msra.mxu0 0.0
        %2560 = vmatprep.subr.mxu0 0.0
        %2561 = vmatpush1.msra.mxu0 0.0
        %2562 = vmatprep.subr.mxu0 0.0
        %2563 = vmatpush1.msra.mxu0 0.0
        %2564 = vmatprep.subr.mxu0 0.0
        %2565 = vmatpush1.msra.mxu0 0.0
        %2566 = vmatprep.subr.mxu0 0.0
        %2567 = vmatpush1.msra.mxu0 0.0
        %2568 = vmatprep.subr.mxu0 0.0
        %2569 = vmatpush1.msra.mxu0 0.0
        %2570 = vmatprep.mubr.f32.mxu0 0.0
        %2571 = vmatmul.mubr.f32.gmra.mrb[0].mxu0 %v2364
        %v2572 = vpop.f32.mrb[0].mxu0
        %v2573 = vadd.f32 %v2354, %v2572
        %v2574 = vpop.f32.mrb[0].mxu0
        %2575 = vdwg.mxu0
        %2576 = vmatprep.subr.mxu0 0.0
        %2577 = vmatpush1.msra.mxu0 %v2331
        %2578 = vmatprep.subr.mxu0 0.0
        %2579 = vmatpush1.msra.mxu0 %v2332
        %2580 = vmatprep.subr.mxu0 0.0
        %2581 = vmatpush1.msra.mxu0 %v2333
        %2582 = vmatprep.subr.mxu0 0.0
        %2583 = vmatpush1.msra.mxu0 %v2334
        %2584 = vmatprep.subr.mxu0 0.0
        %2585 = vmatpush1.msra.mxu0 0.0
        %2586 = vmatprep.subr.mxu0 0.0
        %2587 = vmatpush1.msra.mxu0 0.0
        %2588 = vmatprep.subr.mxu0 0.0
        %2589 = vmatpush1.msra.mxu0 0.0
        %2590 = vmatprep.subr.mxu0 0.0
        %2591 = vmatpush1.msra.mxu0 0.0
        %2592 = vmatprep.subr.mxu0 0.0
        %2593 = vmatpush1.msra.mxu0 0.0
        %2594 = vmatprep.subr.mxu0 0.0
        %2595 = vmatpush1.msra.mxu0 0.0
        %2596 = vmatprep.subr.mxu0 0.0
        %2597 = vmatpush1.msra.mxu0 0.0
        %2598 = vmatprep.subr.mxu0 0.0
        %2599 = vmatpush1.msra.mxu0 0.0
        %2600 = vmatprep.subr.mxu0 0.0
        %2601 = vmatpush1.msra.mxu0 0.0
        %2602 = vmatprep.subr.mxu0 0.0
        %2603 = vmatpush1.msra.mxu0 0.0
        %2604 = vmatprep.subr.mxu0 0.0
        %2605 = vmatpush1.msra.mxu0 0.0
        %2606 = vmatprep.subr.mxu0 0.0
        %2607 = vmatpush1.msra.mxu0 0.0
        %2608 = vmatprep.subr.mxu0 0.0
        %2609 = vmatpush1.msra.mxu0 0.0
        %2610 = vmatprep.subr.mxu0 0.0
        %2611 = vmatpush1.msra.mxu0 0.0
        %2612 = vmatprep.subr.mxu0 0.0
        %2613 = vmatpush1.msra.mxu0 0.0
        %2614 = vmatprep.subr.mxu0 0.0
        %2615 = vmatpush1.msra.mxu0 0.0
        %2616 = vmatprep.subr.mxu0 0.0
        %2617 = vmatpush1.msra.mxu0 0.0
        %2618 = vmatprep.subr.mxu0 0.0
        %2619 = vmatpush1.msra.mxu0 0.0
        %2620 = vmatprep.subr.mxu0 0.0
        %2621 = vmatpush1.msra.mxu0 0.0
        %2622 = vmatprep.subr.mxu0 0.0
        %2623 = vmatpush1.msra.mxu0 0.0
        %2624 = vmatprep.subr.mxu0 0.0
        %2625 = vmatpush1.msra.mxu0 0.0
        %2626 = vmatprep.subr.mxu0 0.0
        %2627 = vmatpush1.msra.mxu0 0.0
        %2628 = vmatprep.subr.mxu0 0.0
        %2629 = vmatpush1.msra.mxu0 0.0
        %2630 = vmatprep.subr.mxu0 0.0
        %2631 = vmatpush1.msra.mxu0 0.0
        %2632 = vmatprep.subr.mxu0 0.0
        %2633 = vmatpush1.msra.mxu0 0.0
        %2634 = vmatprep.subr.mxu0 0.0
        %2635 = vmatpush1.msra.mxu0 0.0
        %2636 = vmatprep.subr.mxu0 0.0
        %2637 = vmatpush1.msra.mxu0 0.0
        %2638 = vmatprep.subr.mxu0 0.0
        %2639 = vmatpush1.msra.mxu0 0.0
        %2640 = vmatprep.mubr.f32.mxu0 0.0
        %2641 = vmatmul.mubr.f32.gmra.mrb[0].mxu0 %v2364
        %v2642 = vpop.f32.mrb[0].mxu0
        %v2643 = vadd.f32 %v2358, %v2642
        %v2644 = vpop.f32.mrb[0].mxu0
        %2645 = vdwg.mxu0
        %v2646 = vld [vmem:[%s14] sm:$0xff]
        %v2647 = vld [vmem:[%s14 + $0x8] sm:$0xff]
        %v2648 = vld [vmem:[%s14 + $0x10] sm:$0xff]
        %v2649 = vld [vmem:[%s14 + $0x18] sm:$0xff]
        %v2650 = vld [vmem:[%s14 + $0x20] sm:$0xff]
        %v2651 = vld [vmem:[%s14 + $0x28] sm:$0xff]
        %v2652 = vld [vmem:[%s14 + $0x30] sm:$0xff]
        %v2653 = vld [vmem:[%s14 + $0x38] sm:$0xff]
        %v2654 = vld [vmem:[%s14 + $0x40] sm:$0xff]
        %v2655 = vld [vmem:[%s14 + $0x48] sm:$0xff]
        %v2656 = vld [vmem:[%s14 + $0x50] sm:$0xff]
        %v2657 = vld [vmem:[%s14 + $0x58] sm:$0xff]
        %v2658 = vld [vmem:[%s14 + $0x60] sm:$0xff]
        %v2659 = vld [vmem:[%s14 + $0x68] sm:$0xff]
        %v2660 = vld [vmem:[%s14 + $0x70] sm:$0xff]
        %v2661 = vld [vmem:[%s14 + $0x78] sm:$0xff]
        %v2662 = vld [vmem:[%s15] sm:$0x1]
        %v2663 = vld [vmem:[%s15 + $0x1] sm:$0x1]
        %v2664 = vld [vmem:[%s15 + $0x2] sm:$0x1]
        %v2665 = vld [vmem:[%s15 + $0x3] sm:$0x1]
        %v2670 = vlaneseq
        %v2671 = vshrl.u32 %v2670, 7
        %v2672 = vsub.s32 0, %v2671
        %v2673 = vrot.slane %v2662, %v2672
        %v2674 = vlaneseq
        %v2675 = vshrl.u32 %v2674, 7
        %v2676 = vsub.s32 0, %v2675
        %v2677 = vrot.slane %v2663, %v2676
        %v2678 = vlaneseq
        %v2679 = vshrl.u32 %v2678, 7
        %v2680 = vsub.s32 0, %v2679
        %v2681 = vrot.slane %v2664, %v2680
        %v2682 = vlaneseq
        %v2683 = vshrl.u32 %v2682, 7
        %v2684 = vsub.s32 0, %v2683
        %v2685 = vrot.slane %v2665, %v2684
        %v2691 = vsel %vm1027, %v2318, 0
        %2693 = vmatprep.subr.mxu0 0.0
        %2694 = vmatpush1.msra.mxu0 %v2646
        %2695 = vmatprep.subr.mxu0 0.0
        %2696 = vmatpush1.msra.mxu0 %v2647
        %2697 = vmatprep.subr.mxu0 0.0
        %2698 = vmatpush1.msra.mxu0 %v2648
        %2699 = vmatprep.subr.mxu0 0.0
        %2700 = vmatpush1.msra.mxu0 %v2649
        %2701 = vmatprep.subr.mxu0 0.0
        %2702 = vmatpush1.msra.mxu0 0.0
        %2703 = vmatprep.subr.mxu0 0.0
        %2704 = vmatpush1.msra.mxu0 0.0
        %2705 = vmatprep.subr.mxu0 0.0
        %2706 = vmatpush1.msra.mxu0 0.0
        %2707 = vmatprep.subr.mxu0 0.0
        %2708 = vmatpush1.msra.mxu0 0.0
        %2709 = vmatprep.subr.mxu0 0.0
        %2710 = vmatpush1.msra.mxu0 0.0
        %2711 = vmatprep.subr.mxu0 0.0
        %2712 = vmatpush1.msra.mxu0 0.0
        %2713 = vmatprep.subr.mxu0 0.0
        %2714 = vmatpush1.msra.mxu0 0.0
        %2715 = vmatprep.subr.mxu0 0.0
        %2716 = vmatpush1.msra.mxu0 0.0
        %2717 = vmatprep.subr.mxu0 0.0
        %2718 = vmatpush1.msra.mxu0 0.0
        %2719 = vmatprep.subr.mxu0 0.0
        %2720 = vmatpush1.msra.mxu0 0.0
        %2721 = vmatprep.subr.mxu0 0.0
        %2722 = vmatpush1.msra.mxu0 0.0
        %2723 = vmatprep.subr.mxu0 0.0
        %2724 = vmatpush1.msra.mxu0 0.0
        %2725 = vmatprep.subr.mxu0 0.0
        %2726 = vmatpush1.msra.mxu0 0.0
        %2727 = vmatprep.subr.mxu0 0.0
        %2728 = vmatpush1.msra.mxu0 0.0
        %2729 = vmatprep.subr.mxu0 0.0
        %2730 = vmatpush1.msra.mxu0 0.0
        %2731 = vmatprep.subr.mxu0 0.0
        %2732 = vmatpush1.msra.mxu0 0.0
        %2733 = vmatprep.subr.mxu0 0.0
        %2734 = vmatpush1.msra.mxu0 0.0
        %2735 = vmatprep.subr.mxu0 0.0
        %2736 = vmatpush1.msra.mxu0 0.0
        %2737 = vmatprep.subr.mxu0 0.0
        %2738 = vmatpush1.msra.mxu0 0.0
        %2739 = vmatprep.subr.mxu0 0.0
        %2740 = vmatpush1.msra.mxu0 0.0
        %2741 = vmatprep.subr.mxu0 0.0
        %2742 = vmatpush1.msra.mxu0 0.0
        %2743 = vmatprep.subr.mxu0 0.0
        %2744 = vmatpush1.msra.mxu0 0.0
        %2745 = vmatprep.subr.mxu0 0.0
        %2746 = vmatpush1.msra.mxu0 0.0
        %2747 = vmatprep.subr.mxu0 0.0
        %2748 = vmatpush1.msra.mxu0 0.0
        %2749 = vmatprep.subr.mxu0 0.0
        %2750 = vmatpush1.msra.mxu0 0.0
        %2751 = vmatprep.subr.mxu0 0.0
        %2752 = vmatpush1.msra.mxu0 0.0
        %2753 = vmatprep.subr.mxu0 0.0
        %2754 = vmatpush1.msra.mxu0 0.0
        %2755 = vmatprep.subr.mxu0 0.0
        %2756 = vmatpush1.msra.mxu0 0.0
        %2757 = vmatprep.mubr.f32.mxu0 0.0
        %2758 = vmatmul.mubr.f32.gmra.mrb[0].mxu0 %v2691
        %v2759 = vpop.f32.mrb[0].mxu0
        %v2760 = vadd.f32 %v2673, %v2759
        %v2761 = vpop.f32.mrb[0].mxu0
        %2762 = vdwg.mxu0
        %2763 = vmatprep.subr.mxu0 0.0
        %2764 = vmatpush1.msra.mxu0 %v2650
        %2765 = vmatprep.subr.mxu0 0.0
        %2766 = vmatpush1.msra.mxu0 %v2651
        %2767 = vmatprep.subr.mxu0 0.0
        %2768 = vmatpush1.msra.mxu0 %v2652
        %2769 = vmatprep.subr.mxu0 0.0
        %2770 = vmatpush1.msra.mxu0 %v2653
        %2771 = vmatprep.subr.mxu0 0.0
        %2772 = vmatpush1.msra.mxu0 0.0
        %2773 = vmatprep.subr.mxu0 0.0
        %2774 = vmatpush1.msra.mxu0 0.0
        %2775 = vmatprep.subr.mxu0 0.0
        %2776 = vmatpush1.msra.mxu0 0.0
        %2777 = vmatprep.subr.mxu0 0.0
        %2778 = vmatpush1.msra.mxu0 0.0
        %2779 = vmatprep.subr.mxu0 0.0
        %2780 = vmatpush1.msra.mxu0 0.0
        %2781 = vmatprep.subr.mxu0 0.0
        %2782 = vmatpush1.msra.mxu0 0.0
        %2783 = vmatprep.subr.mxu0 0.0
        %2784 = vmatpush1.msra.mxu0 0.0
        %2785 = vmatprep.subr.mxu0 0.0
        %2786 = vmatpush1.msra.mxu0 0.0
        %2787 = vmatprep.subr.mxu0 0.0
        %2788 = vmatpush1.msra.mxu0 0.0
        %2789 = vmatprep.subr.mxu0 0.0
        %2790 = vmatpush1.msra.mxu0 0.0
        %2791 = vmatprep.subr.mxu0 0.0
        %2792 = vmatpush1.msra.mxu0 0.0
        %2793 = vmatprep.subr.mxu0 0.0
        %2794 = vmatpush1.msra.mxu0 0.0
        %2795 = vmatprep.subr.mxu0 0.0
        %2796 = vmatpush1.msra.mxu0 0.0
        %2797 = vmatprep.subr.mxu0 0.0
        %2798 = vmatpush1.msra.mxu0 0.0
        %2799 = vmatprep.subr.mxu0 0.0
        %2800 = vmatpush1.msra.mxu0 0.0
        %2801 = vmatprep.subr.mxu0 0.0
        %2802 = vmatpush1.msra.mxu0 0.0
        %2803 = vmatprep.subr.mxu0 0.0
        %2804 = vmatpush1.msra.mxu0 0.0
        %2805 = vmatprep.subr.mxu0 0.0
        %2806 = vmatpush1.msra.mxu0 0.0
        %2807 = vmatprep.subr.mxu0 0.0
        %2808 = vmatpush1.msra.mxu0 0.0
        %2809 = vmatprep.subr.mxu0 0.0
        %2810 = vmatpush1.msra.mxu0 0.0
        %2811 = vmatprep.subr.mxu0 0.0
        %2812 = vmatpush1.msra.mxu0 0.0
        %2813 = vmatprep.subr.mxu0 0.0
        %2814 = vmatpush1.msra.mxu0 0.0
        %2815 = vmatprep.subr.mxu0 0.0
        %2816 = vmatpush1.msra.mxu0 0.0
        %2817 = vmatprep.subr.mxu0 0.0
        %2818 = vmatpush1.msra.mxu0 0.0
        %2819 = vmatprep.subr.mxu0 0.0
        %2820 = vmatpush1.msra.mxu0 0.0
        %2821 = vmatprep.subr.mxu0 0.0
        %2822 = vmatpush1.msra.mxu0 0.0
        %2823 = vmatprep.subr.mxu0 0.0
        %2824 = vmatpush1.msra.mxu0 0.0
        %2825 = vmatprep.subr.mxu0 0.0
        %2826 = vmatpush1.msra.mxu0 0.0
        %2827 = vmatprep.mubr.f32.mxu0 0.0
        %2828 = vmatmul.mubr.f32.gmra.mrb[0].mxu0 %v2691
        %v2829 = vpop.f32.mrb[0].mxu0
        %v2830 = vadd.f32 %v2677, %v2829
        %v2831 = vpop.f32.mrb[0].mxu0
        %2832 = vdwg.mxu0
        %2833 = vmatprep.subr.mxu0 0.0
        %2834 = vmatpush1.msra.mxu0 %v2654
        %2835 = vmatprep.subr.mxu0 0.0
        %2836 = vmatpush1.msra.mxu0 %v2655
        %2837 = vmatprep.subr.mxu0 0.0
        %2838 = vmatpush1.msra.mxu0 %v2656
        %2839 = vmatprep.subr.mxu0 0.0
        %2840 = vmatpush1.msra.mxu0 %v2657
        %2841 = vmatprep.subr.mxu0 0.0
        %2842 = vmatpush1.msra.mxu0 0.0
        %2843 = vmatprep.subr.mxu0 0.0
        %2844 = vmatpush1.msra.mxu0 0.0
        %2845 = vmatprep.subr.mxu0 0.0
        %2846 = vmatpush1.msra.mxu0 0.0
        %2847 = vmatprep.subr.mxu0 0.0
        %2848 = vmatpush1.msra.mxu0 0.0
        %2849 = vmatprep.subr.mxu0 0.0
        %2850 = vmatpush1.msra.mxu0 0.0
        %2851 = vmatprep.subr.mxu0 0.0
        %2852 = vmatpush1.msra.mxu0 0.0
        %2853 = vmatprep.subr.mxu0 0.0
        %2854 = vmatpush1.msra.mxu0 0.0
        %2855 = vmatprep.subr.mxu0 0.0
        %2856 = vmatpush1.msra.mxu0 0.0
        %2857 = vmatprep.subr.mxu0 0.0
        %2858 = vmatpush1.msra.mxu0 0.0
        %2859 = vmatprep.subr.mxu0 0.0
        %2860 = vmatpush1.msra.mxu0 0.0
        %2861 = vmatprep.subr.mxu0 0.0
        %2862 = vmatpush1.msra.mxu0 0.0
        %2863 = vmatprep.subr.mxu0 0.0
        %2864 = vmatpush1.msra.mxu0 0.0
        %2865 = vmatprep.subr.mxu0 0.0
        %2866 = vmatpush1.msra.mxu0 0.0
        %2867 = vmatprep.subr.mxu0 0.0
        %2868 = vmatpush1.msra.mxu0 0.0
        %2869 = vmatprep.subr.mxu0 0.0
        %2870 = vmatpush1.msra.mxu0 0.0
        %2871 = vmatprep.subr.mxu0 0.0
        %2872 = vmatpush1.msra.mxu0 0.0
        %2873 = vmatprep.subr.mxu0 0.0
        %2874 = vmatpush1.msra.mxu0 0.0
        %2875 = vmatprep.subr.mxu0 0.0
        %2876 = vmatpush1.msra.mxu0 0.0
        %2877 = vmatprep.subr.mxu0 0.0
        %2878 = vmatpush1.msra.mxu0 0.0
        %2879 = vmatprep.subr.mxu0 0.0
        %2880 = vmatpush1.msra.mxu0 0.0
        %2881 = vmatprep.subr.mxu0 0.0
        %2882 = vmatpush1.msra.mxu0 0.0
        %2883 = vmatprep.subr.mxu0 0.0
        %2884 = vmatpush1.msra.mxu0 0.0
        %2885 = vmatprep.subr.mxu0 0.0
        %2886 = vmatpush1.msra.mxu0 0.0
        %2887 = vmatprep.subr.mxu0 0.0
        %2888 = vmatpush1.msra.mxu0 0.0
        %2889 = vmatprep.subr.mxu0 0.0
        %2890 = vmatpush1.msra.mxu0 0.0
        %2891 = vmatprep.subr.mxu0 0.0
        %2892 = vmatpush1.msra.mxu0 0.0
        %2893 = vmatprep.subr.mxu0 0.0
        %2894 = vmatpush1.msra.mxu0 0.0
        %2895 = vmatprep.subr.mxu0 0.0
        %2896 = vmatpush1.msra.mxu0 0.0
        %2897 = vmatprep.mubr.f32.mxu0 0.0
        %2898 = vmatmul.mubr.f32.gmra.mrb[0].mxu0 %v2691
        %v2899 = vpop.f32.mrb[0].mxu0
        %v2900 = vadd.f32 %v2681, %v2899
        %v2901 = vpop.f32.mrb[0].mxu0
        %2902 = vdwg.mxu0
        %2903 = vmatprep.subr.mxu0 0.0
        %2904 = vmatpush1.msra.mxu0 %v2658
        %2905 = vmatprep.subr.mxu0 0.0
        %2906 = vmatpush1.msra.mxu0 %v2659
        %2907 = vmatprep.subr.mxu0 0.0
        %2908 = vmatpush1.msra.mxu0 %v2660
        %2909 = vmatprep.subr.mxu0 0.0
        %2910 = vmatpush1.msra.mxu0 %v2661
        %2911 = vmatprep.subr.mxu0 0.0
        %2912 = vmatpush1.msra.mxu0 0.0
        %2913 = vmatprep.subr.mxu0 0.0
        %2914 = vmatpush1.msra.mxu0 0.0
        %2915 = vmatprep.subr.mxu0 0.0
        %2916 = vmatpush1.msra.mxu0 0.0
        %2917 = vmatprep.subr.mxu0 0.0
        %2918 = vmatpush1.msra.mxu0 0.0
        %2919 = vmatprep.subr.mxu0 0.0
        %2920 = vmatpush1.msra.mxu0 0.0
        %2921 = vmatprep.subr.mxu0 0.0
        %2922 = vmatpush1.msra.mxu0 0.0
        %2923 = vmatprep.subr.mxu0 0.0
        %2924 = vmatpush1.msra.mxu0 0.0
        %2925 = vmatprep.subr.mxu0 0.0
        %2926 = vmatpush1.msra.mxu0 0.0
        %2927 = vmatprep.subr.mxu0 0.0
        %2928 = vmatpush1.msra.mxu0 0.0
        %2929 = vmatprep.subr.mxu0 0.0
        %2930 = vmatpush1.msra.mxu0 0.0
        %2931 = vmatprep.subr.mxu0 0.0
        %2932 = vmatpush1.msra.mxu0 0.0
        %2933 = vmatprep.subr.mxu0 0.0
        %2934 = vmatpush1.msra.mxu0 0.0
        %2935 = vmatprep.subr.mxu0 0.0
        %2936 = vmatpush1.msra.mxu0 0.0
        %2937 = vmatprep.subr.mxu0 0.0
        %2938 = vmatpush1.msra.mxu0 0.0
        %2939 = vmatprep.subr.mxu0 0.0
        %2940 = vmatpush1.msra.mxu0 0.0
        %2941 = vmatprep.subr.mxu0 0.0
        %2942 = vmatpush1.msra.mxu0 0.0
        %2943 = vmatprep.subr.mxu0 0.0
        %2944 = vmatpush1.msra.mxu0 0.0
        %2945 = vmatprep.subr.mxu0 0.0
        %2946 = vmatpush1.msra.mxu0 0.0
        %2947 = vmatprep.subr.mxu0 0.0
        %2948 = vmatpush1.msra.mxu0 0.0
        %2949 = vmatprep.subr.mxu0 0.0
        %2950 = vmatpush1.msra.mxu0 0.0
        %2951 = vmatprep.subr.mxu0 0.0
        %2952 = vmatpush1.msra.mxu0 0.0
        %2953 = vmatprep.subr.mxu0 0.0
        %2954 = vmatpush1.msra.mxu0 0.0
        %2955 = vmatprep.subr.mxu0 0.0
        %2956 = vmatpush1.msra.mxu0 0.0
        %2957 = vmatprep.subr.mxu0 0.0
        %2958 = vmatpush1.msra.mxu0 0.0
        %2959 = vmatprep.subr.mxu0 0.0
        %2960 = vmatpush1.msra.mxu0 0.0
        %2961 = vmatprep.subr.mxu0 0.0
        %2962 = vmatpush1.msra.mxu0 0.0
        %2963 = vmatprep.subr.mxu0 0.0
        %2964 = vmatpush1.msra.mxu0 0.0
        %2965 = vmatprep.subr.mxu0 0.0
        %2966 = vmatpush1.msra.mxu0 0.0
        %2967 = vmatprep.mubr.f32.mxu0 0.0
        %2968 = vmatmul.mubr.f32.gmra.mrb[0].mxu0 %v2691
        %v2969 = vpop.f32.mrb[0].mxu0
        %v2970 = vadd.f32 %v2685, %v2969
        %v2971 = vpop.f32.mrb[0].mxu0
        %2972 = vdwg.mxu0
        %v2973 = vld [vmem:[%s16] sm:$0xff]
        %v2974 = vld [vmem:[%s16 + $0x8] sm:$0xff]
        %v2975 = vld [vmem:[%s16 + $0x10] sm:$0xff]
        %v2976 = vld [vmem:[%s16 + $0x18] sm:$0xff]
        %v2977 = vld [vmem:[%s17] sm:$0x1]
        %v2979 = vsel %vm1319, %v2433, 0
        %v2982 = vsel %vm1319, %v2760, 0
        %2984 = vmatprep.subr.mxu0 0.0
        %2985 = vmatpush1.xpose.msra.mxu0 %v2982
        %2986 = vmatprep.subr.mxu0 0.0
        %2987 = vmatpush1.xpose.msra.mxu0 0.0
        %2988 = vmatprep.subr.mxu0 0.0
        %2989 = vmatpush1.xpose.msra.mxu0 0.0
        %2990 = vmatprep.subr.mxu0 0.0
        %2991 = vmatpush1.xpose.msra.mxu0 0.0
        %2992 = vmatprep.subr.mxu0 0.0
        %2993 = vmatpush1.xpose.msra.mxu0 0.0
        %2994 = vmatprep.subr.mxu0 0.0
        %2995 = vmatpush1.xpose.msra.mxu0 0.0
        %2996 = vmatprep.subr.mxu0 0.0
        %2997 = vmatpush1.xpose.msra.mxu0 0.0
        %2998 = vmatprep.subr.mxu0 0.0
        %2999 = vmatpush1.xpose.msra.mxu0 0.0
        %3000 = vmatprep.subr.mxu0 0.0
        %3001 = vmatpush1.xpose.msra.mxu0 0.0
        %3002 = vmatprep.subr.mxu0 0.0
        %3003 = vmatpush1.xpose.msra.mxu0 0.0
        %3004 = vmatprep.subr.mxu0 0.0
        %3005 = vmatpush1.xpose.msra.mxu0 0.0
        %3006 = vmatprep.subr.mxu0 0.0
        %3007 = vmatpush1.xpose.msra.mxu0 0.0
        %3008 = vmatprep.subr.mxu0 0.0
        %3009 = vmatpush1.xpose.msra.mxu0 0.0
        %3010 = vmatprep.subr.mxu0 0.0
        %3011 = vmatpush1.xpose.msra.mxu0 0.0
        %3012 = vmatprep.subr.mxu0 0.0
        %3013 = vmatpush1.xpose.msra.mxu0 0.0
        %3014 = vmatprep.subr.mxu0 0.0
        %3015 = vmatpush1.xpose.msra.mxu0 0.0
        %3016 = vmatprep.subr.mxu0 0.0
        %3017 = vmatpush1.xpose.msra.mxu0 0.0
        %3018 = vmatprep.subr.mxu0 0.0
        %3019 = vmatpush1.xpose.msra.mxu0 0.0
        %3020 = vmatprep.subr.mxu0 0.0
        %3021 = vmatpush1.xpose.msra.mxu0 0.0
        %3022 = vmatprep.subr.mxu0 0.0
        %3023 = vmatpush1.xpose.msra.mxu0 0.0
        %3024 = vmatprep.subr.mxu0 0.0
        %3025 = vmatpush1.xpose.msra.mxu0 0.0
        %3026 = vmatprep.subr.mxu0 0.0
        %3027 = vmatpush1.xpose.msra.mxu0 0.0
        %3028 = vmatprep.subr.mxu0 0.0
        %3029 = vmatpush1.xpose.msra.mxu0 0.0
        %3030 = vmatprep.subr.mxu0 0.0
        %3031 = vmatpush1.xpose.msra.mxu0 0.0
        %3032 = vmatprep.subr.mxu0 0.0
        %3033 = vmatpush1.xpose.msra.mxu0 0.0
        %3034 = vmatprep.subr.mxu0 0.0
        %3035 = vmatpush1.xpose.msra.mxu0 0.0
        %3036 = vmatprep.subr.mxu0 0.0
        %3037 = vmatpush1.xpose.msra.mxu0 0.0
        %3038 = vmatprep.subr.mxu0 0.0
        %3039 = vmatpush1.xpose.msra.mxu0 0.0
        %3040 = vmatprep.subr.mxu0 0.0
        %3041 = vmatpush1.xpose.msra.mxu0 0.0
        %3042 = vmatprep.subr.mxu0 0.0
        %3043 = vmatpush1.xpose.msra.mxu0 0.0
        %3044 = vmatprep.subr.mxu0 0.0
        %3045 = vmatpush1.xpose.msra.mxu0 0.0
        %3046 = vmatprep.subr.mxu0 0.0
        %3047 = vmatpush1.xpose.msra.mxu0 0.0
        %3048 = vmatprep.mubr.f32.mxu0 0.0
        %3049 = vmatmul.mubr.f32.gmra.mrb[0].mxu0 %v2979
        %v3050 = vpop.f32.mrb[0].mxu0
        %v3051 = vadd.f32 0.0, %v3050
        %v3052 = vpop.f32.mrb[0].mxu0
        %3053 = vdwg.mxu0
        %v3055 = vsel %vm1319, %v2503, 0
        %v3058 = vsel %vm1319, %v2830, 0
        %3060 = vmatprep.subr.mxu0 0.0
        %3061 = vmatpush1.xpose.msra.mxu0 %v3058
        %3062 = vmatprep.subr.mxu0 0.0
        %3063 = vmatpush1.xpose.msra.mxu0 0.0
        %3064 = vmatprep.subr.mxu0 0.0
        %3065 = vmatpush1.xpose.msra.mxu0 0.0
        %3066 = vmatprep.subr.mxu0 0.0
        %3067 = vmatpush1.xpose.msra.mxu0 0.0
        %3068 = vmatprep.subr.mxu0 0.0
        %3069 = vmatpush1.xpose.msra.mxu0 0.0
        %3070 = vmatprep.subr.mxu0 0.0
        %3071 = vmatpush1.xpose.msra.mxu0 0.0
        %3072 = vmatprep.subr.mxu0 0.0
        %3073 = vmatpush1.xpose.msra.mxu0 0.0
        %3074 = vmatprep.subr.mxu0 0.0
        %3075 = vmatpush1.xpose.msra.mxu0 0.0
        %3076 = vmatprep.subr.mxu0 0.0
        %3077 = vmatpush1.xpose.msra.mxu0 0.0
        %3078 = vmatprep.subr.mxu0 0.0
        %3079 = vmatpush1.xpose.msra.mxu0 0.0
        %3080 = vmatprep.subr.mxu0 0.0
        %3081 = vmatpush1.xpose.msra.mxu0 0.0
        %3082 = vmatprep.subr.mxu0 0.0
        %3083 = vmatpush1.xpose.msra.mxu0 0.0
        %3084 = vmatprep.subr.mxu0 0.0
        %3085 = vmatpush1.xpose.msra.mxu0 0.0
        %3086 = vmatprep.subr.mxu0 0.0
        %3087 = vmatpush1.xpose.msra.mxu0 0.0
        %3088 = vmatprep.subr.mxu0 0.0
        %3089 = vmatpush1.xpose.msra.mxu0 0.0
        %3090 = vmatprep.subr.mxu0 0.0
        %3091 = vmatpush1.xpose.msra.mxu0 0.0
        %3092 = vmatprep.subr.mxu0 0.0
        %3093 = vmatpush1.xpose.msra.mxu0 0.0
        %3094 = vmatprep.subr.mxu0 0.0
        %3095 = vmatpush1.xpose.msra.mxu0 0.0
        %3096 = vmatprep.subr.mxu0 0.0
        %3097 = vmatpush1.xpose.msra.mxu0 0.0
        %3098 = vmatprep.subr.mxu0 0.0
        %3099 = vmatpush1.xpose.msra.mxu0 0.0
        %3100 = vmatprep.subr.mxu0 0.0
        %3101 = vmatpush1.xpose.msra.mxu0 0.0
        %3102 = vmatprep.subr.mxu0 0.0
        %3103 = vmatpush1.xpose.msra.mxu0 0.0
        %3104 = vmatprep.subr.mxu0 0.0
        %3105 = vmatpush1.xpose.msra.mxu0 0.0
        %3106 = vmatprep.subr.mxu0 0.0
        %3107 = vmatpush1.xpose.msra.mxu0 0.0
        %3108 = vmatprep.subr.mxu0 0.0
        %3109 = vmatpush1.xpose.msra.mxu0 0.0
        %3110 = vmatprep.subr.mxu0 0.0
        %3111 = vmatpush1.xpose.msra.mxu0 0.0
        %3112 = vmatprep.subr.mxu0 0.0
        %3113 = vmatpush1.xpose.msra.mxu0 0.0
        %3114 = vmatprep.subr.mxu0 0.0
        %3115 = vmatpush1.xpose.msra.mxu0 0.0
        %3116 = vmatprep.subr.mxu0 0.0
        %3117 = vmatpush1.xpose.msra.mxu0 0.0
        %3118 = vmatprep.subr.mxu0 0.0
        %3119 = vmatpush1.xpose.msra.mxu0 0.0
        %3120 = vmatprep.subr.mxu0 0.0
        %3121 = vmatpush1.xpose.msra.mxu0 0.0
        %3122 = vmatprep.subr.mxu0 0.0
        %3123 = vmatpush1.xpose.msra.mxu0 0.0
        %3124 = vmatprep.mubr.f32.mxu0 0.0
        %3125 = vmatmul.mubr.f32.gmra.mrb[0].mxu0 %v3055
        %v3126 = vpop.f32.mrb[0].mxu0
        %v3127 = vadd.f32 0.0, %v3126
        %v3128 = vpop.f32.mrb[0].mxu0
        %3129 = vdwg.mxu0
        %v3131 = vsel %vm1319, %v2573, 0
        %v3134 = vsel %vm1319, %v2900, 0
        %3136 = vmatprep.subr.mxu0 0.0
        %3137 = vmatpush1.xpose.msra.mxu0 %v3134
        %3138 = vmatprep.subr.mxu0 0.0
        %3139 = vmatpush1.xpose.msra.mxu0 0.0
        %3140 = vmatprep.subr.mxu0 0.0
        %3141 = vmatpush1.xpose.msra.mxu0 0.0
        %3142 = vmatprep.subr.mxu0 0.0
        %3143 = vmatpush1.xpose.msra.mxu0 0.0
        %3144 = vmatprep.subr.mxu0 0.0
        %3145 = vmatpush1.xpose.msra.mxu0 0.0
        %3146 = vmatprep.subr.mxu0 0.0
        %3147 = vmatpush1.xpose.msra.mxu0 0.0
        %3148 = vmatprep.subr.mxu0 0.0
        %3149 = vmatpush1.xpose.msra.mxu0 0.0
        %3150 = vmatprep.subr.mxu0 0.0
        %3151 = vmatpush1.xpose.msra.mxu0 0.0
        %3152 = vmatprep.subr.mxu0 0.0
        %3153 = vmatpush1.xpose.msra.mxu0 0.0
        %3154 = vmatprep.subr.mxu0 0.0
        %3155 = vmatpush1.xpose.msra.mxu0 0.0
        %3156 = vmatprep.subr.mxu0 0.0
        %3157 = vmatpush1.xpose.msra.mxu0 0.0
        %3158 = vmatprep.subr.mxu0 0.0
        %3159 = vmatpush1.xpose.msra.mxu0 0.0
        %3160 = vmatprep.subr.mxu0 0.0
        %3161 = vmatpush1.xpose.msra.mxu0 0.0
        %3162 = vmatprep.subr.mxu0 0.0
        %3163 = vmatpush1.xpose.msra.mxu0 0.0
        %3164 = vmatprep.subr.mxu0 0.0
        %3165 = vmatpush1.xpose.msra.mxu0 0.0
        %3166 = vmatprep.subr.mxu0 0.0
        %3167 = vmatpush1.xpose.msra.mxu0 0.0
        %3168 = vmatprep.subr.mxu0 0.0
        %3169 = vmatpush1.xpose.msra.mxu0 0.0
        %3170 = vmatprep.subr.mxu0 0.0
        %3171 = vmatpush1.xpose.msra.mxu0 0.0
        %3172 = vmatprep.subr.mxu0 0.0
        %3173 = vmatpush1.xpose.msra.mxu0 0.0
        %3174 = vmatprep.subr.mxu0 0.0
        %3175 = vmatpush1.xpose.msra.mxu0 0.0
        %3176 = vmatprep.subr.mxu0 0.0
        %3177 = vmatpush1.xpose.msra.mxu0 0.0
        %3178 = vmatprep.subr.mxu0 0.0
        %3179 = vmatpush1.xpose.msra.mxu0 0.0
        %3180 = vmatprep.subr.mxu0 0.0
        %3181 = vmatpush1.xpose.msra.mxu0 0.0
        %3182 = vmatprep.subr.mxu0 0.0
        %3183 = vmatpush1.xpose.msra.mxu0 0.0
        %3184 = vmatprep.subr.mxu0 0.0
        %3185 = vmatpush1.xpose.msra.mxu0 0.0
        %3186 = vmatprep.subr.mxu0 0.0
        %3187 = vmatpush1.xpose.msra.mxu0 0.0
        %3188 = vmatprep.subr.mxu0 0.0
        %3189 = vmatpush1.xpose.msra.mxu0 0.0
        %3190 = vmatprep.subr.mxu0 0.0
        %3191 = vmatpush1.xpose.msra.mxu0 0.0
        %3192 = vmatprep.subr.mxu0 0.0
        %3193 = vmatpush1.xpose.msra.mxu0 0.0
        %3194 = vmatprep.subr.mxu0 0.0
        %3195 = vmatpush1.xpose.msra.mxu0 0.0
        %3196 = vmatprep.subr.mxu0 0.0
        %3197 = vmatpush1.xpose.msra.mxu0 0.0
        %3198 = vmatprep.subr.mxu0 0.0
        %3199 = vmatpush1.xpose.msra.mxu0 0.0
        %3200 = vmatprep.mubr.f32.mxu0 0.0
        %3201 = vmatmul.mubr.f32.gmra.mrb[0].mxu0 %v3131
        %v3202 = vpop.f32.mrb[0].mxu0
        %v3203 = vadd.f32 0.0, %v3202
        %v3204 = vpop.f32.mrb[0].mxu0
        %3205 = vdwg.mxu0
        %v3207 = vsel %vm1319, %v2643, 0
        %v3210 = vsel %vm1319, %v2970, 0
        %3212 = vmatprep.subr.mxu0 0.0
        %3213 = vmatpush1.xpose.msra.mxu0 %v3210
        %3214 = vmatprep.subr.mxu0 0.0
        %3215 = vmatpush1.xpose.msra.mxu0 0.0
        %3216 = vmatprep.subr.mxu0 0.0
        %3217 = vmatpush1.xpose.msra.mxu0 0.0
        %3218 = vmatprep.subr.mxu0 0.0
        %3219 = vmatpush1.xpose.msra.mxu0 0.0
        %3220 = vmatprep.subr.mxu0 0.0
        %3221 = vmatpush1.xpose.msra.mxu0 0.0
        %3222 = vmatprep.subr.mxu0 0.0
        %3223 = vmatpush1.xpose.msra.mxu0 0.0
        %3224 = vmatprep.subr.mxu0 0.0
        %3225 = vmatpush1.xpose.msra.mxu0 0.0
        %3226 = vmatprep.subr.mxu0 0.0
        %3227 = vmatpush1.xpose.msra.mxu0 0.0
        %3228 = vmatprep.subr.mxu0 0.0
        %3229 = vmatpush1.xpose.msra.mxu0 0.0
        %3230 = vmatprep.subr.mxu0 0.0
        %3231 = vmatpush1.xpose.msra.mxu0 0.0
        %3232 = vmatprep.subr.mxu0 0.0
        %3233 = vmatpush1.xpose.msra.mxu0 0.0
        %3234 = vmatprep.subr.mxu0 0.0
        %3235 = vmatpush1.xpose.msra.mxu0 0.0
        %3236 = vmatprep.subr.mxu0 0.0
        %3237 = vmatpush1.xpose.msra.mxu0 0.0
        %3238 = vmatprep.subr.mxu0 0.0
        %3239 = vmatpush1.xpose.msra.mxu0 0.0
        %3240 = vmatprep.subr.mxu0 0.0
        %3241 = vmatpush1.xpose.msra.mxu0 0.0
        %3242 = vmatprep.subr.mxu0 0.0
        %3243 = vmatpush1.xpose.msra.mxu0 0.0
        %3244 = vmatprep.subr.mxu0 0.0
        %3245 = vmatpush1.xpose.msra.mxu0 0.0
        %3246 = vmatprep.subr.mxu0 0.0
        %3247 = vmatpush1.xpose.msra.mxu0 0.0
        %3248 = vmatprep.subr.mxu0 0.0
        %3249 = vmatpush1.xpose.msra.mxu0 0.0
        %3250 = vmatprep.subr.mxu0 0.0
        %3251 = vmatpush1.xpose.msra.mxu0 0.0
        %3252 = vmatprep.subr.mxu0 0.0
        %3253 = vmatpush1.xpose.msra.mxu0 0.0
        %3254 = vmatprep.subr.mxu0 0.0
        %3255 = vmatpush1.xpose.msra.mxu0 0.0
        %3256 = vmatprep.subr.mxu0 0.0
        %3257 = vmatpush1.xpose.msra.mxu0 0.0
        %3258 = vmatprep.subr.mxu0 0.0
        %3259 = vmatpush1.xpose.msra.mxu0 0.0
        %3260 = vmatprep.subr.mxu0 0.0
        %3261 = vmatpush1.xpose.msra.mxu0 0.0
        %3262 = vmatprep.subr.mxu0 0.0
        %3263 = vmatpush1.xpose.msra.mxu0 0.0
        %3264 = vmatprep.subr.mxu0 0.0
        %3265 = vmatpush1.xpose.msra.mxu0 0.0
        %3266 = vmatprep.subr.mxu0 0.0
        %3267 = vmatpush1.xpose.msra.mxu0 0.0
        %3268 = vmatprep.subr.mxu0 0.0
        %3269 = vmatpush1.xpose.msra.mxu0 0.0
        %3270 = vmatprep.subr.mxu0 0.0
        %3271 = vmatpush1.xpose.msra.mxu0 0.0
        %3272 = vmatprep.subr.mxu0 0.0
        %3273 = vmatpush1.xpose.msra.mxu0 0.0
        %3274 = vmatprep.subr.mxu0 0.0
        %3275 = vmatpush1.xpose.msra.mxu0 0.0
        %3276 = vmatprep.mubr.f32.mxu0 0.0
        %3277 = vmatmul.mubr.f32.gmra.mrb[0].mxu0 %v3207
        %v3278 = vpop.f32.mrb[0].mxu0
        %v3279 = vadd.f32 0.0, %v3278
        %v3280 = vpop.f32.mrb[0].mxu0
        %3281 = vdwg.mxu0
        %v3282 = vmul.f32 %v3051, 0.35355338
        %v3283 = vmul.f32 %v3127, 0.35355338
        %v3284 = vmul.f32 %v3203, 0.35355338
        %v3285 = vmul.f32 %v3279, 0.35355338
        %v3287 = vlaneseq
        %v3288 = vshrl.u32 %v3287, 7
        %v3289 = vsub.s32 0, %v3288
        %v3290 = vrot.slane %v982, %v3289
        %v3292 = vadd.f32 %v3282, %v3290
        %v3293 = vadd.f32 %v3283, %v3290
        %v3294 = vadd.f32 %v3284, %v3290
        %v3295 = vadd.f32 %v3285, %v3290
        %v3296 = vsel %vm1319, %v3292, -inf
        %3297 = vmax.xlane.f32.xlu0 %v3296
        %v3298 = vpop.xlane.xlu0 %3297
        %v3299 = vsel %vm1319, %v3293, -inf
        %3300 = vmax.xlane.f32.xlu0 %v3299
        %v3301 = vpop.xlane.xlu0 %3300
        %v3302 = vsel %vm1319, %v3294, -inf
        %3303 = vmax.xlane.f32.xlu0 %v3302
        %v3304 = vpop.xlane.xlu0 %3303
        %v3305 = vsel %vm1319, %v3295, -inf
        %3306 = vmax.xlane.f32.xlu0 %v3305
        %v3307 = vpop.xlane.xlu0 %3306
        %v3308 = vsub.f32 %v3292, %v3298
        %v3309 = vsub.f32 %v3293, %v3301
        %v3310 = vsub.f32 %v3294, %v3304
        %v3311 = vsub.f32 %v3295, %v3307
        %v3312 = vmul.f32 %v3308, 1.442695
        %v3313 = vpow.pop %v3312
        %v3314 = vmul.f32 %v3309, 1.442695
        %v3315 = vpow.pop %v3314
        %v3316 = vmul.f32 %v3310, 1.442695
        %v3317 = vpow.pop %v3316
        %v3318 = vmul.f32 %v3311, 1.442695
        %v3319 = vpow.pop %v3318
        %v3320 = vsel %vm1319, %v3313, 0.0
        %3321 = vadd.xlane.f32.xlu0 %v3320
        %v3322 = vpop.xlane.xlu0 %3321
        %v3323 = vsel %vm1319, %v3315, 0.0
        %3324 = vadd.xlane.f32.xlu0 %v3323
        %v3325 = vpop.xlane.xlu0 %3324
        %v3326 = vsel %vm1319, %v3317, 0.0
        %3327 = vadd.xlane.f32.xlu0 %v3326
        %v3328 = vpop.xlane.xlu0 %3327
        %v3329 = vsel %vm1319, %v3319, 0.0
        %3330 = vadd.xlane.f32.xlu0 %v3329
        %v3331 = vpop.xlane.xlu0 %3330
        %v3332 = vrcp.pop %v3322
        %v3333 = vmul.f32 %v3313, %v3332
        %v3334 = vrcp.pop %v3325
        %v3335 = vmul.f32 %v3315, %v3334
        %v3336 = vrcp.pop %v3328
        %v3337 = vmul.f32 %v3317, %v3336
        %v3338 = vrcp.pop %v3331
        %v3339 = vmul.f32 %v3319, %v3338
        %3340 = vrot.lane.b32.xlu0 %v2760, 120
        %v3341 = vpop.permute.xlu0 %3340
        %v3344 = vsel %vm1319, %v3333, 0
        %3346 = vmatprep.subr.mxu0 0.0
        %3347 = vmatpush1.msra.mxu0 %v3341
        %3348 = vmatprep.subr.mxu0 0.0
        %3349 = vmatpush1.msra.mxu0 0.0
        %3350 = vmatprep.subr.mxu0 0.0
        %3351 = vmatpush1.msra.mxu0 0.0
        %3352 = vmatprep.subr.mxu0 0.0
        %3353 = vmatpush1.msra.mxu0 0.0
        %3354 = vmatprep.subr.mxu0 0.0
        %3355 = vmatpush1.msra.mxu0 0.0
        %3356 = vmatprep.subr.mxu0 0.0
        %3357 = vmatpush1.msra.mxu0 0.0
        %3358 = vmatprep.subr.mxu0 0.0
        %3359 = vmatpush1.msra.mxu0 0.0
        %3360 = vmatprep.subr.mxu0 0.0
        %3361 = vmatpush1.msra.mxu0 0.0
        %3362 = vmatprep.subr.mxu0 0.0
        %3363 = vmatpush1.msra.mxu0 0.0
        %3364 = vmatprep.subr.mxu0 0.0
        %3365 = vmatpush1.msra.mxu0 0.0
        %3366 = vmatprep.subr.mxu0 0.0
        %3367 = vmatpush1.msra.mxu0 0.0
        %3368 = vmatprep.subr.mxu0 0.0
        %3369 = vmatpush1.msra.mxu0 0.0
        %3370 = vmatprep.subr.mxu0 0.0
        %3371 = vmatpush1.msra.mxu0 0.0
        %3372 = vmatprep.subr.mxu0 0.0
        %3373 = vmatpush1.msra.mxu0 0.0
        %3374 = vmatprep.subr.mxu0 0.0
        %3375 = vmatpush1.msra.mxu0 0.0
        %3376 = vmatprep.subr.mxu0 0.0
        %3377 = vmatpush1.msra.mxu0 0.0
        %3378 = vmatprep.subr.mxu0 0.0
        %3379 = vmatpush1.msra.mxu0 0.0
        %3380 = vmatprep.subr.mxu0 0.0
        %3381 = vmatpush1.msra.mxu0 0.0
        %3382 = vmatprep.subr.mxu0 0.0
        %3383 = vmatpush1.msra.mxu0 0.0
        %3384 = vmatprep.subr.mxu0 0.0
        %3385 = vmatpush1.msra.mxu0 0.0
        %3386 = vmatprep.subr.mxu0 0.0
        %3387 = vmatpush1.msra.mxu0 0.0
        %3388 = vmatprep.subr.mxu0 0.0
        %3389 = vmatpush1.msra.mxu0 0.0
        %3390 = vmatprep.subr.mxu0 0.0
        %3391 = vmatpush1.msra.mxu0 0.0
        %3392 = vmatprep.subr.mxu0 0.0
        %3393 = vmatpush1.msra.mxu0 0.0
        %3394 = vmatprep.subr.mxu0 0.0
        %3395 = vmatpush1.msra.mxu0 0.0
        %3396 = vmatprep.subr.mxu0 0.0
        %3397 = vmatpush1.msra.mxu0 0.0
        %3398 = vmatprep.subr.mxu0 0.0
        %3399 = vmatpush1.msra.mxu0 0.0
        %3400 = vmatprep.subr.mxu0 0.0
        %3401 = vmatpush1.msra.mxu0 0.0
        %3402 = vmatprep.subr.mxu0 0.0
        %3403 = vmatpush1.msra.mxu0 0.0
        %3404 = vmatprep.subr.mxu0 0.0
        %3405 = vmatpush1.msra.mxu0 0.0
        %3406 = vmatprep.subr.mxu0 0.0
        %3407 = vmatpush1.msra.mxu0 0.0
        %3408 = vmatprep.subr.mxu0 0.0
        %3409 = vmatpush1.msra.mxu0 0.0
        %3410 = vmatprep.mubr.f32.mxu0 0.0
        %3411 = vmatmul.mubr.f32.gmra.mrb[0].mxu0 %v3344
        %v3412 = vpop.f32.mrb[0].mxu0
        %v3413 = vadd.f32 0.0, %v3412
        %v3414 = vpop.f32.mrb[0].mxu0
        %3415 = vdwg.mxu0
        %3416 = vrot.lane.b32.xlu0 %v2830, 120
        %v3417 = vpop.permute.xlu0 %3416
        %v3420 = vsel %vm1319, %v3335, 0
        %3422 = vmatprep.subr.mxu0 0.0
        %3423 = vmatpush1.msra.mxu0 %v3417
        %3424 = vmatprep.subr.mxu0 0.0
        %3425 = vmatpush1.msra.mxu0 0.0
        %3426 = vmatprep.subr.mxu0 0.0
        %3427 = vmatpush1.msra.mxu0 0.0
        %3428 = vmatprep.subr.mxu0 0.0
        %3429 = vmatpush1.msra.mxu0 0.0
        %3430 = vmatprep.subr.mxu0 0.0
        %3431 = vmatpush1.msra.mxu0 0.0
        %3432 = vmatprep.subr.mxu0 0.0
        %3433 = vmatpush1.msra.mxu0 0.0
        %3434 = vmatprep.subr.mxu0 0.0
        %3435 = vmatpush1.msra.mxu0 0.0
        %3436 = vmatprep.subr.mxu0 0.0
        %3437 = vmatpush1.msra.mxu0 0.0
        %3438 = vmatprep.subr.mxu0 0.0
        %3439 = vmatpush1.msra.mxu0 0.0
        %3440 = vmatprep.subr.mxu0 0.0
        %3441 = vmatpush1.msra.mxu0 0.0
        %3442 = vmatprep.subr.mxu0 0.0
        %3443 = vmatpush1.msra.mxu0 0.0
        %3444 = vmatprep.subr.mxu0 0.0
        %3445 = vmatpush1.msra.mxu0 0.0
        %3446 = vmatprep.subr.mxu0 0.0
        %3447 = vmatpush1.msra.mxu0 0.0
        %3448 = vmatprep.subr.mxu0 0.0
        %3449 = vmatpush1.msra.mxu0 0.0
        %3450 = vmatprep.subr.mxu0 0.0
        %3451 = vmatpush1.msra.mxu0 0.0
        %3452 = vmatprep.subr.mxu0 0.0
        %3453 = vmatpush1.msra.mxu0 0.0
        %3454 = vmatprep.subr.mxu0 0.0
        %3455 = vmatpush1.msra.mxu0 0.0
        %3456 = vmatprep.subr.mxu0 0.0
        %3457 = vmatpush1.msra.mxu0 0.0
        %3458 = vmatprep.subr.mxu0 0.0
        %3459 = vmatpush1.msra.mxu0 0.0
        %3460 = vmatprep.subr.mxu0 0.0
        %3461 = vmatpush1.msra.mxu0 0.0
        %3462 = vmatprep.subr.mxu0 0.0
        %3463 = vmatpush1.msra.mxu0 0.0
        %3464 = vmatprep.subr.mxu0 0.0
        %3465 = vmatpush1.msra.mxu0 0.0
        %3466 = vmatprep.subr.mxu0 0.0
        %3467 = vmatpush1.msra.mxu0 0.0
        %3468 = vmatprep.subr.mxu0 0.0
        %3469 = vmatpush1.msra.mxu0 0.0
        %3470 = vmatprep.subr.mxu0 0.0
        %3471 = vmatpush1.msra.mxu0 0.0
        %3472 = vmatprep.subr.mxu0 0.0
        %3473 = vmatpush1.msra.mxu0 0.0
        %3474 = vmatprep.subr.mxu0 0.0
        %3475 = vmatpush1.msra.mxu0 0.0
        %3476 = vmatprep.subr.mxu0 0.0
        %3477 = vmatpush1.msra.mxu0 0.0
        %3478 = vmatprep.subr.mxu0 0.0
        %3479 = vmatpush1.msra.mxu0 0.0
        %3480 = vmatprep.subr.mxu0 0.0
        %3481 = vmatpush1.msra.mxu0 0.0
        %3482 = vmatprep.subr.mxu0 0.0
        %3483 = vmatpush1.msra.mxu0 0.0
        %3484 = vmatprep.subr.mxu0 0.0
        %3485 = vmatpush1.msra.mxu0 0.0
        %3486 = vmatprep.mubr.f32.mxu0 0.0
        %3487 = vmatmul.mubr.f32.gmra.mrb[0].mxu0 %v3420
        %v3488 = vpop.f32.mrb[0].mxu0
        %v3489 = vadd.f32 0.0, %v3488
        %v3490 = vpop.f32.mrb[0].mxu0
        %3491 = vdwg.mxu0
        %3492 = vrot.lane.b32.xlu0 %v2900, 120
        %v3493 = vpop.permute.xlu0 %3492
        %v3496 = vsel %vm1319, %v3337, 0
        %3498 = vmatprep.subr.mxu0 0.0
        %3499 = vmatpush1.msra.mxu0 %v3493
        %3500 = vmatprep.subr.mxu0 0.0
        %3501 = vmatpush1.msra.mxu0 0.0
        %3502 = vmatprep.subr.mxu0 0.0
        %3503 = vmatpush1.msra.mxu0 0.0
        %3504 = vmatprep.subr.mxu0 0.0
        %3505 = vmatpush1.msra.mxu0 0.0
        %3506 = vmatprep.subr.mxu0 0.0
        %3507 = vmatpush1.msra.mxu0 0.0
        %3508 = vmatprep.subr.mxu0 0.0
        %3509 = vmatpush1.msra.mxu0 0.0
        %3510 = vmatprep.subr.mxu0 0.0
        %3511 = vmatpush1.msra.mxu0 0.0
        %3512 = vmatprep.subr.mxu0 0.0
        %3513 = vmatpush1.msra.mxu0 0.0
        %3514 = vmatprep.subr.mxu0 0.0
        %3515 = vmatpush1.msra.mxu0 0.0
        %3516 = vmatprep.subr.mxu0 0.0
        %3517 = vmatpush1.msra.mxu0 0.0
        %3518 = vmatprep.subr.mxu0 0.0
        %3519 = vmatpush1.msra.mxu0 0.0
        %3520 = vmatprep.subr.mxu0 0.0
        %3521 = vmatpush1.msra.mxu0 0.0
        %3522 = vmatprep.subr.mxu0 0.0
        %3523 = vmatpush1.msra.mxu0 0.0
        %3524 = vmatprep.subr.mxu0 0.0
        %3525 = vmatpush1.msra.mxu0 0.0
        %3526 = vmatprep.subr.mxu0 0.0
        %3527 = vmatpush1.msra.mxu0 0.0
        %3528 = vmatprep.subr.mxu0 0.0
        %3529 = vmatpush1.msra.mxu0 0.0
        %3530 = vmatprep.subr.mxu0 0.0
        %3531 = vmatpush1.msra.mxu0 0.0
        %3532 = vmatprep.subr.mxu0 0.0
        %3533 = vmatpush1.msra.mxu0 0.0
        %3534 = vmatprep.subr.mxu0 0.0
        %3535 = vmatpush1.msra.mxu0 0.0
        %3536 = vmatprep.subr.mxu0 0.0
        %3537 = vmatpush1.msra.mxu0 0.0
        %3538 = vmatprep.subr.mxu0 0.0
        %3539 = vmatpush1.msra.mxu0 0.0
        %3540 = vmatprep.subr.mxu0 0.0
        %3541 = vmatpush1.msra.mxu0 0.0
        %3542 = vmatprep.subr.mxu0 0.0
        %3543 = vmatpush1.msra.mxu0 0.0
        %3544 = vmatprep.subr.mxu0 0.0
        %3545 = vmatpush1.msra.mxu0 0.0
        %3546 = vmatprep.subr.mxu0 0.0
        %3547 = vmatpush1.msra.mxu0 0.0
        %3548 = vmatprep.subr.mxu0 0.0
        %3549 = vmatpush1.msra.mxu0 0.0
        %3550 = vmatprep.subr.mxu0 0.0
        %3551 = vmatpush1.msra.mxu0 0.0
        %3552 = vmatprep.subr.mxu0 0.0
        %3553 = vmatpush1.msra.mxu0 0.0
        %3554 = vmatprep.subr.mxu0 0.0
        %3555 = vmatpush1.msra.mxu0 0.0
        %3556 = vmatprep.subr.mxu0 0.0
        %3557 = vmatpush1.msra.mxu0 0.0
        %3558 = vmatprep.subr.mxu0 0.0
        %3559 = vmatpush1.msra.mxu0 0.0
        %3560 = vmatprep.subr.mxu0 0.0
        %3561 = vmatpush1.msra.mxu0 0.0
        %3562 = vmatprep.mubr.f32.mxu0 0.0
        %3563 = vmatmul.mubr.f32.gmra.mrb[0].mxu0 %v3496
        %v3564 = vpop.f32.mrb[0].mxu0
        %v3565 = vadd.f32 0.0, %v3564
        %v3566 = vpop.f32.mrb[0].mxu0
        %3567 = vdwg.mxu0
        %3568 = vrot.lane.b32.xlu0 %v2970, 120
        %v3569 = vpop.permute.xlu0 %3568
        %v3572 = vsel %vm1319, %v3339, 0
        %3574 = vmatprep.subr.mxu0 0.0
        %3575 = vmatpush1.msra.mxu0 %v3569
        %3576 = vmatprep.subr.mxu0 0.0
        %3577 = vmatpush1.msra.mxu0 0.0
        %3578 = vmatprep.subr.mxu0 0.0
        %3579 = vmatpush1.msra.mxu0 0.0
        %3580 = vmatprep.subr.mxu0 0.0
        %3581 = vmatpush1.msra.mxu0 0.0
        %3582 = vmatprep.subr.mxu0 0.0
        %3583 = vmatpush1.msra.mxu0 0.0
        %3584 = vmatprep.subr.mxu0 0.0
        %3585 = vmatpush1.msra.mxu0 0.0
        %3586 = vmatprep.subr.mxu0 0.0
        %3587 = vmatpush1.msra.mxu0 0.0
        %3588 = vmatprep.subr.mxu0 0.0
        %3589 = vmatpush1.msra.mxu0 0.0
        %3590 = vmatprep.subr.mxu0 0.0
        %3591 = vmatpush1.msra.mxu0 0.0
        %3592 = vmatprep.subr.mxu0 0.0
        %3593 = vmatpush1.msra.mxu0 0.0
        %3594 = vmatprep.subr.mxu0 0.0
        %3595 = vmatpush1.msra.mxu0 0.0
        %3596 = vmatprep.subr.mxu0 0.0
        %3597 = vmatpush1.msra.mxu0 0.0
        %3598 = vmatprep.subr.mxu0 0.0
        %3599 = vmatpush1.msra.mxu0 0.0
        %3600 = vmatprep.subr.mxu0 0.0
        %3601 = vmatpush1.msra.mxu0 0.0
        %3602 = vmatprep.subr.mxu0 0.0
        %3603 = vmatpush1.msra.mxu0 0.0
        %3604 = vmatprep.subr.mxu0 0.0
        %3605 = vmatpush1.msra.mxu0 0.0
        %3606 = vmatprep.subr.mxu0 0.0
        %3607 = vmatpush1.msra.mxu0 0.0
        %3608 = vmatprep.subr.mxu0 0.0
        %3609 = vmatpush1.msra.mxu0 0.0
        %3610 = vmatprep.subr.mxu0 0.0
        %3611 = vmatpush1.msra.mxu0 0.0
        %3612 = vmatprep.subr.mxu0 0.0
        %3613 = vmatpush1.msra.mxu0 0.0
        %3614 = vmatprep.subr.mxu0 0.0
        %3615 = vmatpush1.msra.mxu0 0.0
        %3616 = vmatprep.subr.mxu0 0.0
        %3617 = vmatpush1.msra.mxu0 0.0
        %3618 = vmatprep.subr.mxu0 0.0
        %3619 = vmatpush1.msra.mxu0 0.0
        %3620 = vmatprep.subr.mxu0 0.0
        %3621 = vmatpush1.msra.mxu0 0.0
        %3622 = vmatprep.subr.mxu0 0.0
        %3623 = vmatpush1.msra.mxu0 0.0
        %3624 = vmatprep.subr.mxu0 0.0
        %3625 = vmatpush1.msra.mxu0 0.0
        %3626 = vmatprep.subr.mxu0 0.0
        %3627 = vmatpush1.msra.mxu0 0.0
        %3628 = vmatprep.subr.mxu0 0.0
        %3629 = vmatpush1.msra.mxu0 0.0
        %3630 = vmatprep.subr.mxu0 0.0
        %3631 = vmatpush1.msra.mxu0 0.0
        %3632 = vmatprep.subr.mxu0 0.0
        %3633 = vmatpush1.msra.mxu0 0.0
        %3634 = vmatprep.subr.mxu0 0.0
        %3635 = vmatpush1.msra.mxu0 0.0
        %3636 = vmatprep.subr.mxu0 0.0
        %3637 = vmatpush1.msra.mxu0 0.0
        %3638 = vmatprep.mubr.f32.mxu0 0.0
        %3639 = vmatmul.mubr.f32.gmra.mrb[0].mxu0 %v3572
        %v3640 = vpop.f32.mrb[0].mxu0
        %v3641 = vadd.f32 0.0, %v3640
        %v3642 = vpop.f32.mrb[0].mxu0
        %3643 = vdwg.mxu0
        %v3645 = vsel %vm1319, %v3413, 0
        %3647 = vmatprep.subr.mxu0 0.0
        %3648 = vmatpush1.msra.mxu0 %v2973
        %3649 = vmatprep.subr.mxu0 0.0
        %3650 = vmatpush1.msra.mxu0 0.0
        %3651 = vmatprep.subr.mxu0 0.0
        %3652 = vmatpush1.msra.mxu0 0.0
        %3653 = vmatprep.subr.mxu0 0.0
        %3654 = vmatpush1.msra.mxu0 0.0
        %3655 = vmatprep.subr.mxu0 0.0
        %3656 = vmatpush1.msra.mxu0 0.0
        %3657 = vmatprep.subr.mxu0 0.0
        %3658 = vmatpush1.msra.mxu0 0.0
        %3659 = vmatprep.subr.mxu0 0.0
        %3660 = vmatpush1.msra.mxu0 0.0
        %3661 = vmatprep.subr.mxu0 0.0
        %3662 = vmatpush1.msra.mxu0 0.0
        %3663 = vmatprep.subr.mxu0 0.0
        %3664 = vmatpush1.msra.mxu0 0.0
        %3665 = vmatprep.subr.mxu0 0.0
        %3666 = vmatpush1.msra.mxu0 0.0
        %3667 = vmatprep.subr.mxu0 0.0
        %3668 = vmatpush1.msra.mxu0 0.0
        %3669 = vmatprep.subr.mxu0 0.0
        %3670 = vmatpush1.msra.mxu0 0.0
        %3671 = vmatprep.subr.mxu0 0.0
        %3672 = vmatpush1.msra.mxu0 0.0
        %3673 = vmatprep.subr.mxu0 0.0
        %3674 = vmatpush1.msra.mxu0 0.0
        %3675 = vmatprep.subr.mxu0 0.0
        %3676 = vmatpush1.msra.mxu0 0.0
        %3677 = vmatprep.subr.mxu0 0.0
        %3678 = vmatpush1.msra.mxu0 0.0
        %3679 = vmatprep.subr.mxu0 0.0
        %3680 = vmatpush1.msra.mxu0 0.0
        %3681 = vmatprep.subr.mxu0 0.0
        %3682 = vmatpush1.msra.mxu0 0.0
        %3683 = vmatprep.subr.mxu0 0.0
        %3684 = vmatpush1.msra.mxu0 0.0
        %3685 = vmatprep.subr.mxu0 0.0
        %3686 = vmatpush1.msra.mxu0 0.0
        %3687 = vmatprep.subr.mxu0 0.0
        %3688 = vmatpush1.msra.mxu0 0.0
        %3689 = vmatprep.subr.mxu0 0.0
        %3690 = vmatpush1.msra.mxu0 0.0
        %3691 = vmatprep.subr.mxu0 0.0
        %3692 = vmatpush1.msra.mxu0 0.0
        %3693 = vmatprep.subr.mxu0 0.0
        %3694 = vmatpush1.msra.mxu0 0.0
        %3695 = vmatprep.subr.mxu0 0.0
        %3696 = vmatpush1.msra.mxu0 0.0
        %3697 = vmatprep.subr.mxu0 0.0
        %3698 = vmatpush1.msra.mxu0 0.0
        %3699 = vmatprep.subr.mxu0 0.0
        %3700 = vmatpush1.msra.mxu0 0.0
        %3701 = vmatprep.subr.mxu0 0.0
        %3702 = vmatpush1.msra.mxu0 0.0
        %3703 = vmatprep.subr.mxu0 0.0
        %3704 = vmatpush1.msra.mxu0 0.0
        %3705 = vmatprep.subr.mxu0 0.0
        %3706 = vmatpush1.msra.mxu0 0.0
        %3707 = vmatprep.subr.mxu0 0.0
        %3708 = vmatpush1.msra.mxu0 0.0
        %3709 = vmatprep.subr.mxu0 0.0
        %3710 = vmatpush1.msra.mxu0 0.0
        %3711 = vmatprep.mubr.f32.mxu0 0.0
        %3712 = vmatmul.mubr.f32.gmra.mrb[0].mxu0 %v3645
        %v3713 = vpop.f32.mrb[0].mxu0
        %v3714 = vadd.f32 0.0, %v3713
        %v3715 = vpop.f32.mrb[0].mxu0
        %3716 = vdwg.mxu0
        %v3718 = vsel %vm1319, %v3489, 0
        %3720 = vmatprep.subr.mxu0 0.0
        %3721 = vmatpush1.msra.mxu0 %v2974
        %3722 = vmatprep.subr.mxu0 0.0
        %3723 = vmatpush1.msra.mxu0 0.0
        %3724 = vmatprep.subr.mxu0 0.0
        %3725 = vmatpush1.msra.mxu0 0.0
        %3726 = vmatprep.subr.mxu0 0.0
        %3727 = vmatpush1.msra.mxu0 0.0
        %3728 = vmatprep.subr.mxu0 0.0
        %3729 = vmatpush1.msra.mxu0 0.0
        %3730 = vmatprep.subr.mxu0 0.0
        %3731 = vmatpush1.msra.mxu0 0.0
        %3732 = vmatprep.subr.mxu0 0.0
        %3733 = vmatpush1.msra.mxu0 0.0
        %3734 = vmatprep.subr.mxu0 0.0
        %3735 = vmatpush1.msra.mxu0 0.0
        %3736 = vmatprep.subr.mxu0 0.0
        %3737 = vmatpush1.msra.mxu0 0.0
        %3738 = vmatprep.subr.mxu0 0.0
        %3739 = vmatpush1.msra.mxu0 0.0
        %3740 = vmatprep.subr.mxu0 0.0
        %3741 = vmatpush1.msra.mxu0 0.0
        %3742 = vmatprep.subr.mxu0 0.0
        %3743 = vmatpush1.msra.mxu0 0.0
        %3744 = vmatprep.subr.mxu0 0.0
        %3745 = vmatpush1.msra.mxu0 0.0
        %3746 = vmatprep.subr.mxu0 0.0
        %3747 = vmatpush1.msra.mxu0 0.0
        %3748 = vmatprep.subr.mxu0 0.0
        %3749 = vmatpush1.msra.mxu0 0.0
        %3750 = vmatprep.subr.mxu0 0.0
        %3751 = vmatpush1.msra.mxu0 0.0
        %3752 = vmatprep.subr.mxu0 0.0
        %3753 = vmatpush1.msra.mxu0 0.0
        %3754 = vmatprep.subr.mxu0 0.0
        %3755 = vmatpush1.msra.mxu0 0.0
        %3756 = vmatprep.subr.mxu0 0.0
        %3757 = vmatpush1.msra.mxu0 0.0
        %3758 = vmatprep.subr.mxu0 0.0
        %3759 = vmatpush1.msra.mxu0 0.0
        %3760 = vmatprep.subr.mxu0 0.0
        %3761 = vmatpush1.msra.mxu0 0.0
        %3762 = vmatprep.subr.mxu0 0.0
        %3763 = vmatpush1.msra.mxu0 0.0
        %3764 = vmatprep.subr.mxu0 0.0
        %3765 = vmatpush1.msra.mxu0 0.0
        %3766 = vmatprep.subr.mxu0 0.0
        %3767 = vmatpush1.msra.mxu0 0.0
        %3768 = vmatprep.subr.mxu0 0.0
        %3769 = vmatpush1.msra.mxu0 0.0
        %3770 = vmatprep.subr.mxu0 0.0
        %3771 = vmatpush1.msra.mxu0 0.0
        %3772 = vmatprep.subr.mxu0 0.0
        %3773 = vmatpush1.msra.mxu0 0.0
        %3774 = vmatprep.subr.mxu0 0.0
        %3775 = vmatpush1.msra.mxu0 0.0
        %3776 = vmatprep.subr.mxu0 0.0
        %3777 = vmatpush1.msra.mxu0 0.0
        %3778 = vmatprep.subr.mxu0 0.0
        %3779 = vmatpush1.msra.mxu0 0.0
        %3780 = vmatprep.subr.mxu0 0.0
        %3781 = vmatpush1.msra.mxu0 0.0
        %3782 = vmatprep.subr.mxu0 0.0
        %3783 = vmatpush1.msra.mxu0 0.0
        %3784 = vmatprep.mubr.f32.mxu0 0.0
        %3785 = vmatmul.mubr.f32.gmra.mrb[0].mxu0 %v3718
        %v3786 = vpop.f32.mrb[0].mxu0
        %v3787 = vadd.f32 0.0, %v3786
        %v3788 = vpop.f32.mrb[0].mxu0
        %3789 = vdwg.mxu0
        %v3791 = vsel %vm1319, %v3565, 0
        %3793 = vmatprep.subr.mxu0 0.0
        %3794 = vmatpush1.msra.mxu0 %v2975
        %3795 = vmatprep.subr.mxu0 0.0
        %3796 = vmatpush1.msra.mxu0 0.0
        %3797 = vmatprep.subr.mxu0 0.0
        %3798 = vmatpush1.msra.mxu0 0.0
        %3799 = vmatprep.subr.mxu0 0.0
        %3800 = vmatpush1.msra.mxu0 0.0
        %3801 = vmatprep.subr.mxu0 0.0
        %3802 = vmatpush1.msra.mxu0 0.0
        %3803 = vmatprep.subr.mxu0 0.0
        %3804 = vmatpush1.msra.mxu0 0.0
        %3805 = vmatprep.subr.mxu0 0.0
        %3806 = vmatpush1.msra.mxu0 0.0
        %3807 = vmatprep.subr.mxu0 0.0
        %3808 = vmatpush1.msra.mxu0 0.0
        %3809 = vmatprep.subr.mxu0 0.0
        %3810 = vmatpush1.msra.mxu0 0.0
        %3811 = vmatprep.subr.mxu0 0.0
        %3812 = vmatpush1.msra.mxu0 0.0
        %3813 = vmatprep.subr.mxu0 0.0
        %3814 = vmatpush1.msra.mxu0 0.0
        %3815 = vmatprep.subr.mxu0 0.0
        %3816 = vmatpush1.msra.mxu0 0.0
        %3817 = vmatprep.subr.mxu0 0.0
        %3818 = vmatpush1.msra.mxu0 0.0
        %3819 = vmatprep.subr.mxu0 0.0
        %3820 = vmatpush1.msra.mxu0 0.0
        %3821 = vmatprep.subr.mxu0 0.0
        %3822 = vmatpush1.msra.mxu0 0.0
        %3823 = vmatprep.subr.mxu0 0.0
        %3824 = vmatpush1.msra.mxu0 0.0
        %3825 = vmatprep.subr.mxu0 0.0
        %3826 = vmatpush1.msra.mxu0 0.0
        %3827 = vmatprep.subr.mxu0 0.0
        %3828 = vmatpush1.msra.mxu0 0.0
        %3829 = vmatprep.subr.mxu0 0.0
        %3830 = vmatpush1.msra.mxu0 0.0
        %3831 = vmatprep.subr.mxu0 0.0
        %3832 = vmatpush1.msra.mxu0 0.0
        %3833 = vmatprep.subr.mxu0 0.0
        %3834 = vmatpush1.msra.mxu0 0.0
        %3835 = vmatprep.subr.mxu0 0.0
        %3836 = vmatpush1.msra.mxu0 0.0
        %3837 = vmatprep.subr.mxu0 0.0
        %3838 = vmatpush1.msra.mxu0 0.0
        %3839 = vmatprep.subr.mxu0 0.0
        %3840 = vmatpush1.msra.mxu0 0.0
        %3841 = vmatprep.subr.mxu0 0.0
        %3842 = vmatpush1.msra.mxu0 0.0
        %3843 = vmatprep.subr.mxu0 0.0
        %3844 = vmatpush1.msra.mxu0 0.0
        %3845 = vmatprep.subr.mxu0 0.0
        %3846 = vmatpush1.msra.mxu0 0.0
        %3847 = vmatprep.subr.mxu0 0.0
        %3848 = vmatpush1.msra.mxu0 0.0
        %3849 = vmatprep.subr.mxu0 0.0
        %3850 = vmatpush1.msra.mxu0 0.0
        %3851 = vmatprep.subr.mxu0 0.0
        %3852 = vmatpush1.msra.mxu0 0.0
        %3853 = vmatprep.subr.mxu0 0.0
        %3854 = vmatpush1.msra.mxu0 0.0
        %3855 = vmatprep.subr.mxu0 0.0
        %3856 = vmatpush1.msra.mxu0 0.0
        %3857 = vmatprep.mubr.f32.mxu0 0.0
        %3858 = vmatmul.mubr.f32.gmra.mrb[0].mxu0 %v3791
        %v3859 = vpop.f32.mrb[0].mxu0
        %v3860 = vadd.f32 0.0, %v3859
        %v3861 = vpop.f32.mrb[0].mxu0
        %3862 = vdwg.mxu0
        %v3864 = vsel %vm1319, %v3641, 0
        %3866 = vmatprep.subr.mxu0 0.0
        %3867 = vmatpush1.msra.mxu0 %v2976
        %3868 = vmatprep.subr.mxu0 0.0
        %3869 = vmatpush1.msra.mxu0 0.0
        %3870 = vmatprep.subr.mxu0 0.0
        %3871 = vmatpush1.msra.mxu0 0.0
        %3872 = vmatprep.subr.mxu0 0.0
        %3873 = vmatpush1.msra.mxu0 0.0
        %3874 = vmatprep.subr.mxu0 0.0
        %3875 = vmatpush1.msra.mxu0 0.0
        %3876 = vmatprep.subr.mxu0 0.0
        %3877 = vmatpush1.msra.mxu0 0.0
        %3878 = vmatprep.subr.mxu0 0.0
        %3879 = vmatpush1.msra.mxu0 0.0
        %3880 = vmatprep.subr.mxu0 0.0
        %3881 = vmatpush1.msra.mxu0 0.0
        %3882 = vmatprep.subr.mxu0 0.0
        %3883 = vmatpush1.msra.mxu0 0.0
        %3884 = vmatprep.subr.mxu0 0.0
        %3885 = vmatpush1.msra.mxu0 0.0
        %3886 = vmatprep.subr.mxu0 0.0
        %3887 = vmatpush1.msra.mxu0 0.0
        %3888 = vmatprep.subr.mxu0 0.0
        %3889 = vmatpush1.msra.mxu0 0.0
        %3890 = vmatprep.subr.mxu0 0.0
        %3891 = vmatpush1.msra.mxu0 0.0
        %3892 = vmatprep.subr.mxu0 0.0
        %3893 = vmatpush1.msra.mxu0 0.0
        %3894 = vmatprep.subr.mxu0 0.0
        %3895 = vmatpush1.msra.mxu0 0.0
        %3896 = vmatprep.subr.mxu0 0.0
        %3897 = vmatpush1.msra.mxu0 0.0
        %3898 = vmatprep.subr.mxu0 0.0
        %3899 = vmatpush1.msra.mxu0 0.0
        %3900 = vmatprep.subr.mxu0 0.0
        %3901 = vmatpush1.msra.mxu0 0.0
        %3902 = vmatprep.subr.mxu0 0.0
        %3903 = vmatpush1.msra.mxu0 0.0
        %3904 = vmatprep.subr.mxu0 0.0
        %3905 = vmatpush1.msra.mxu0 0.0
        %3906 = vmatprep.subr.mxu0 0.0
        %3907 = vmatpush1.msra.mxu0 0.0
        %3908 = vmatprep.subr.mxu0 0.0
        %3909 = vmatpush1.msra.mxu0 0.0
        %3910 = vmatprep.subr.mxu0 0.0
        %3911 = vmatpush1.msra.mxu0 0.0
        %3912 = vmatprep.subr.mxu0 0.0
        %3913 = vmatpush1.msra.mxu0 0.0
        %3914 = vmatprep.subr.mxu0 0.0
        %3915 = vmatpush1.msra.mxu0 0.0
        %3916 = vmatprep.subr.mxu0 0.0
        %3917 = vmatpush1.msra.mxu0 0.0
        %3918 = vmatprep.subr.mxu0 0.0
        %3919 = vmatpush1.msra.mxu0 0.0
        %3920 = vmatprep.subr.mxu0 0.0
        %3921 = vmatpush1.msra.mxu0 0.0
        %3922 = vmatprep.subr.mxu0 0.0
        %3923 = vmatpush1.msra.mxu0 0.0
        %3924 = vmatprep.subr.mxu0 0.0
        %3925 = vmatpush1.msra.mxu0 0.0
        %3926 = vmatprep.subr.mxu0 0.0
        %3927 = vmatpush1.msra.mxu0 0.0
        %3928 = vmatprep.subr.mxu0 0.0
        %3929 = vmatpush1.msra.mxu0 0.0
        %3930 = vmatprep.mubr.f32.mxu0 0.0
        %3931 = vmatmul.mubr.f32.gmra.mrb[0].mxu0 %v3864
        %v3932 = vpop.f32.mrb[0].mxu0
        %v3933 = vadd.f32 0.0, %v3932
        %v3934 = vpop.f32.mrb[0].mxu0
        %3935 = vdwg.mxu0
        %v3936 = vsel %vm1027, %v3714, 0.0
        %v3937 = vsel %vm1027, %v3787, 0.0
        %v3938 = vadd.f32 %v3936, %v3937
        %v3939 = vsel %vm1027, %v3860, 0.0
        %v3940 = vadd.f32 %v3938, %v3939
        %v3941 = vsel %vm1027, %v3933, 0.0
        %v3942 = vadd.f32 %v3940, %v3941
        %v3944 = vlaneseq
        %v3945 = vshrl.u32 %v3944, 7
        %v3946 = vsub.s32 0, %v3945
        %v3947 = vrot.slane %v2977, %v3946
        %v3949 = vadd.f32 %v3942, %v3947
        %v3950 = vadd.f32 %v2317, %v3949
        %v3951 = vld [vmem:[%s18] sm:$0x1]
        %v3952 = vld [vmem:[%s19] sm:$0x1]
        %v3953 = vsel %vm1027, %v3950, 0.0
        %3954 = vadd.xlane.f32.xlu0 %v3953
        %v3955 = vpop.xlane.xlu0 %3954
        %v3956 = vmul.f32 %v3955, %v2293
        %v3957 = vsub.f32 %v3950, %v3956
        %v3958 = vmul.f32 %v3957, %v3957
        %v3959 = vsel %vm1027, %v3958, 0.0
        %3960 = vadd.xlane.f32.xlu0 %v3959
        %v3961 = vpop.xlane.xlu0 %3960
        %v3962 = vmul.f32 %v3961, %v2293
        %v3963 = vadd.f32 %v3962, 1e-05
        %v3964 = vrsqrt.pop %v3963
        %v3965 = vmul.f32 %v3957, %v3964
        %v3967 = vlaneseq
        %v3968 = vshrl.u32 %v3967, 7
        %v3969 = vsub.s32 0, %v3968
        %v3970 = vrot.slane %v3951, %v3969
        %v3972 = vmul.f32 %v3965, %v3970
        %v3974 = vlaneseq
        %v3975 = vshrl.u32 %v3974, 7
        %v3976 = vsub.s32 0, %v3975
        %v3977 = vrot.slane %v3952, %v3976
        %v3979 = vadd.f32 %v3972, %v3977
        %v3980 = vld [vmem:[%s20] sm:$0xff]
        %v3981 = vld [vmem:[%s20 + $0x8] sm:$0xff]
        %v3982 = vld [vmem:[%s20 + $0x10] sm:$0xff]
        %v3983 = vld [vmem:[%s20 + $0x18] sm:$0xff]
        %v3984 = vld [vmem:[%s21] sm:$0x1]
        %v3986 = vlaneseq
        %v3987 = vshrl.u32 %v3986, 7
        %v3988 = vsub.s32 0, %v3987
        %v3989 = vrot.slane %v3984, %v3988
        %v3992 = vsel %vm1027, %v3979, 0
        %3994 = vmatprep.subr.mxu0 0.0
        %3995 = vmatpush1.msra.mxu0 %v3980
        %3996 = vmatprep.subr.mxu0 0.0
        %3997 = vmatpush1.msra.mxu0 %v3981
        %3998 = vmatprep.subr.mxu0 0.0
        %3999 = vmatpush1.msra.mxu0 %v3982
        %4000 = vmatprep.subr.mxu0 0.0
        %4001 = vmatpush1.msra.mxu0 %v3983
        %4002 = vmatprep.subr.mxu0 0.0
        %4003 = vmatpush1.msra.mxu0 0.0
        %4004 = vmatprep.subr.mxu0 0.0
        %4005 = vmatpush1.msra.mxu0 0.0
        %4006 = vmatprep.subr.mxu0 0.0
        %4007 = vmatpush1.msra.mxu0 0.0
        %4008 = vmatprep.subr.mxu0 0.0
        %4009 = vmatpush1.msra.mxu0 0.0
        %4010 = vmatprep.subr.mxu0 0.0
        %4011 = vmatpush1.msra.mxu0 0.0
        %4012 = vmatprep.subr.mxu0 0.0
        %4013 = vmatpush1.msra.mxu0 0.0
        %4014 = vmatprep.subr.mxu0 0.0
        %4015 = vmatpush1.msra.mxu0 0.0
        %4016 = vmatprep.subr.mxu0 0.0
        %4017 = vmatpush1.msra.mxu0 0.0
        %4018 = vmatprep.subr.mxu0 0.0
        %4019 = vmatpush1.msra.mxu0 0.0
        %4020 = vmatprep.subr.mxu0 0.0
        %4021 = vmatpush1.msra.mxu0 0.0
        %4022 = vmatprep.subr.mxu0 0.0
        %4023 = vmatpush1.msra.mxu0 0.0
        %4024 = vmatprep.subr.mxu0 0.0
        %4025 = vmatpush1.msra.mxu0 0.0
        %4026 = vmatprep.subr.mxu0 0.0
        %4027 = vmatpush1.msra.mxu0 0.0
        %4028 = vmatprep.subr.mxu0 0.0
        %4029 = vmatpush1.msra.mxu0 0.0
        %4030 = vmatprep.subr.mxu0 0.0
        %4031 = vmatpush1.msra.mxu0 0.0
        %4032 = vmatprep.subr.mxu0 0.0
        %4033 = vmatpush1.msra.mxu0 0.0
        %4034 = vmatprep.subr.mxu0 0.0
        %4035 = vmatpush1.msra.mxu0 0.0
        %4036 = vmatprep.subr.mxu0 0.0
        %4037 = vmatpush1.msra.mxu0 0.0
        %4038 = vmatprep.subr.mxu0 0.0
        %4039 = vmatpush1.msra.mxu0 0.0
        %4040 = vmatprep.subr.mxu0 0.0
        %4041 = vmatpush1.msra.mxu0 0.0
        %4042 = vmatprep.subr.mxu0 0.0
        %4043 = vmatpush1.msra.mxu0 0.0
        %4044 = vmatprep.subr.mxu0 0.0
        %4045 = vmatpush1.msra.mxu0 0.0
        %4046 = vmatprep.subr.mxu0 0.0
        %4047 = vmatpush1.msra.mxu0 0.0
        %4048 = vmatprep.subr.mxu0 0.0
        %4049 = vmatpush1.msra.mxu0 0.0
        %4050 = vmatprep.subr.mxu0 0.0
        %4051 = vmatpush1.msra.mxu0 0.0
        %4052 = vmatprep.subr.mxu0 0.0
        %4053 = vmatpush1.msra.mxu0 0.0
        %4054 = vmatprep.subr.mxu0 0.0
        %4055 = vmatpush1.msra.mxu0 0.0
        %4056 = vmatprep.subr.mxu0 0.0
        %4057 = vmatpush1.msra.mxu0 0.0
        %4058 = vmatprep.mubr.f32.mxu0 0.0
        %4059 = vmatmul.mubr.f32.gmra.mrb[0].mxu0 %v3992
        %v4060 = vpop.f32.mrb[0].mxu0
        %v4061 = vadd.f32 %v3989, %v4060
        %v4062 = vpop.f32.mrb[0].mxu0
        %4063 = vdwg.mxu0
        %v4064 = vmax.f32 %v4061, 0.0
        %v4065 = vld [vmem:[%s22] sm:$0xff]
        %v4066 = vld [vmem:[%s22 + $0x8] sm:$0xff]
        %v4067 = vld [vmem:[%s22 + $0x10] sm:$0xff]
        %v4068 = vld [vmem:[%s22 + $0x18] sm:$0xff]
        %v4069 = vld [vmem:[%s22 + $0x20] sm:$0xff]
        %v4070 = vld [vmem:[%s22 + $0x28] sm:$0xff]
        %v4071 = vld [vmem:[%s22 + $0x30] sm:$0xff]
        %v4072 = vld [vmem:[%s22 + $0x38] sm:$0xff]
        %vm4073 = vcmask 523264
        %v4075 = vsel %vm4073, %v4064, 0
        %4077 = vmatprep.subr.mxu0 0.0
        %4078 = vmatpush1.msra.mxu0 %v4065
        %4079 = vmatprep.subr.mxu0 0.0
        %4080 = vmatpush1.msra.mxu0 %v4066
        %4081 = vmatprep.subr.mxu0 0.0
        %4082 = vmatpush1.msra.mxu0 %v4067
        %4083 = vmatprep.subr.mxu0 0.0
        %4084 = vmatpush1.msra.mxu0 %v4068
        %4085 = vmatprep.subr.mxu0 0.0
        %4086 = vmatpush1.msra.mxu0 %v4069
        %4087 = vmatprep.subr.mxu0 0.0
        %4088 = vmatpush1.msra.mxu0 %v4070
        %4089 = vmatprep.subr.mxu0 0.0
        %4090 = vmatpush1.msra.mxu0 %v4071
        %4091 = vmatprep.subr.mxu0 0.0
        %4092 = vmatpush1.msra.mxu0 %v4072
        %4093 = vmatprep.subr.mxu0 0.0
        %4094 = vmatpush1.msra.mxu0 0.0
        %4095 = vmatprep.subr.mxu0 0.0
        %4096 = vmatpush1.msra.mxu0 0.0
        %4097 = vmatprep.subr.mxu0 0.0
        %4098 = vmatpush1.msra.mxu0 0.0
        %4099 = vmatprep.subr.mxu0 0.0
        %4100 = vmatpush1.msra.mxu0 0.0
        %4101 = vmatprep.subr.mxu0 0.0
        %4102 = vmatpush1.msra.mxu0 0.0
        %4103 = vmatprep.subr.mxu0 0.0
        %4104 = vmatpush1.msra.mxu0 0.0
        %4105 = vmatprep.subr.mxu0 0.0
        %4106 = vmatpush1.msra.mxu0 0.0
        %4107 = vmatprep.subr.mxu0 0.0
        %4108 = vmatpush1.msra.mxu0 0.0
        %4109 = vmatprep.subr.mxu0 0.0
        %4110 = vmatpush1.msra.mxu0 0.0
        %4111 = vmatprep.subr.mxu0 0.0
        %4112 = vmatpush1.msra.mxu0 0.0
        %4113 = vmatprep.subr.mxu0 0.0
        %4114 = vmatpush1.msra.mxu0 0.0
        %4115 = vmatprep.subr.mxu0 0.0
        %4116 = vmatpush1.msra.mxu0 0.0
        %4117 = vmatprep.subr.mxu0 0.0
        %4118 = vmatpush1.msra.mxu0 0.0
        %4119 = vmatprep.subr.mxu0 0.0
        %4120 = vmatpush1.msra.mxu0 0.0
        %4121 = vmatprep.subr.mxu0 0.0
        %4122 = vmatpush1.msra.mxu0 0.0
        %4123 = vmatprep.subr.mxu0 0.0
        %4124 = vmatpush1.msra.mxu0 0.0
        %4125 = vmatprep.subr.mxu0 0.0
        %4126 = vmatpush1.msra.mxu0 0.0
        %4127 = vmatprep.subr.mxu0 0.0
        %4128 = vmatpush1.msra.mxu0 0.0
        %4129 = vmatprep.subr.mxu0 0.0
        %4130 = vmatpush1.msra.mxu0 0.0
        %4131 = vmatprep.subr.mxu0 0.0
        %4132 = vmatpush1.msra.mxu0 0.0
        %4133 = vmatprep.subr.mxu0 0.0
        %4134 = vmatpush1.msra.mxu0 0.0
        %4135 = vmatprep.subr.mxu0 0.0
        %4136 = vmatpush1.msra.mxu0 0.0
        %4137 = vmatprep.subr.mxu0 0.0
        %4138 = vmatpush1.msra.mxu0 0.0
        %4139 = vmatprep.subr.mxu0 0.0
        %4140 = vmatpush1.msra.mxu0 0.0
        %4141 = vmatprep.mubr.f32.mxu0 0.0
        %4142 = vmatmul.mubr.f32.gmra.mrb[0].mxu0 %v4075
        %v4143 = vpop.f32.mrb[0].mxu0
        %v4144 = vadd.f32 0.0, %v4143
        %v4145 = vpop.f32.mrb[0].mxu0
        %4146 = vdwg.mxu0
        %v4147 = vadd.f32 %v3979, %v4144
        %v4148 = vld [vmem:[%s23] sm:$0x1]
        %v4150 = vlaneseq
        %v4151 = vshrl.u32 %v4150, 7
        %v4152 = vsub.s32 0, %v4151
        %v4153 = vrot.slane %v4148, %v4152
        %v4155 = vadd.f32 %v4147, %v4153
        %v4156 = vld [vmem:[%s24] sm:$0x1]
        %v4157 = vld [vmem:[%s25] sm:$0x1]
        %v4158 = vsel %vm1027, %v4155, 0.0
        %4159 = vadd.xlane.f32.xlu0 %v4158
        %v4160 = vpop.xlane.xlu0 %4159
        %v4161 = vmul.f32 %v4160, %v2293
        %v4162 = vsub.f32 %v4155, %v4161
        %v4163 = vmul.f32 %v4162, %v4162
        %v4164 = vsel %vm1027, %v4163, 0.0
        %4165 = vadd.xlane.f32.xlu0 %v4164
        %v4166 = vpop.xlane.xlu0 %4165
        %v4167 = vmul.f32 %v4166, %v2293
        %v4168 = vadd.f32 %v4167, 1e-05
        %v4169 = vrsqrt.pop %v4168
        %v4170 = vmul.f32 %v4162, %v4169
        %v4172 = vlaneseq
        %v4173 = vshrl.u32 %v4172, 7
        %v4174 = vsub.s32 0, %v4173
        %v4175 = vrot.slane %v4156, %v4174
        %v4177 = vmul.f32 %v4170, %v4175
        %v4179 = vlaneseq
        %v4180 = vshrl.u32 %v4179, 7
        %v4181 = vsub.s32 0, %v4180
        %v4182 = vrot.slane %v4157, %v4181
        %v4184 = vadd.f32 %v4177, %v4182
        %v4185 = vld [vmem:[%s26] sm:$0xff]
        %v4186 = vld [vmem:[%s26 + $0x8] sm:$0xff]
        %v4187 = vld [vmem:[%s26 + $0x10] sm:$0xff]
        %v4188 = vld [vmem:[%s26 + $0x18] sm:$0xff]
        %v4189 = vld [vmem:[%s27] sm:$0x1]
        %v4191 = vlaneseq
        %v4192 = vshrl.u32 %v4191, 7
        %v4193 = vsub.s32 0, %v4192
        %v4194 = vrot.slane %v4189, %v4193
        %v4197 = vsel %vm1027, %v4184, 0
        %4199 = vmatprep.subr.mxu0 0.0
        %4200 = vmatpush1.msra.mxu0 %v4185
        %4201 = vmatprep.subr.mxu0 0.0
        %4202 = vmatpush1.msra.mxu0 %v4186
        %4203 = vmatprep.subr.mxu0 0.0
        %4204 = vmatpush1.msra.mxu0 %v4187
        %4205 = vmatprep.subr.mxu0 0.0
        %4206 = vmatpush1.msra.mxu0 %v4188
        %4207 = vmatprep.subr.mxu0 0.0
        %4208 = vmatpush1.msra.mxu0 0.0
        %4209 = vmatprep.subr.mxu0 0.0
        %4210 = vmatpush1.msra.mxu0 0.0
        %4211 = vmatprep.subr.mxu0 0.0
        %4212 = vmatpush1.msra.mxu0 0.0
        %4213 = vmatprep.subr.mxu0 0.0
        %4214 = vmatpush1.msra.mxu0 0.0
        %4215 = vmatprep.subr.mxu0 0.0
        %4216 = vmatpush1.msra.mxu0 0.0
        %4217 = vmatprep.subr.mxu0 0.0
        %4218 = vmatpush1.msra.mxu0 0.0
        %4219 = vmatprep.subr.mxu0 0.0
        %4220 = vmatpush1.msra.mxu0 0.0
        %4221 = vmatprep.subr.mxu0 0.0
        %4222 = vmatpush1.msra.mxu0 0.0
        %4223 = vmatprep.subr.mxu0 0.0
        %4224 = vmatpush1.msra.mxu0 0.0
        %4225 = vmatprep.subr.mxu0 0.0
        %4226 = vmatpush1.msra.mxu0 0.0
        %4227 = vmatprep.subr.mxu0 0.0
        %4228 = vmatpush1.msra.mxu0 0.0
        %4229 = vmatprep.subr.mxu0 0.0
        %4230 = vmatpush1.msra.mxu0 0.0
        %4231 = vmatprep.subr.mxu0 0.0
        %4232 = vmatpush1.msra.mxu0 0.0
        %4233 = vmatprep.subr.mxu0 0.0
        %4234 = vmatpush1.msra.mxu0 0.0
        %4235 = vmatprep.subr.mxu0 0.0
        %4236 = vmatpush1.msra.mxu0 0.0
        %4237 = vmatprep.subr.mxu0 0.0
        %4238 = vmatpush1.msra.mxu0 0.0
        %4239 = vmatprep.subr.mxu0 0.0
        %4240 = vmatpush1.msra.mxu0 0.0
        %4241 = vmatprep.subr.mxu0 0.0
        %4242 = vmatpush1.msra.mxu0 0.0
        %4243 = vmatprep.subr.mxu0 0.0
        %4244 = vmatpush1.msra.mxu0 0.0
        %4245 = vmatprep.subr.mxu0 0.0
        %4246 = vmatpush1.msra.mxu0 0.0
        %4247 = vmatprep.subr.mxu0 0.0
        %4248 = vmatpush1.msra.mxu0 0.0
        %4249 = vmatprep.subr.mxu0 0.0
        %4250 = vmatpush1.msra.mxu0 0.0
        %4251 = vmatprep.subr.mxu0 0.0
        %4252 = vmatpush1.msra.mxu0 0.0
        %4253 = vmatprep.subr.mxu0 0.0
        %4254 = vmatpush1.msra.mxu0 0.0
        %4255 = vmatprep.subr.mxu0 0.0
        %4256 = vmatpush1.msra.mxu0 0.0
        %4257 = vmatprep.subr.mxu0 0.0
        %4258 = vmatpush1.msra.mxu0 0.0
        %4259 = vmatprep.subr.mxu0 0.0
        %4260 = vmatpush1.msra.mxu0 0.0
        %4261 = vmatprep.subr.mxu0 0.0
        %4262 = vmatpush1.msra.mxu0 0.0
        %4263 = vmatprep.mubr.f32.mxu0 0.0
        %4264 = vmatmul.mubr.f32.gmra.mrb[0].mxu0 %v4197
        %v4265 = vpop.f32.mrb[0].mxu0
        %v4266 = vadd.f32 %v4194, %v4265
        %v4267 = vpop.f32.mrb[0].mxu0
        %4268 = vdwg.mxu0
        %4269 = vst [vmem:[%s873] sm:$0xff] %v4266
        %s4270 = sand.u32 %s658, 1
        %s4271 = scalar_lea.sflag [#allocation3], %s4270
        %s4272 = sand.u32 %s658, 1
        %s4273 = smul.addr %s4272, 8
        %s4274 = scalar_lea.vmem [#allocation2], %s4273
        // Predicated region
        $region133: #{tpu_custom_call.1} parent=131 // pred_check
          %p4275 = pneg %p668
        $region134: #{tpu_custom_call.1} parent=131 // pred_check_branch
          %4277 = sbr.rel (%p4275) target = $region136
        $region135: #{tpu_custom_call.1} parent=131 // pred_region
          %s4279 = ssub.s32 128, 128
          %4280 = vsyncadd %s4271, %s4279
          %s4281 = smul.addr %s42, 128
          %s4282 = scalar_lea.hbm %s28, %s4281
          %s4284 = sshll.u32 %s4274, 4
          %s4285 = int_to_ptr.vmem [resolvable:$true] %s4284
          %4287 = dma.vmem_to_hbm [thread:$0]  %s4285, 128, %s4282, %s4271
        $region136: #{tpu_custom_call.1} parent=131 // pred_fallthru
          _
      $region132: #{tpu_custom_call.1} parent=5 // pred_fallthru
        _
      %p4288 = scmp.le.s32.totalorder 2, %s37
      // Predicated region
      $region137: #{tpu_custom_call.1} parent=5 // pred_check
        %p4289 = pneg %p4288
      $region138: #{tpu_custom_call.1} parent=5 // pred_check_branch
        %4291 = sbr.rel (%p4289) target = $region140
      $region139: #{tpu_custom_call.1} parent=5 // pred_region
        %s4292 = ssub.s32 %s37, 2
        // Predicated region
        $region141: #{tpu_custom_call.1} parent=139 // pred_check
          %p4293 = pneg %p674
        $region142: #{tpu_custom_call.1} parent=139 // pred_check_branch
          %4295 = sbr.rel (%p4293) target = $region144
        $region143: #{tpu_custom_call.1} parent=139 // pred_region
          %s4296 = sand.u32 %s659, 1
          %s4297 = scalar_lea.sflag [#allocation3], %s4296
          %s4298 = sand.u32 %s659, 1
          %s4299 = smul.addr %s4298, 8
          %s4300 = scalar_lea.vmem [#allocation2], %s4299
          %4301 = dma.done %s4297, 128
        $region144: #{tpu_custom_call.1} parent=139 // pred_fallthru
          _
      $region140: #{tpu_custom_call.1} parent=5 // pred_fallthru
        _
    $region6: #{tpu_custom_call.1} parent=1 // loop_footer
      %s41 = sadd.s32 1, %s37
    $region7: #{tpu_custom_call.1} parent=1 // loop_footer_branch
      %36 = sbr.rel target = $region3
    $region8: #{tpu_custom_call.1} parent=1 // loop_exit
      _
    %4302 = vsyncpa [#allocation3], 1
    %s4303 = scalar_lea.sflag [#allocation3], 1
    %4304 = vsyncpa %s4303, 1

</llo_original>
